<compile_context>
chip_gen: v7x
topology: tpu7x:2x2x1
jax: 0.10.0
libtpu: 0.0.40
codegen_flags: <defaults>
</compile_context>

<pallas_src>
import functools
import math

import numpy as np

import jax
import jax.numpy as jnp
from jax import lax
from jax.experimental import pallas as pl
from jax.experimental.pallas import tpu as pltpu


def _xavier_uniform(key, shape, fan_in, fan_out):
    bound = math.sqrt(6.0 / (fan_in + fan_out))
    return jax.random.uniform(key, shape, jnp.float32, -bound, bound)


def _lietal_fused_kernel(x_ref, b1_ref, bias1_ref, b2_ref, bias2_ref,
                         wfc_ref, bfc_ref, o_ref, xs_ref, y1_ref,
                         *, B, P, H2, W2):
    """Fully fused conv1+ReLU -> conv2+ReLU -> fc for B samples per grid step.

    Slab layout: rows = (sample, spatial frame position p = h*P + w), lanes =
    (channel, spectral depth).  Each 3x3 spatial tap of a conv is a static
    row-offset slice of the slab feeding one banded-depth-matrix MXU matmul
    over all B samples at once.  Rows at spatially-invalid output positions
    hold garbage but are provably never consumed downstream.
    """
    F = P * P
    M = B * F
    C0 = x_ref.shape[1]
    L1 = b1_ref.shape[2]
    L2 = b2_ref.shape[2]
    margin_x = xs_ref.shape[0] - M
    margin_y = y1_ref.shape[0] - M

    # --- stage the input block (B, C0, F) into the slab, transposing each sample
    #     (C0, F) -> (F, C0) in-kernel (XLU) -- no XLA transpose / extra HBM pass.
    for b in range(B):
        xs_ref[b * F:(b + 1) * F, :] = x_ref[b].T

    # Only the trailing tap-shift margin rows need deterministic contents; zero
    # them unconditionally every step (cheap, and megacore-safe: never gate this
    # on program_id == 0).
    xs_ref[M:M + margin_x, :] = jnp.zeros((margin_x, C0), xs_ref.dtype)
    y1_ref[M:M + margin_y, :] = jnp.zeros((margin_y, L1), y1_ref.dtype)

    # --- conv1 + bias + ReLU: 9 spatial taps, each ONE banded depth matmul over
    #     the whole B-sample slab (M rows per MXU push).
    # TODO(synk): stack the 9 taps along K (K=9*C0, one push on the 256-deep
    # v6e/v7x MXU, two <=128 chunks on v5e) once the lane-offset staging stores
    # it needs are confirmed cheap in a bundle dump.
    acc1 = jnp.zeros((M, L1), jnp.float32)
    for j in range(3):
        for k in range(3):
            s = j * P + k                       # static sublane shift of tap (j, k)
            acc1 = acc1 + jnp.dot(
                xs_ref[s:s + M, :].astype(jnp.bfloat16),
                b1_ref[j * 3 + k],
                preferred_element_type=jnp.float32)
    y1 = jnp.maximum(acc1 + bias1_ref[...], 0.0)            # (M, L1) f32

    # --- keep conv1 activations VMEM-resident for conv2's shifted reads.
    # TODO(synk): bf16 slab staging would drop the in-loop casts, but unaligned
    # (odd-row) slices of packed bf16 slabs are a lowering risk -> keep f32.
    y1_ref[0:M, :] = y1

    # --- conv2 + bias + ReLU ---
    acc2 = jnp.zeros((M, L2), jnp.float32)
    for j in range(3):
        for k in range(3):
            s = j * P + k
            acc2 = acc2 + jnp.dot(
                y1_ref[s:s + M, :].astype(jnp.bfloat16),
                b2_ref[j * 3 + k],
                preferred_element_type=jnp.float32)
    y2 = jnp.maximum(acc2 + bias2_ref[...], 0.0)             # (M, L2) f32

    # --- fc: gather the H2*W2 valid conv2 rows per sample, lane-concat them, and
    #     do ONE (B, features) @ (features, n_classes) bf16 matmul (f32 accumulate).
    rows = []
    for b in range(B):
        pos = [y2[b * F + h2 * P + w2: b * F + h2 * P + w2 + 1, :]
               for h2 in range(H2) for w2 in range(W2)]
        rows.append(pos[0] if len(pos) == 1 else jnp.concatenate(pos, axis=1))
    fc_in = rows[0] if B == 1 else jnp.concatenate(rows, axis=0)
    fc_in = fc_in.astype(jnp.bfloat16)                       # (B, H2*W2*L2)
    o_ref[...] = jnp.dot(fc_in, wfc_ref[...],
                         preferred_element_type=jnp.float32) + bfc_ref[...]


def _reference_forward(x, w1, b1, w2, b2, wfc, bfc):
    """Pure-JAX (XLA) reference matching the PyTorch module semantics."""
    dn = ("NCDHW", "OIDHW", "NCDHW")
    y = lax.conv_general_dilated(x, w1, (1, 1, 1), ((1, 1), (0, 0), (0, 0)),
                                 dimension_numbers=dn)
    y = jax.nn.relu(y + b1.reshape(1, -1, 1, 1, 1))
    y = lax.conv_general_dilated(y, w2, (1, 1, 1), ((1, 1), (0, 0), (0, 0)),
                                 dimension_numbers=dn)
    y = jax.nn.relu(y + b2.reshape(1, -1, 1, 1, 1))
    y = y.reshape(y.shape[0], -1)
    return y @ wfc + bfc


class LiEtAlPallas:
    """Pallas/TPU implementation of LiEtAl, fully fused into a single kernel launch."""

    def __init__(self, key, input_channels, n_classes, n_planes=2, patch_size=5,
                 b_tile=8):
        self.input_channels = input_channels
        self.n_classes = n_classes
        self.n_planes = n_planes
        self.patch_size = patch_size
        self.b_tile = b_tile

        C0, P = input_channels, patch_size
        assert C0 >= 5 and P >= 5, "LiEtAl needs input_channels>=5 and patch_size>=5"

        # Same shape arithmetic as the PyTorch module (stride 1, padding (1,0,0)).
        D1 = C0 + 2 - 7 + 1
        H1 = P - 3 + 1
        D2 = D1 + 2 - 3 + 1
        H2 = H1 - 3 + 1
        self.D1, self.D2, self.H2, self.W2 = D1, D2, H2, H2
        Cout1, Cout2 = n_planes, 2 * n_planes
        self.L1 = Cout1 * D1                    # conv1 lane width (channel-major, depth fast)
        self.L2 = Cout2 * D2                    # conv2 lane width
        self.features_size = Cout2 * D2 * H2 * H2

        k1, k2, k3 = jax.random.split(key, 3)
        # Same parameterization / init as the PyTorch module (xavier_uniform, zero bias).
        w1 = _xavier_uniform(k1, (Cout1, 1, 7, 3, 3),
                             fan_in=1 * 7 * 3 * 3, fan_out=Cout1 * 7 * 3 * 3)
        b1 = jnp.zeros((Cout1,), jnp.float32)
        w2 = _xavier_uniform(k2, (Cout2, n_planes, 3, 3, 3),
                             fan_in=n_planes * 27, fan_out=Cout2 * 27)
        b2 = jnp.zeros((Cout2,), jnp.float32)
        wfc = _xavier_uniform(k3, (self.features_size, n_classes),
                              fan_in=self.features_size, fan_out=n_classes)
        bfc = jnp.zeros((n_classes,), jnp.float32)
        # Keep the original-layout parameters around for the pure-JAX reference.
        self.w1, self.b1, self.w2, self.b2, self.wfc, self.bfc = w1, b1, w2, b2, wfc, bfc

        # ---- one-time repack of weights into kernel-friendly operands ----
        w1n, w2n, wfcn = np.asarray(w1), np.asarray(w2), np.asarray(wfc)

        # band1[j*3+k, c, co*D1 + d1] = w1[co, 0, c - d1 + 1, j, k]
        # (the conv's depth zero-padding is encoded by clipping the band at the edges).
        band1 = np.zeros((9, C0, self.L1), np.float32)
        for d1 in range(D1):
            for i in range(7):
                c = d1 + i - 1
                if 0 <= c < C0:
                    for co in range(Cout1):
                        band1[:, c, co * D1 + d1] = w1n[co, 0, i].reshape(-1)

        # band2[j*3+k, c2*D1 + d1, co2*D2 + d2] = w2[co2, c2, d1 - d2 + 1, j, k]
        band2 = np.zeros((9, self.L1, self.L2), np.float32)
        for d2 in range(D2):
            for i in range(3):
                d1 = d2 + i - 1
                if 0 <= d1 < D1:
                    for co2 in range(Cout2):
                        for c2 in range(Cout1):
                            band2[:, c2 * D1 + d1, co2 * D2 + d2] = w2n[co2, c2, i].reshape(-1)

        self.band1 = jnp.asarray(band1, jnp.bfloat16)   # bf16 MXU operands, f32 accumulate
        self.band2 = jnp.asarray(band2, jnp.bfloat16)
        self.bias1row = jnp.asarray(np.repeat(np.asarray(b1), D1)[None, :], jnp.float32)
        self.bias2row = jnp.asarray(np.repeat(np.asarray(b2), D2)[None, :], jnp.float32)
        # fc weight reorganized so the kernel's lane-concatenated feature layout
        # [(h2*W2+w2)*L2 + co2*D2 + d2] matches torch's (co2, d2, h2, w2) flatten order.
        self.wfc_r = jnp.asarray(
            wfcn.reshape(self.L2, H2, H2, n_classes)
                .transpose(1, 2, 0, 3)
                .reshape(H2 * H2 * self.L2, n_classes),
            jnp.bfloat16)
        self.bfc_row = jnp.asarray(np.asarray(bfc)[None, :], jnp.float32)

    def __call__(self, x):
        # x: (N, 1, input_channels, patch, patch)
        N = x.shape[0]
        C0, P = self.input_channels, self.patch_size
        F = P * P
        NC = self.n_classes
        H2, W2 = self.H2, self.W2

        B = max(1, min(self.b_tile, N))          # samples per grid step
        steps = pl.cdiv(N, B)
        if steps > 1 and steps % 2:
            steps += 1                           # even grid: both v7x TensorCores busy
        Np = steps * B
        M = B * F
        margin = 2 * P + 2                       # max tap shift; trailing rows zeroed

        # Pure reshape (no HBM transpose pass); the (C0,F)->(F,C0) flip is in-kernel.
        xr = x.reshape(N, C0, F)
        if Np != N:
            xr = jnp.pad(xr, ((0, Np - N), (0, 0), (0, 0)))

        flops = 2 * steps * (9 * M * C0 * self.L1 + 9 * M * self.L1 * self.L2
                             + B * self.features_size * NC)
        bytes_accessed = (xr.size * 4 + self.band1.size * 2 + self.band2.size * 2
                          + self.bias1row.size * 4 + self.bias2row.size * 4
                          + self.wfc_r.size * 2 + self.bfc_row.size * 4 + Np * NC * 4)

        out = pl.pallas_call(
            functools.partial(_lietal_fused_kernel, B=B, P=P, H2=H2, W2=W2),
            out_shape=jax.ShapeDtypeStruct((Np, NC), jnp.float32),
            grid=(steps,),
            in_specs=[
                pl.BlockSpec((B, C0, F), lambda n: (n, 0, 0)),
                pl.BlockSpec(self.band1.shape, lambda n: (0, 0, 0)),
                pl.BlockSpec(self.bias1row.shape, lambda n: (0, 0)),
                pl.BlockSpec(self.band2.shape, lambda n: (0, 0, 0)),
                pl.BlockSpec(self.bias2row.shape, lambda n: (0, 0)),
                pl.BlockSpec(self.wfc_r.shape, lambda n: (0, 0)),
                pl.BlockSpec(self.bfc_row.shape, lambda n: (0, 0)),
            ],
            out_specs=pl.BlockSpec((B, NC), lambda n: (n, 0)),
            scratch_shapes=[
                pltpu.VMEM((M + margin, C0), jnp.float32),       # staged input slab
                pltpu.VMEM((M + margin, self.L1), jnp.float32),  # conv1 activation slab
            ],
            compiler_params=pltpu.CompilerParams(
                dimension_semantics=("parallel",)),  # independent tiles -> megacore shard
            cost_estimate=pl.CostEstimate(
                flops=flops, transcendentals=0, bytes_accessed=bytes_accessed),
        )(xr, self.band1, self.bias1row, self.band2, self.bias2row,
          self.wfc_r, self.bfc_row)
        return out[:N]


if __name__ == "__main__":
    key = jax.random.PRNGKey(0)
    kparams, kx = jax.random.split(key)

    batch, input_channels, n_classes, n_planes, patch_size = 16, 16, 10, 2, 5
    model = LiEtAlPallas(kparams, input_channels, n_classes, n_planes, patch_size,
                         b_tile=8)

    x = jax.random.normal(
        kx, (batch, 1, input_channels, patch_size, patch_size), jnp.float32)

    fwd = jax.jit(model.__call__)
    out = jax.block_until_ready(fwd(x))
    assert out.shape == (batch, n_classes), out.shape
    assert bool(jnp.all(jnp.isfinite(out)))

    # Loose-tolerance check vs. a pure-JAX reference (kernel uses bf16 MXU operands
    # with f32 accumulation, so ~1e-2 relative differences are expected).
    ref = _reference_forward(x, model.w1, model.b1, model.w2, model.b2,
                             model.wfc, model.bfc)
    np.testing.assert_allclose(np.asarray(out), np.asarray(ref), rtol=1e-1, atol=5e-2)

    print("KERNEL_OK")
</pallas_src>

<mosaic_0001>
module attributes {stable_mosaic.version = 11 : i64} {
  func.func @_lietal_fused_kernel(%arg0: i32, %arg1: memref<8x16x25xf32, #tpu.memory_space<vmem>>, %arg2: memref<9x16x24xbf16, #tpu.memory_space<vmem>>, %arg3: memref<1x24xf32, #tpu.memory_space<vmem>>, %arg4: memref<9x24x48xbf16, #tpu.memory_space<vmem>>, %arg5: memref<1x48xf32, #tpu.memory_space<vmem>>, %arg6: memref<48x10xbf16, #tpu.memory_space<vmem>>, %arg7: memref<1x10xf32, #tpu.memory_space<vmem>>, %arg8: memref<8x10xf32, #tpu.memory_space<vmem>>, %arg9: memref<212x16xf32, #tpu.memory_space<vmem>>, %arg10: memref<212x24xf32, #tpu.memory_space<vmem>>) attributes {dimension_semantics = [#tpu.dimension_semantics<parallel>], iteration_bounds = array<i64: 2>, scalar_prefetch = 0 : i64, scratch_operands = 2 : i64, tpu.core_type = #tpu.core_type<tc>, window_params = [{transform_indices = @transform_0, window_bounds = array<i64: 8, 16, 25>}, {pipeline_mode = #tpu.pipeline_mode<synchronous>, transform_indices = @transform_1, window_bounds = array<i64: 9, 16, 24>}, {pipeline_mode = #tpu.pipeline_mode<synchronous>, transform_indices = @transform_2, window_bounds = array<i64: 1, 24>}, {pipeline_mode = #tpu.pipeline_mode<synchronous>, transform_indices = @transform_3, window_bounds = array<i64: 9, 24, 48>}, {pipeline_mode = #tpu.pipeline_mode<synchronous>, transform_indices = @transform_4, window_bounds = array<i64: 1, 48>}, {pipeline_mode = #tpu.pipeline_mode<synchronous>, transform_indices = @transform_5, window_bounds = array<i64: 48, 10>}, {pipeline_mode = #tpu.pipeline_mode<synchronous>, transform_indices = @transform_6, window_bounds = array<i64: 1, 10>}, {transform_indices = @transform_7, window_bounds = array<i64: 8, 10>}]} {
    %c0 = arith.constant 0 : index
    %c0_0 = arith.constant 0 : index
    %c0_1 = arith.constant 0 : index
    %0 = vector.load %arg1[%c0, %c0_0, %c0_1] : memref<8x16x25xf32, #tpu.memory_space<vmem>>, vector<1x16x25xf32>
    %1 = vector.shape_cast %0 : vector<1x16x25xf32> to vector<16x25xf32>
    %2 = tpu.transpose %1, [1, 0] : vector<16x25xf32> -> vector<25x16xf32>
    %c0_2 = arith.constant 0 : index
    %c0_3 = arith.constant 0 : index
    %3 = vector.load %arg9[%c0_2, %c0_3] : memref<212x16xf32, #tpu.memory_space<vmem>>, vector<25x16xf32>
    tpu.vector_store %arg9[%c0_2, %c0_3], %2 {strides = array<i32>} : memref<212x16xf32, #tpu.memory_space<vmem>>, vector<25x16xf32>,
    %c1 = arith.constant 1 : index
    %c0_4 = arith.constant 0 : index
    %c0_5 = arith.constant 0 : index
    %4 = vector.load %arg1[%c1, %c0_4, %c0_5] : memref<8x16x25xf32, #tpu.memory_space<vmem>>, vector<1x16x25xf32>
    %5 = vector.shape_cast %4 : vector<1x16x25xf32> to vector<16x25xf32>
    %6 = tpu.transpose %5, [1, 0] : vector<16x25xf32> -> vector<25x16xf32>
    %c25 = arith.constant 25 : index
    %c0_6 = arith.constant 0 : index
    %7 = vector.load %arg9[%c25, %c0_6] : memref<212x16xf32, #tpu.memory_space<vmem>>, vector<25x16xf32>
    tpu.vector_store %arg9[%c25, %c0_6], %6 {strides = array<i32>} : memref<212x16xf32, #tpu.memory_space<vmem>>, vector<25x16xf32>,
    %c2 = arith.constant 2 : index
    %c0_7 = arith.constant 0 : index
    %c0_8 = arith.constant 0 : index
    %8 = vector.load %arg1[%c2, %c0_7, %c0_8] : memref<8x16x25xf32, #tpu.memory_space<vmem>>, vector<1x16x25xf32>
    %9 = vector.shape_cast %8 : vector<1x16x25xf32> to vector<16x25xf32>
    %10 = tpu.transpose %9, [1, 0] : vector<16x25xf32> -> vector<25x16xf32>
    %c50 = arith.constant 50 : index
    %c0_9 = arith.constant 0 : index
    %11 = vector.load %arg9[%c50, %c0_9] : memref<212x16xf32, #tpu.memory_space<vmem>>, vector<25x16xf32>
    tpu.vector_store %arg9[%c50, %c0_9], %10 {strides = array<i32>} : memref<212x16xf32, #tpu.memory_space<vmem>>, vector<25x16xf32>,
    %c3 = arith.constant 3 : index
    %c0_10 = arith.constant 0 : index
    %c0_11 = arith.constant 0 : index
    %12 = vector.load %arg1[%c3, %c0_10, %c0_11] : memref<8x16x25xf32, #tpu.memory_space<vmem>>, vector<1x16x25xf32>
    %13 = vector.shape_cast %12 : vector<1x16x25xf32> to vector<16x25xf32>
    %14 = tpu.transpose %13, [1, 0] : vector<16x25xf32> -> vector<25x16xf32>
    %c75 = arith.constant 75 : index
    %c0_12 = arith.constant 0 : index
    %15 = vector.load %arg9[%c75, %c0_12] : memref<212x16xf32, #tpu.memory_space<vmem>>, vector<25x16xf32>
    tpu.vector_store %arg9[%c75, %c0_12], %14 {strides = array<i32>} : memref<212x16xf32, #tpu.memory_space<vmem>>, vector<25x16xf32>,
    %c4 = arith.constant 4 : index
    %c0_13 = arith.constant 0 : index
    %c0_14 = arith.constant 0 : index
    %16 = vector.load %arg1[%c4, %c0_13, %c0_14] : memref<8x16x25xf32, #tpu.memory_space<vmem>>, vector<1x16x25xf32>
    %17 = vector.shape_cast %16 : vector<1x16x25xf32> to vector<16x25xf32>
    %18 = tpu.transpose %17, [1, 0] : vector<16x25xf32> -> vector<25x16xf32>
    %c100 = arith.constant 100 : index
    %c0_15 = arith.constant 0 : index
    %19 = vector.load %arg9[%c100, %c0_15] : memref<212x16xf32, #tpu.memory_space<vmem>>, vector<25x16xf32>
    tpu.vector_store %arg9[%c100, %c0_15], %18 {strides = array<i32>} : memref<212x16xf32, #tpu.memory_space<vmem>>, vector<25x16xf32>,
    %c5 = arith.constant 5 : index
    %c0_16 = arith.constant 0 : index
    %c0_17 = arith.constant 0 : index
    %20 = vector.load %arg1[%c5, %c0_16, %c0_17] : memref<8x16x25xf32, #tpu.memory_space<vmem>>, vector<1x16x25xf32>
    %21 = vector.shape_cast %20 : vector<1x16x25xf32> to vector<16x25xf32>
    %22 = tpu.transpose %21, [1, 0] : vector<16x25xf32> -> vector<25x16xf32>
    %c125 = arith.constant 125 : index
    %c0_18 = arith.constant 0 : index
    %23 = vector.load %arg9[%c125, %c0_18] : memref<212x16xf32, #tpu.memory_space<vmem>>, vector<25x16xf32>
    tpu.vector_store %arg9[%c125, %c0_18], %22 {strides = array<i32>} : memref<212x16xf32, #tpu.memory_space<vmem>>, vector<25x16xf32>,
    %c6 = arith.constant 6 : index
    %c0_19 = arith.constant 0 : index
    %c0_20 = arith.constant 0 : index
    %24 = vector.load %arg1[%c6, %c0_19, %c0_20] : memref<8x16x25xf32, #tpu.memory_space<vmem>>, vector<1x16x25xf32>
    %25 = vector.shape_cast %24 : vector<1x16x25xf32> to vector<16x25xf32>
    %26 = tpu.transpose %25, [1, 0] : vector<16x25xf32> -> vector<25x16xf32>
    %c150 = arith.constant 150 : index
    %c0_21 = arith.constant 0 : index
    %27 = vector.load %arg9[%c150, %c0_21] : memref<212x16xf32, #tpu.memory_space<vmem>>, vector<25x16xf32>
    tpu.vector_store %arg9[%c150, %c0_21], %26 {strides = array<i32>} : memref<212x16xf32, #tpu.memory_space<vmem>>, vector<25x16xf32>,
    %c7 = arith.constant 7 : index
    %c0_22 = arith.constant 0 : index
    %c0_23 = arith.constant 0 : index
    %28 = vector.load %arg1[%c7, %c0_22, %c0_23] : memref<8x16x25xf32, #tpu.memory_space<vmem>>, vector<1x16x25xf32>
    %29 = vector.shape_cast %28 : vector<1x16x25xf32> to vector<16x25xf32>
    %30 = tpu.transpose %29, [1, 0] : vector<16x25xf32> -> vector<25x16xf32>
    %c175 = arith.constant 175 : index
    %c0_24 = arith.constant 0 : index
    %31 = vector.load %arg9[%c175, %c0_24] : memref<212x16xf32, #tpu.memory_space<vmem>>, vector<25x16xf32>
    tpu.vector_store %arg9[%c175, %c0_24], %30 {strides = array<i32>} : memref<212x16xf32, #tpu.memory_space<vmem>>, vector<25x16xf32>,
    %cst = arith.constant 0.000000e+00 : f32
    %32 = vector.broadcast %cst : f32 to vector<12x16xf32>
    %c200 = arith.constant 200 : index
    %c0_25 = arith.constant 0 : index
    %33 = vector.load %arg9[%c200, %c0_25] : memref<212x16xf32, #tpu.memory_space<vmem>>, vector<12x16xf32>
    tpu.vector_store %arg9[%c200, %c0_25], %32 {strides = array<i32>} : memref<212x16xf32, #tpu.memory_space<vmem>>, vector<12x16xf32>,
    %cst_26 = arith.constant 0.000000e+00 : f32
    %34 = vector.broadcast %cst_26 : f32 to vector<12x24xf32>
    %c200_27 = arith.constant 200 : index
    %c0_28 = arith.constant 0 : index
    %35 = vector.load %arg10[%c200_27, %c0_28] : memref<212x24xf32, #tpu.memory_space<vmem>>, vector<12x24xf32>
    tpu.vector_store %arg10[%c200_27, %c0_28], %34 {strides = array<i32>} : memref<212x24xf32, #tpu.memory_space<vmem>>, vector<12x24xf32>,
    %cst_29 = arith.constant 0.000000e+00 : f32
    %36 = vector.broadcast %cst_29 : f32 to vector<200x24xf32>
    %c0_30 = arith.constant 0 : index
    %c0_31 = arith.constant 0 : index
    %37 = vector.load %arg9[%c0_30, %c0_31] : memref<212x16xf32, #tpu.memory_space<vmem>>, vector<200x16xf32>
    %38 = arith.truncf %37 : vector<200x16xf32> to vector<200x16xbf16>
    %c0_32 = arith.constant 0 : index
    %c0_33 = arith.constant 0 : index
    %c0_34 = arith.constant 0 : index
    %39 = vector.load %arg2[%c0_32, %c0_33, %c0_34] : memref<9x16x24xbf16, #tpu.memory_space<vmem>>, vector<1x16x24xbf16>
    %40 = vector.shape_cast %39 : vector<1x16x24xbf16> to vector<16x24xbf16>
    %cst_35 = arith.constant dense<0.000000e+00> : vector<200x24xf32>
    %41 = tpu.matmul %38, %40, %cst_35 {dimension_numbers = #tpu.dot_dimension_numbers<[1], [0], [0], [1], [0, 0, 1, 1], [], []>} : vector<200x16xbf16>, vector<16x24xbf16>, vector<200x24xf32> -> vector<200x24xf32>
    %42 = arith.addf %36, %41 : vector<200x24xf32>
    %c1_36 = arith.constant 1 : index
    %c0_37 = arith.constant 0 : index
    %43 = vector.load %arg9[%c1_36, %c0_37] : memref<212x16xf32, #tpu.memory_space<vmem>>, vector<200x16xf32>
    %44 = arith.truncf %43 : vector<200x16xf32> to vector<200x16xbf16>
    %c1_38 = arith.constant 1 : index
    %c0_39 = arith.constant 0 : index
    %c0_40 = arith.constant 0 : index
    %45 = vector.load %arg2[%c1_38, %c0_39, %c0_40] : memref<9x16x24xbf16, #tpu.memory_space<vmem>>, vector<1x16x24xbf16>
    %46 = vector.shape_cast %45 : vector<1x16x24xbf16> to vector<16x24xbf16>
    %cst_41 = arith.constant dense<0.000000e+00> : vector<200x24xf32>
    %47 = tpu.matmul %44, %46, %cst_41 {dimension_numbers = #tpu.dot_dimension_numbers<[1], [0], [0], [1], [0, 0, 1, 1], [], []>} : vector<200x16xbf16>, vector<16x24xbf16>, vector<200x24xf32> -> vector<200x24xf32>
    %48 = arith.addf %42, %47 : vector<200x24xf32>
    %c2_42 = arith.constant 2 : index
    %c0_43 = arith.constant 0 : index
    %49 = vector.load %arg9[%c2_42, %c0_43] : memref<212x16xf32, #tpu.memory_space<vmem>>, vector<200x16xf32>
    %50 = arith.truncf %49 : vector<200x16xf32> to vector<200x16xbf16>
    %c2_44 = arith.constant 2 : index
    %c0_45 = arith.constant 0 : index
    %c0_46 = arith.constant 0 : index
    %51 = vector.load %arg2[%c2_44, %c0_45, %c0_46] : memref<9x16x24xbf16, #tpu.memory_space<vmem>>, vector<1x16x24xbf16>
    %52 = vector.shape_cast %51 : vector<1x16x24xbf16> to vector<16x24xbf16>
    %cst_47 = arith.constant dense<0.000000e+00> : vector<200x24xf32>
    %53 = tpu.matmul %50, %52, %cst_47 {dimension_numbers = #tpu.dot_dimension_numbers<[1], [0], [0], [1], [0, 0, 1, 1], [], []>} : vector<200x16xbf16>, vector<16x24xbf16>, vector<200x24xf32> -> vector<200x24xf32>
    %54 = arith.addf %48, %53 : vector<200x24xf32>
    %c5_48 = arith.constant 5 : index
    %c0_49 = arith.constant 0 : index
    %55 = vector.load %arg9[%c5_48, %c0_49] : memref<212x16xf32, #tpu.memory_space<vmem>>, vector<200x16xf32>
    %56 = arith.truncf %55 : vector<200x16xf32> to vector<200x16xbf16>
    %c3_50 = arith.constant 3 : index
    %c0_51 = arith.constant 0 : index
    %c0_52 = arith.constant 0 : index
    %57 = vector.load %arg2[%c3_50, %c0_51, %c0_52] : memref<9x16x24xbf16, #tpu.memory_space<vmem>>, vector<1x16x24xbf16>
    %58 = vector.shape_cast %57 : vector<1x16x24xbf16> to vector<16x24xbf16>
    %cst_53 = arith.constant dense<0.000000e+00> : vector<200x24xf32>
    %59 = tpu.matmul %56, %58, %cst_53 {dimension_numbers = #tpu.dot_dimension_numbers<[1], [0], [0], [1], [0, 0, 1, 1], [], []>} : vector<200x16xbf16>, vector<16x24xbf16>, vector<200x24xf32> -> vector<200x24xf32>
    %60 = arith.addf %54, %59 : vector<200x24xf32>
    %c6_54 = arith.constant 6 : index
    %c0_55 = arith.constant 0 : index
    %61 = vector.load %arg9[%c6_54, %c0_55] : memref<212x16xf32, #tpu.memory_space<vmem>>, vector<200x16xf32>
    %62 = arith.truncf %61 : vector<200x16xf32> to vector<200x16xbf16>
    %c4_56 = arith.constant 4 : index
    %c0_57 = arith.constant 0 : index
    %c0_58 = arith.constant 0 : index
    %63 = vector.load %arg2[%c4_56, %c0_57, %c0_58] : memref<9x16x24xbf16, #tpu.memory_space<vmem>>, vector<1x16x24xbf16>
    %64 = vector.shape_cast %63 : vector<1x16x24xbf16> to vector<16x24xbf16>
    %cst_59 = arith.constant dense<0.000000e+00> : vector<200x24xf32>
    %65 = tpu.matmul %62, %64, %cst_59 {dimension_numbers = #tpu.dot_dimension_numbers<[1], [0], [0], [1], [0, 0, 1, 1], [], []>} : vector<200x16xbf16>, vector<16x24xbf16>, vector<200x24xf32> -> vector<200x24xf32>
    %66 = arith.addf %60, %65 : vector<200x24xf32>
    %c7_60 = arith.constant 7 : index
    %c0_61 = arith.constant 0 : index
    %67 = vector.load %arg9[%c7_60, %c0_61] : memref<212x16xf32, #tpu.memory_space<vmem>>, vector<200x16xf32>
    %68 = arith.truncf %67 : vector<200x16xf32> to vector<200x16xbf16>
    %c5_62 = arith.constant 5 : index
    %c0_63 = arith.constant 0 : index
    %c0_64 = arith.constant 0 : index
    %69 = vector.load %arg2[%c5_62, %c0_63, %c0_64] : memref<9x16x24xbf16, #tpu.memory_space<vmem>>, vector<1x16x24xbf16>
    %70 = vector.shape_cast %69 : vector<1x16x24xbf16> to vector<16x24xbf16>
    %cst_65 = arith.constant dense<0.000000e+00> : vector<200x24xf32>
    %71 = tpu.matmul %68, %70, %cst_65 {dimension_numbers = #tpu.dot_dimension_numbers<[1], [0], [0], [1], [0, 0, 1, 1], [], []>} : vector<200x16xbf16>, vector<16x24xbf16>, vector<200x24xf32> -> vector<200x24xf32>
    %72 = arith.addf %66, %71 : vector<200x24xf32>
    %c10 = arith.constant 10 : index
    %c0_66 = arith.constant 0 : index
    %73 = vector.load %arg9[%c10, %c0_66] : memref<212x16xf32, #tpu.memory_space<vmem>>, vector<200x16xf32>
    %74 = arith.truncf %73 : vector<200x16xf32> to vector<200x16xbf16>
    %c6_67 = arith.constant 6 : index
    %c0_68 = arith.constant 0 : index
    %c0_69 = arith.constant 0 : index
    %75 = vector.load %arg2[%c6_67, %c0_68, %c0_69] : memref<9x16x24xbf16, #tpu.memory_space<vmem>>, vector<1x16x24xbf16>
    %76 = vector.shape_cast %75 : vector<1x16x24xbf16> to vector<16x24xbf16>
    %cst_70 = arith.constant dense<0.000000e+00> : vector<200x24xf32>
    %77 = tpu.matmul %74, %76, %cst_70 {dimension_numbers = #tpu.dot_dimension_numbers<[1], [0], [0], [1], [0, 0, 1, 1], [], []>} : vector<200x16xbf16>, vector<16x24xbf16>, vector<200x24xf32> -> vector<200x24xf32>
    %78 = arith.addf %72, %77 : vector<200x24xf32>
    %c11 = arith.constant 11 : index
    %c0_71 = arith.constant 0 : index
    %79 = vector.load %arg9[%c11, %c0_71] : memref<212x16xf32, #tpu.memory_space<vmem>>, vector<200x16xf32>
    %80 = arith.truncf %79 : vector<200x16xf32> to vector<200x16xbf16>
    %c7_72 = arith.constant 7 : index
    %c0_73 = arith.constant 0 : index
    %c0_74 = arith.constant 0 : index
    %81 = vector.load %arg2[%c7_72, %c0_73, %c0_74] : memref<9x16x24xbf16, #tpu.memory_space<vmem>>, vector<1x16x24xbf16>
    %82 = vector.shape_cast %81 : vector<1x16x24xbf16> to vector<16x24xbf16>
    %cst_75 = arith.constant dense<0.000000e+00> : vector<200x24xf32>
    %83 = tpu.matmul %80, %82, %cst_75 {dimension_numbers = #tpu.dot_dimension_numbers<[1], [0], [0], [1], [0, 0, 1, 1], [], []>} : vector<200x16xbf16>, vector<16x24xbf16>, vector<200x24xf32> -> vector<200x24xf32>
    %84 = arith.addf %78, %83 : vector<200x24xf32>
    %c12 = arith.constant 12 : index
    %c0_76 = arith.constant 0 : index
    %85 = vector.load %arg9[%c12, %c0_76] : memref<212x16xf32, #tpu.memory_space<vmem>>, vector<200x16xf32>
    %86 = arith.truncf %85 : vector<200x16xf32> to vector<200x16xbf16>
    %c8 = arith.constant 8 : index
    %c0_77 = arith.constant 0 : index
    %c0_78 = arith.constant 0 : index
    %87 = vector.load %arg2[%c8, %c0_77, %c0_78] : memref<9x16x24xbf16, #tpu.memory_space<vmem>>, vector<1x16x24xbf16>
    %88 = vector.shape_cast %87 : vector<1x16x24xbf16> to vector<16x24xbf16>
    %cst_79 = arith.constant dense<0.000000e+00> : vector<200x24xf32>
    %89 = tpu.matmul %86, %88, %cst_79 {dimension_numbers = #tpu.dot_dimension_numbers<[1], [0], [0], [1], [0, 0, 1, 1], [], []>} : vector<200x16xbf16>, vector<16x24xbf16>, vector<200x24xf32> -> vector<200x24xf32>
    %90 = arith.addf %84, %89 : vector<200x24xf32>
    %c0_80 = arith.constant 0 : index
    %c0_81 = arith.constant 0 : index
    %91 = vector.load %arg3[%c0_80, %c0_81] : memref<1x24xf32, #tpu.memory_space<vmem>>, vector<1x24xf32>
    %92 = vector.broadcast %91 : vector<1x24xf32> to vector<200x24xf32>
    %93 = arith.addf %90, %92 : vector<200x24xf32>
    %cst_82 = arith.constant 0.000000e+00 : f32
    %94 = vector.broadcast %cst_82 : f32 to vector<200x24xf32>
    %95 = arith.maximumf %93, %94 : vector<200x24xf32>
    %c0_83 = arith.constant 0 : index
    %c0_84 = arith.constant 0 : index
    %96 = vector.load %arg10[%c0_83, %c0_84] : memref<212x24xf32, #tpu.memory_space<vmem>>, vector<200x24xf32>
    tpu.vector_store %arg10[%c0_83, %c0_84], %95 {strides = array<i32>} : memref<212x24xf32, #tpu.memory_space<vmem>>, vector<200x24xf32>,
    %cst_85 = arith.constant 0.000000e+00 : f32
    %97 = vector.broadcast %cst_85 : f32 to vector<200x48xf32>
    %c0_86 = arith.constant 0 : index
    %c0_87 = arith.constant 0 : index
    %98 = vector.load %arg10[%c0_86, %c0_87] : memref<212x24xf32, #tpu.memory_space<vmem>>, vector<200x24xf32>
    %99 = arith.truncf %98 : vector<200x24xf32> to vector<200x24xbf16>
    %c0_88 = arith.constant 0 : index
    %c0_89 = arith.constant 0 : index
    %c0_90 = arith.constant 0 : index
    %100 = vector.load %arg4[%c0_88, %c0_89, %c0_90] : memref<9x24x48xbf16, #tpu.memory_space<vmem>>, vector<1x24x48xbf16>
    %101 = vector.shape_cast %100 : vector<1x24x48xbf16> to vector<24x48xbf16>
    %cst_91 = arith.constant dense<0.000000e+00> : vector<200x48xf32>
    %102 = tpu.matmul %99, %101, %cst_91 {dimension_numbers = #tpu.dot_dimension_numbers<[1], [0], [0], [1], [0, 0, 1, 1], [], []>} : vector<200x24xbf16>, vector<24x48xbf16>, vector<200x48xf32> -> vector<200x48xf32>
    %103 = arith.addf %97, %102 : vector<200x48xf32>
    %c1_92 = arith.constant 1 : index
    %c0_93 = arith.constant 0 : index
    %104 = vector.load %arg10[%c1_92, %c0_93] : memref<212x24xf32, #tpu.memory_space<vmem>>, vector<200x24xf32>
    %105 = arith.truncf %104 : vector<200x24xf32> to vector<200x24xbf16>
    %c1_94 = arith.constant 1 : index
    %c0_95 = arith.constant 0 : index
    %c0_96 = arith.constant 0 : index
    %106 = vector.load %arg4[%c1_94, %c0_95, %c0_96] : memref<9x24x48xbf16, #tpu.memory_space<vmem>>, vector<1x24x48xbf16>
    %107 = vector.shape_cast %106 : vector<1x24x48xbf16> to vector<24x48xbf16>
    %cst_97 = arith.constant dense<0.000000e+00> : vector<200x48xf32>
    %108 = tpu.matmul %105, %107, %cst_97 {dimension_numbers = #tpu.dot_dimension_numbers<[1], [0], [0], [1], [0, 0, 1, 1], [], []>} : vector<200x24xbf16>, vector<24x48xbf16>, vector<200x48xf32> -> vector<200x48xf32>
    %109 = arith.addf %103, %108 : vector<200x48xf32>
    %c2_98 = arith.constant 2 : index
    %c0_99 = arith.constant 0 : index
    %110 = vector.load %arg10[%c2_98, %c0_99] : memref<212x24xf32, #tpu.memory_space<vmem>>, vector<200x24xf32>
    %111 = arith.truncf %110 : vector<200x24xf32> to vector<200x24xbf16>
    %c2_100 = arith.constant 2 : index
    %c0_101 = arith.constant 0 : index
    %c0_102 = arith.constant 0 : index
    %112 = vector.load %arg4[%c2_100, %c0_101, %c0_102] : memref<9x24x48xbf16, #tpu.memory_space<vmem>>, vector<1x24x48xbf16>
    %113 = vector.shape_cast %112 : vector<1x24x48xbf16> to vector<24x48xbf16>
    %cst_103 = arith.constant dense<0.000000e+00> : vector<200x48xf32>
    %114 = tpu.matmul %111, %113, %cst_103 {dimension_numbers = #tpu.dot_dimension_numbers<[1], [0], [0], [1], [0, 0, 1, 1], [], []>} : vector<200x24xbf16>, vector<24x48xbf16>, vector<200x48xf32> -> vector<200x48xf32>
    %115 = arith.addf %109, %114 : vector<200x48xf32>
    %c5_104 = arith.constant 5 : index
    %c0_105 = arith.constant 0 : index
    %116 = vector.load %arg10[%c5_104, %c0_105] : memref<212x24xf32, #tpu.memory_space<vmem>>, vector<200x24xf32>
    %117 = arith.truncf %116 : vector<200x24xf32> to vector<200x24xbf16>
    %c3_106 = arith.constant 3 : index
    %c0_107 = arith.constant 0 : index
    %c0_108 = arith.constant 0 : index
    %118 = vector.load %arg4[%c3_106, %c0_107, %c0_108] : memref<9x24x48xbf16, #tpu.memory_space<vmem>>, vector<1x24x48xbf16>
    %119 = vector.shape_cast %118 : vector<1x24x48xbf16> to vector<24x48xbf16>
    %cst_109 = arith.constant dense<0.000000e+00> : vector<200x48xf32>
    %120 = tpu.matmul %117, %119, %cst_109 {dimension_numbers = #tpu.dot_dimension_numbers<[1], [0], [0], [1], [0, 0, 1, 1], [], []>} : vector<200x24xbf16>, vector<24x48xbf16>, vector<200x48xf32> -> vector<200x48xf32>
    %121 = arith.addf %115, %120 : vector<200x48xf32>
    %c6_110 = arith.constant 6 : index
    %c0_111 = arith.constant 0 : index
    %122 = vector.load %arg10[%c6_110, %c0_111] : memref<212x24xf32, #tpu.memory_space<vmem>>, vector<200x24xf32>
    %123 = arith.truncf %122 : vector<200x24xf32> to vector<200x24xbf16>
    %c4_112 = arith.constant 4 : index
    %c0_113 = arith.constant 0 : index
    %c0_114 = arith.constant 0 : index
    %124 = vector.load %arg4[%c4_112, %c0_113, %c0_114] : memref<9x24x48xbf16, #tpu.memory_space<vmem>>, vector<1x24x48xbf16>
    %125 = vector.shape_cast %124 : vector<1x24x48xbf16> to vector<24x48xbf16>
    %cst_115 = arith.constant dense<0.000000e+00> : vector<200x48xf32>
    %126 = tpu.matmul %123, %125, %cst_115 {dimension_numbers = #tpu.dot_dimension_numbers<[1], [0], [0], [1], [0, 0, 1, 1], [], []>} : vector<200x24xbf16>, vector<24x48xbf16>, vector<200x48xf32> -> vector<200x48xf32>
    %127 = arith.addf %121, %126 : vector<200x48xf32>
    %c7_116 = arith.constant 7 : index
    %c0_117 = arith.constant 0 : index
    %128 = vector.load %arg10[%c7_116, %c0_117] : memref<212x24xf32, #tpu.memory_space<vmem>>, vector<200x24xf32>
    %129 = arith.truncf %128 : vector<200x24xf32> to vector<200x24xbf16>
    %c5_118 = arith.constant 5 : index
    %c0_119 = arith.constant 0 : index
    %c0_120 = arith.constant 0 : index
    %130 = vector.load %arg4[%c5_118, %c0_119, %c0_120] : memref<9x24x48xbf16, #tpu.memory_space<vmem>>, vector<1x24x48xbf16>
    %131 = vector.shape_cast %130 : vector<1x24x48xbf16> to vector<24x48xbf16>
    %cst_121 = arith.constant dense<0.000000e+00> : vector<200x48xf32>
    %132 = tpu.matmul %129, %131, %cst_121 {dimension_numbers = #tpu.dot_dimension_numbers<[1], [0], [0], [1], [0, 0, 1, 1], [], []>} : vector<200x24xbf16>, vector<24x48xbf16>, vector<200x48xf32> -> vector<200x48xf32>
    %133 = arith.addf %127, %132 : vector<200x48xf32>
    %c10_122 = arith.constant 10 : index
    %c0_123 = arith.constant 0 : index
    %134 = vector.load %arg10[%c10_122, %c0_123] : memref<212x24xf32, #tpu.memory_space<vmem>>, vector<200x24xf32>
    %135 = arith.truncf %134 : vector<200x24xf32> to vector<200x24xbf16>
    %c6_124 = arith.constant 6 : index
    %c0_125 = arith.constant 0 : index
    %c0_126 = arith.constant 0 : index
    %136 = vector.load %arg4[%c6_124, %c0_125, %c0_126] : memref<9x24x48xbf16, #tpu.memory_space<vmem>>, vector<1x24x48xbf16>
    %137 = vector.shape_cast %136 : vector<1x24x48xbf16> to vector<24x48xbf16>
    %cst_127 = arith.constant dense<0.000000e+00> : vector<200x48xf32>
    %138 = tpu.matmul %135, %137, %cst_127 {dimension_numbers = #tpu.dot_dimension_numbers<[1], [0], [0], [1], [0, 0, 1, 1], [], []>} : vector<200x24xbf16>, vector<24x48xbf16>, vector<200x48xf32> -> vector<200x48xf32>
    %139 = arith.addf %133, %138 : vector<200x48xf32>
    %c11_128 = arith.constant 11 : index
    %c0_129 = arith.constant 0 : index
    %140 = vector.load %arg10[%c11_128, %c0_129] : memref<212x24xf32, #tpu.memory_space<vmem>>, vector<200x24xf32>
    %141 = arith.truncf %140 : vector<200x24xf32> to vector<200x24xbf16>
    %c7_130 = arith.constant 7 : index
    %c0_131 = arith.constant 0 : index
    %c0_132 = arith.constant 0 : index
    %142 = vector.load %arg4[%c7_130, %c0_131, %c0_132] : memref<9x24x48xbf16, #tpu.memory_space<vmem>>, vector<1x24x48xbf16>
    %143 = vector.shape_cast %142 : vector<1x24x48xbf16> to vector<24x48xbf16>
    %cst_133 = arith.constant dense<0.000000e+00> : vector<200x48xf32>
    %144 = tpu.matmul %141, %143, %cst_133 {dimension_numbers = #tpu.dot_dimension_numbers<[1], [0], [0], [1], [0, 0, 1, 1], [], []>} : vector<200x24xbf16>, vector<24x48xbf16>, vector<200x48xf32> -> vector<200x48xf32>
    %145 = arith.addf %139, %144 : vector<200x48xf32>
    %c12_134 = arith.constant 12 : index
    %c0_135 = arith.constant 0 : index
    %146 = vector.load %arg10[%c12_134, %c0_135] : memref<212x24xf32, #tpu.memory_space<vmem>>, vector<200x24xf32>
    %147 = arith.truncf %146 : vector<200x24xf32> to vector<200x24xbf16>
    %c8_136 = arith.constant 8 : index
    %c0_137 = arith.constant 0 : index
    %c0_138 = arith.constant 0 : index
    %148 = vector.load %arg4[%c8_136, %c0_137, %c0_138] : memref<9x24x48xbf16, #tpu.memory_space<vmem>>, vector<1x24x48xbf16>
    %149 = vector.shape_cast %148 : vector<1x24x48xbf16> to vector<24x48xbf16>
    %cst_139 = arith.constant dense<0.000000e+00> : vector<200x48xf32>
    %150 = tpu.matmul %147, %149, %cst_139 {dimension_numbers = #tpu.dot_dimension_numbers<[1], [0], [0], [1], [0, 0, 1, 1], [], []>} : vector<200x24xbf16>, vector<24x48xbf16>, vector<200x48xf32> -> vector<200x48xf32>
    %151 = arith.addf %145, %150 : vector<200x48xf32>
    %c0_140 = arith.constant 0 : index
    %c0_141 = arith.constant 0 : index
    %152 = vector.load %arg5[%c0_140, %c0_141] : memref<1x48xf32, #tpu.memory_space<vmem>>, vector<1x48xf32>
    %153 = vector.broadcast %152 : vector<1x48xf32> to vector<200x48xf32>
    %154 = arith.addf %151, %153 : vector<200x48xf32>
    %cst_142 = arith.constant 0.000000e+00 : f32
    %155 = vector.broadcast %cst_142 : f32 to vector<200x48xf32>
    %156 = arith.maximumf %154, %155 : vector<200x48xf32>
    %157 = vector.extract_strided_slice %156 {offsets = [0, 0], sizes = [1, 48], strides = [1, 1]} : vector<200x48xf32> to vector<1x48xf32>
    %158 = vector.extract_strided_slice %156 {offsets = [25, 0], sizes = [1, 48], strides = [1, 1]} : vector<200x48xf32> to vector<1x48xf32>
    %159 = vector.extract_strided_slice %156 {offsets = [50, 0], sizes = [1, 48], strides = [1, 1]} : vector<200x48xf32> to vector<1x48xf32>
    %160 = vector.extract_strided_slice %156 {offsets = [75, 0], sizes = [1, 48], strides = [1, 1]} : vector<200x48xf32> to vector<1x48xf32>
    %161 = vector.extract_strided_slice %156 {offsets = [100, 0], sizes = [1, 48], strides = [1, 1]} : vector<200x48xf32> to vector<1x48xf32>
    %162 = vector.extract_strided_slice %156 {offsets = [125, 0], sizes = [1, 48], strides = [1, 1]} : vector<200x48xf32> to vector<1x48xf32>
    %163 = vector.extract_strided_slice %156 {offsets = [150, 0], sizes = [1, 48], strides = [1, 1]} : vector<200x48xf32> to vector<1x48xf32>
    %164 = vector.extract_strided_slice %156 {offsets = [175, 0], sizes = [1, 48], strides = [1, 1]} : vector<200x48xf32> to vector<1x48xf32>
    %165 = tpu.concatenate %157, %158, %159, %160, %161, %162, %163, %164 in 0 : vector<1x48xf32>, vector<1x48xf32>, vector<1x48xf32>, vector<1x48xf32>, vector<1x48xf32>, vector<1x48xf32>, vector<1x48xf32>, vector<1x48xf32> -> vector<8x48xf32>
    %166 = arith.truncf %165 : vector<8x48xf32> to vector<8x48xbf16>
    %c0_143 = arith.constant 0 : index
    %c0_144 = arith.constant 0 : index
    %167 = vector.load %arg6[%c0_143, %c0_144] : memref<48x10xbf16, #tpu.memory_space<vmem>>, vector<48x10xbf16>
    %cst_145 = arith.constant dense<0.000000e+00> : vector<8x10xf32>
    %168 = tpu.matmul %166, %167, %cst_145 {dimension_numbers = #tpu.dot_dimension_numbers<[1], [0], [0], [1], [0, 0, 1, 1], [], []>} : vector<8x48xbf16>, vector<48x10xbf16>, vector<8x10xf32> -> vector<8x10xf32>
    %c0_146 = arith.constant 0 : index
    %c0_147 = arith.constant 0 : index
    %169 = vector.load %arg7[%c0_146, %c0_147] : memref<1x10xf32, #tpu.memory_space<vmem>>, vector<1x10xf32>
    %170 = vector.broadcast %169 : vector<1x10xf32> to vector<8x10xf32>
    %171 = arith.addf %168, %170 : vector<8x10xf32>
    %c0_148 = arith.constant 0 : index
    %c0_149 = arith.constant 0 : index
    %172 = vector.load %arg8[%c0_148, %c0_149] : memref<8x10xf32, #tpu.memory_space<vmem>>, vector<8x10xf32>
    tpu.vector_store %arg8[%c0_148, %c0_149], %171 {strides = array<i32>} : memref<8x10xf32, #tpu.memory_space<vmem>>, vector<8x10xf32>,
    return
  }
  func.func @transform_0(%arg0: i32) -> (i32, i32, i32) {
    %c0_i32 = arith.constant 0 : i32
    %c0_i32_0 = arith.constant 0 : i32
    %c0_i32_1 = arith.constant 0 : i32
    return %arg0, %c0_i32, %c0_i32_0 : i32, i32, i32
  }
  func.func @transform_1(%arg0: i32) -> (i32, i32, i32) {
    %c0_i32 = arith.constant 0 : i32
    %c0_i32_0 = arith.constant 0 : i32
    %c0_i32_1 = arith.constant 0 : i32
    %c0_i32_2 = arith.constant 0 : i32
    return %c0_i32, %c0_i32_0, %c0_i32_1 : i32, i32, i32
  }
  func.func @transform_2(%arg0: i32) -> (i32, i32) {
    %c0_i32 = arith.constant 0 : i32
    %c0_i32_0 = arith.constant 0 : i32
    %c0_i32_1 = arith.constant 0 : i32
    return %c0_i32, %c0_i32_0 : i32, i32
  }
  func.func @transform_3(%arg0: i32) -> (i32, i32, i32) {
    %c0_i32 = arith.constant 0 : i32
    %c0_i32_0 = arith.constant 0 : i32
    %c0_i32_1 = arith.constant 0 : i32
    %c0_i32_2 = arith.constant 0 : i32
    return %c0_i32, %c0_i32_0, %c0_i32_1 : i32, i32, i32
  }
  func.func @transform_4(%arg0: i32) -> (i32, i32) {
    %c0_i32 = arith.constant 0 : i32
    %c0_i32_0 = arith.constant 0 : i32
    %c0_i32_1 = arith.constant 0 : i32
    return %c0_i32, %c0_i32_0 : i32, i32
  }
  func.func @transform_5(%arg0: i32) -> (i32, i32) {
    %c0_i32 = arith.constant 0 : i32
    %c0_i32_0 = arith.constant 0 : i32
    %c0_i32_1 = arith.constant 0 : i32
    return %c0_i32, %c0_i32_0 : i32, i32
  }
  func.func @transform_6(%arg0: i32) -> (i32, i32) {
    %c0_i32 = arith.constant 0 : i32
    %c0_i32_0 = arith.constant 0 : i32
    %c0_i32_1 = arith.constant 0 : i32
    return %c0_i32, %c0_i32_0 : i32, i32
  }
  func.func @transform_7(%arg0: i32) -> (i32, i32) {
    %c0_i32 = arith.constant 0 : i32
    %c0_i32_0 = arith.constant 0 : i32
    return %arg0, %c0_i32 : i32, i32
  }
}

</mosaic_0001>

<llo_original>
// kernel: a_call__.1
$region0: #{a_call__.1}
  #allocation0 [shape = 'u32[]', space=smem, size = 0x4, offset = 0x4, fixed_abs, tag = 'smem constant byte address 0x4 - core index']
  #allocation1 [shape = 'u32[144,128]{1,0:T(1,128)}', space=vmem, size = 0x12000, scoped, tag = 'internal scratch']
  #allocation2 [shape = 'f32[212,16]{1,0:T(8,128)}', space=vmem, size = 0x1b000, scoped, tag = 'scratch operand']
  #allocation3 [shape = 'f32[212,24]{1,0:T(8,128)}', space=vmem, size = 0x1b000, scoped, tag = 'scratch operand']
  %s0 = inlined_call_operand.vmem [shape: f32[16,16,25], index: 0, kind: input, shape index: {}]
  %s1 = inlined_call_operand.vmem [shape: bf16[9,16,24], index: 1, kind: input, shape index: {}]
  %s2 = inlined_call_operand.vmem [shape: f32[1,24], index: 2, kind: input, shape index: {}]
  %s3 = inlined_call_operand.vmem [shape: bf16[9,24,48], index: 3, kind: input, shape index: {}]
  %s4 = inlined_call_operand.vmem [shape: f32[1,48], index: 4, kind: input, shape index: {}]
  %s5 = inlined_call_operand.vmem [shape: bf16[48,10], index: 5, kind: input, shape index: {}]
  %s6 = inlined_call_operand.vmem [shape: f32[1,10], index: 6, kind: input, shape index: {}]
  %s7 = inlined_call_operand.hbm [shape: f32[16,10], index: 7, kind: output, shape index: {}]
  %s8 = sld [smem:[#allocation0]]
  $region61: #{a_call__.1} parent=0
    _
  %s10 = ssub.s32 1, %s8
  %s11 = scalar_select 0, %s10, %s8
  $region1: #{a_call__.1} parent=0
    #allocation4 [shape = 'u8[8192]{0}', space=vmem, size = 0x2000, scoped, tag = 'output window, operand 0']
    #allocation5 [shape = 's32[2]{0}', space=sflag, size = 0x8, scoped, tag = 'scoped memory for a_call__.1']
    %12 = vsyncpa [#allocation5], 0
    %s13 = scalar_lea.sflag [#allocation5], 1
    %14 = vsyncpa %s13, 0
    loop: start=0, step=1, limit=4
    $region2: #{a_call__.1} parent=1 // loop_pre_header
      _
    $region3: #{a_call__.1} parent=1 // loop_header
      %s16 = sphi 0, %s20
      %p17 = scmp.ge.s32.totalorder %s16, 4
      %s26 = sphi 0, %s28
      %s29 = sphi 0, %s26
      %s30 = sphi 0, %s29
      %s46 = sphi 0, %s30
      %s50 = sphi 0, %s50
      %s52 = sphi 0, %s50
      %s53 = sphi 0, %s52
      %s67 = sphi 0, %s53
      %s71 = sphi 0, %s71
      %s73 = sphi 0, %s71
      %s74 = sphi 0, %s73
      %s88 = sphi 0, %s74
      %s92 = sphi 0, %s92
      %s94 = sphi 0, %s92
      %s95 = sphi 0, %s94
      %s109 = sphi 0, %s95
      %s113 = sphi 0, %s113
      %s115 = sphi 0, %s113
      %s116 = sphi 0, %s115
      %s130 = sphi 0, %s116
      %s134 = sphi 0, %s134
      %s136 = sphi 0, %s134
      %s137 = sphi 0, %s136
      %s151 = sphi 0, %s137
      %s155 = sphi 0, %s155
      %s157 = sphi 0, %s155
      %s158 = sphi 0, %s157
      %s172 = sphi 0, %s158
      %s178 = sphi 0, %s180
      %s181 = sphi 0, %s178
      %s182 = sphi 0, %s181
      %s198 = sphi 0, %s182
    $region4: #{a_call__.1} parent=1 // loop_header_branch
      %19 = sbr.rel (%p17) target = $region8
    $region5: #{a_call__.1} parent=1 // loop_body
      %s21 = ssub.s32 %s16, 1
      %s22 = ssub.s32 %s16, 2
      %s23 = sadd.s32 %s16, 1
      %s24 = ssub.s32 %s16, %s23
      %p25 = scmp.eq.s32.totalorder %s24, 0
      %s27 = sadd.s32 %s26, 1
      %s28 = scalar_select %p25, %s26, %s27
      %p31 = pneg %p25
      %p32 = scmp.eq.s32.totalorder %s16, 1
      %p33 = por %p31, %p32
      %p34 = scmp.ne.s32.totalorder %s26, %s29
      %p35 = scmp.eq.s32.totalorder %s16, 0
      %p36 = por %p34, %p35
      %p37 = scmp.ne.s32.totalorder %s26, %s29
      %p38 = scmp.eq.s32.totalorder %s21, 1
      %p39 = por %p37, %p38
      %p40 = scmp.ne.s32.totalorder %s29, %s30
      %p41 = scmp.eq.s32.totalorder %s21, 0
      %p42 = por %p40, %p41
      %p43 = scmp.ne.s32.totalorder %s29, %s30
      %p44 = scmp.eq.s32.totalorder %s22, 1
      %p45 = por %p43, %p44
      %p47 = scmp.ne.s32.totalorder %s30, %s46
      %p48 = scmp.eq.s32.totalorder %s22, 0
      %p49 = por %p47, %p48
      %s51 = sadd.s32 %s50, 1
      %p54 = scmp.eq.s32.totalorder %s16, 1
      %p55 = scmp.ne.s32.totalorder %s50, %s52
      %p56 = scmp.eq.s32.totalorder %s16, 0
      %p57 = por %p55, %p56
      %p58 = scmp.ne.s32.totalorder %s50, %s52
      %p59 = scmp.eq.s32.totalorder %s21, 1
      %p60 = por %p58, %p59
      %p61 = scmp.ne.s32.totalorder %s52, %s53
      %p62 = scmp.eq.s32.totalorder %s21, 0
      %p63 = por %p61, %p62
      %p64 = scmp.ne.s32.totalorder %s52, %s53
      %p65 = scmp.eq.s32.totalorder %s22, 1
      %p66 = por %p64, %p65
      %p68 = scmp.ne.s32.totalorder %s53, %s67
      %p69 = scmp.eq.s32.totalorder %s22, 0
      %p70 = por %p68, %p69
      %s72 = sadd.s32 %s71, 1
      %p75 = scmp.eq.s32.totalorder %s16, 1
      %p76 = scmp.ne.s32.totalorder %s71, %s73
      %p77 = scmp.eq.s32.totalorder %s16, 0
      %p78 = por %p76, %p77
      %p79 = scmp.ne.s32.totalorder %s71, %s73
      %p80 = scmp.eq.s32.totalorder %s21, 1
      %p81 = por %p79, %p80
      %p82 = scmp.ne.s32.totalorder %s73, %s74
      %p83 = scmp.eq.s32.totalorder %s21, 0
      %p84 = por %p82, %p83
      %p85 = scmp.ne.s32.totalorder %s73, %s74
      %p86 = scmp.eq.s32.totalorder %s22, 1
      %p87 = por %p85, %p86
      %p89 = scmp.ne.s32.totalorder %s74, %s88
      %p90 = scmp.eq.s32.totalorder %s22, 0
      %p91 = por %p89, %p90
      %s93 = sadd.s32 %s92, 1
      %p96 = scmp.eq.s32.totalorder %s16, 1
      %p97 = scmp.ne.s32.totalorder %s92, %s94
      %p98 = scmp.eq.s32.totalorder %s16, 0
      %p99 = por %p97, %p98
      %p100 = scmp.ne.s32.totalorder %s92, %s94
      %p101 = scmp.eq.s32.totalorder %s21, 1
      %p102 = por %p100, %p101
      %p103 = scmp.ne.s32.totalorder %s94, %s95
      %p104 = scmp.eq.s32.totalorder %s21, 0
      %p105 = por %p103, %p104
      %p106 = scmp.ne.s32.totalorder %s94, %s95
      %p107 = scmp.eq.s32.totalorder %s22, 1
      %p108 = por %p106, %p107
      %p110 = scmp.ne.s32.totalorder %s95, %s109
      %p111 = scmp.eq.s32.totalorder %s22, 0
      %p112 = por %p110, %p111
      %s114 = sadd.s32 %s113, 1
      %p117 = scmp.eq.s32.totalorder %s16, 1
      %p118 = scmp.ne.s32.totalorder %s113, %s115
      %p119 = scmp.eq.s32.totalorder %s16, 0
      %p120 = por %p118, %p119
      %p121 = scmp.ne.s32.totalorder %s113, %s115
      %p122 = scmp.eq.s32.totalorder %s21, 1
      %p123 = por %p121, %p122
      %p124 = scmp.ne.s32.totalorder %s115, %s116
      %p125 = scmp.eq.s32.totalorder %s21, 0
      %p126 = por %p124, %p125
      %p127 = scmp.ne.s32.totalorder %s115, %s116
      %p128 = scmp.eq.s32.totalorder %s22, 1
      %p129 = por %p127, %p128
      %p131 = scmp.ne.s32.totalorder %s116, %s130
      %p132 = scmp.eq.s32.totalorder %s22, 0
      %p133 = por %p131, %p132
      %s135 = sadd.s32 %s134, 1
      %p138 = scmp.eq.s32.totalorder %s16, 1
      %p139 = scmp.ne.s32.totalorder %s134, %s136
      %p140 = scmp.eq.s32.totalorder %s16, 0
      %p141 = por %p139, %p140
      %p142 = scmp.ne.s32.totalorder %s134, %s136
      %p143 = scmp.eq.s32.totalorder %s21, 1
      %p144 = por %p142, %p143
      %p145 = scmp.ne.s32.totalorder %s136, %s137
      %p146 = scmp.eq.s32.totalorder %s21, 0
      %p147 = por %p145, %p146
      %p148 = scmp.ne.s32.totalorder %s136, %s137
      %p149 = scmp.eq.s32.totalorder %s22, 1
      %p150 = por %p148, %p149
      %p152 = scmp.ne.s32.totalorder %s137, %s151
      %p153 = scmp.eq.s32.totalorder %s22, 0
      %p154 = por %p152, %p153
      %s156 = sadd.s32 %s155, 1
      %p159 = scmp.eq.s32.totalorder %s16, 1
      %p160 = scmp.ne.s32.totalorder %s155, %s157
      %p161 = scmp.eq.s32.totalorder %s16, 0
      %p162 = por %p160, %p161
      %p163 = scmp.ne.s32.totalorder %s155, %s157
      %p164 = scmp.eq.s32.totalorder %s21, 1
      %p165 = por %p163, %p164
      %p166 = scmp.ne.s32.totalorder %s157, %s158
      %p167 = scmp.eq.s32.totalorder %s21, 0
      %p168 = por %p166, %p167
      %p169 = scmp.ne.s32.totalorder %s157, %s158
      %p170 = scmp.eq.s32.totalorder %s22, 1
      %p171 = por %p169, %p170
      %p173 = scmp.ne.s32.totalorder %s158, %s172
      %p174 = scmp.eq.s32.totalorder %s22, 0
      %p175 = por %p173, %p174
      %s176 = ssub.s32 %s16, %s23
      %p177 = scmp.eq.s32.totalorder %s176, 0
      %s179 = sadd.s32 %s178, 1
      %s180 = scalar_select %p177, %s178, %s179
      %p183 = pneg %p177
      %p184 = scmp.eq.s32.totalorder %s16, 1
      %p185 = por %p183, %p184
      %p186 = scmp.ne.s32.totalorder %s178, %s181
      %p187 = scmp.eq.s32.totalorder %s16, 0
      %p188 = por %p186, %p187
      %p189 = scmp.ne.s32.totalorder %s178, %s181
      %p190 = scmp.eq.s32.totalorder %s21, 1
      %p191 = por %p189, %p190
      %p192 = scmp.ne.s32.totalorder %s181, %s182
      %p193 = scmp.eq.s32.totalorder %s21, 0
      %p194 = por %p192, %p193
      %p195 = scmp.ne.s32.totalorder %s181, %s182
      %p196 = scmp.eq.s32.totalorder %s22, 1
      %p197 = por %p195, %p196
      %p199 = scmp.ne.s32.totalorder %s182, %s198
      %p200 = scmp.eq.s32.totalorder %s22, 0
      %p201 = por %p199, %p200
      %p202 = scmp.le.s32.totalorder 1, %s16
      %p203 = scmp.lt.s32.totalorder %s16, 3
      %p204 = pnand %p202, %p203
      %p205 = pneg %p204
      // Predicated region
      $region9: #{a_call__.1} parent=5 // pred_check
        _
      $region10: #{a_call__.1} parent=5 // pred_check_branch
        %207 = sbr.rel (%p204) target = $region12
      $region11: #{a_call__.1} parent=5 // pred_region
        %s208 = ssub.s32 %s16, 1
        // Predicated region
        $region13: #{a_call__.1} parent=11 // pred_check
          %p209 = pneg %p63
        $region14: #{a_call__.1} parent=11 // pred_check_branch
          %211 = sbr.rel (%p209) target = $region16
        $region15: #{a_call__.1} parent=11 // pred_region
          _
        $region16: #{a_call__.1} parent=11 // pred_fallthru
          _
        // Predicated region
        $region17: #{a_call__.1} parent=11 // pred_check
          %p212 = pneg %p84
        $region18: #{a_call__.1} parent=11 // pred_check_branch
          %214 = sbr.rel (%p212) target = $region20
        $region19: #{a_call__.1} parent=11 // pred_region
          _
        $region20: #{a_call__.1} parent=11 // pred_fallthru
          _
        // Predicated region
        $region21: #{a_call__.1} parent=11 // pred_check
          %p215 = pneg %p105
        $region22: #{a_call__.1} parent=11 // pred_check_branch
          %217 = sbr.rel (%p215) target = $region24
        $region23: #{a_call__.1} parent=11 // pred_region
          _
        $region24: #{a_call__.1} parent=11 // pred_fallthru
          _
        // Predicated region
        $region25: #{a_call__.1} parent=11 // pred_check
          %p218 = pneg %p126
        $region26: #{a_call__.1} parent=11 // pred_check_branch
          %220 = sbr.rel (%p218) target = $region28
        $region27: #{a_call__.1} parent=11 // pred_region
          _
        $region28: #{a_call__.1} parent=11 // pred_fallthru
          _
        // Predicated region
        $region29: #{a_call__.1} parent=11 // pred_check
          %p221 = pneg %p147
        $region30: #{a_call__.1} parent=11 // pred_check_branch
          %223 = sbr.rel (%p221) target = $region32
        $region31: #{a_call__.1} parent=11 // pred_region
          _
        $region32: #{a_call__.1} parent=11 // pred_fallthru
          _
        // Predicated region
        $region33: #{a_call__.1} parent=11 // pred_check
          %p224 = pneg %p168
        $region34: #{a_call__.1} parent=11 // pred_check_branch
          %226 = sbr.rel (%p224) target = $region36
        $region35: #{a_call__.1} parent=11 // pred_region
          _
        $region36: #{a_call__.1} parent=11 // pred_fallthru
          _
      $region12: #{a_call__.1} parent=5 // pred_fallthru
        _
      %p227 = scmp.lt.s32.totalorder %s16, 2
      // Predicated region
      $region37: #{a_call__.1} parent=5 // pred_check
        %p228 = pneg %p227
      $region38: #{a_call__.1} parent=5 // pred_check_branch
        %230 = sbr.rel (%p228) target = $region40
      $region39: #{a_call__.1} parent=5 // pred_region
        // Predicated region
        $region41: #{a_call__.1} parent=39 // pred_check
          %p231 = pneg %p36
        $region42: #{a_call__.1} parent=39 // pred_check_branch
          %233 = sbr.rel (%p231) target = $region44
        $region43: #{a_call__.1} parent=39 // pred_region
          %s234 = smul.u32 8, %s16
          %p235 = scmp.lt.s32.totalorder %s234, 15
          %s236 = scalar_select %p235, %s234, 15
          %s237 = smul.addr %s236, 2
          %s238 = smul.addr %s237, 8
          %s239 = scalar_lea.vmem %s0, %s238
          %s240 = smul.u32 8, %s16
        $region44: #{a_call__.1} parent=39 // pred_fallthru
          _
      $region40: #{a_call__.1} parent=5 // pred_fallthru
        _
      %p241 = scmp.le.s32.totalorder 1, %s16
      %p242 = scmp.lt.s32.totalorder %s16, 3
      %p243 = pnand %p241, %p242
      %p244 = pneg %p243
      // Predicated region
      $region45: #{a_call__.1} parent=5 // pred_check
        _
      $region46: #{a_call__.1} parent=5 // pred_check_branch
        %246 = sbr.rel (%p243) target = $region48
      $region47: #{a_call__.1} parent=5 // pred_region
        %s247 = ssub.s32 %s16, 1
        %s248 = smul.u32 8, %s21
        %p249 = scmp.lt.s32.totalorder %s248, 15
        %s250 = scalar_select %p249, %s248, 15
        %s251 = smul.addr %s250, 2
        %s252 = smul.addr %s251, 8
        %s253 = scalar_lea.vmem %s0, %s252
        %p254 = pneg %p42
        %p255 = pneg %p39
        %p256 = pneg %p63
        %p257 = pneg %p60
        %p258 = pneg %p84
        %p259 = pneg %p81
        %p260 = pneg %p105
        %p261 = pneg %p102
        %p262 = pneg %p126
        %p263 = pneg %p123
        %p264 = pneg %p147
        %p265 = pneg %p144
        %p266 = pneg %p168
        %p267 = pneg %p165
        %p268 = pneg %p194
        %p269 = pneg %p191
        %s270 = sand.u32 %s181, 1
        %s271 = scalar_lea.sflag [#allocation5], %s270
        %s272 = sand.u32 %s181, 1
        %s273 = smul.addr %s272, 8
        %s274 = scalar_lea.vmem [#allocation4], %s273
        %s275 = smul.u32 8, %s21
        %p276 = scmp.lt.s32.totalorder %s275, 15
        %s277 = scalar_select %p276, %s275, 15
        %s278 = smul.addr %s277, 2
        %s279 = smul.addr %s278, 8
        %s280 = scalar_lea.vmem %s0, %s279
        %s281 = smul.u32 8, %s21
        %v283 = vld [vmem:[%s280] sm:$0xff]
        %v284 = vld [vmem:[%s280 + $0x8] sm:$0xff]
        %285 = vxpose.xlu0.b32.start [1/16] %v283, 128
        %286 = vxpose.xlu0.b32.cont [2/16] %v284, 128
        %287 = vxpose.xlu0.b32.cont [3/16] 0.0, 128
        %288 = vxpose.xlu0.b32.cont [4/16] 0.0, 128
        %289 = vxpose.xlu0.b32.cont [5/16] 0.0, 128
        %290 = vxpose.xlu0.b32.cont [6/16] 0.0, 128
        %291 = vxpose.xlu0.b32.cont [7/16] 0.0, 128
        %292 = vxpose.xlu0.b32.cont [8/16] 0.0, 128
        %293 = vxpose.xlu0.b32.cont [9/16] 0.0, 128
        %294 = vxpose.xlu0.b32.cont [10/16] 0.0, 128
        %295 = vxpose.xlu0.b32.cont [11/16] 0.0, 128
        %296 = vxpose.xlu0.b32.cont [12/16] 0.0, 128
        %297 = vxpose.xlu0.b32.cont [13/16] 0.0, 128
        %298 = vxpose.xlu0.b32.cont [14/16] 0.0, 128
        %299 = vxpose.xlu0.b32.cont [15/16] 0.0, 128
        %300 = vxpose.xlu0.b32.end [16/16] 0.0, 128
        %v301 = vpop.trf.xlu0
        %v302 = vpop.trf.xlu0
        %v303 = vpop.trf.xlu0
        %v304 = vpop.trf.xlu0
        %v305 = vpop.trf.xlu0
        %v306 = vpop.trf.xlu0
        %v307 = vpop.trf.xlu0
        %v308 = vpop.trf.xlu0
        %v309 = vpop.trf.xlu0
        %v310 = vpop.trf.xlu0
        %v311 = vpop.trf.xlu0
        %v312 = vpop.trf.xlu0
        %v313 = vpop.trf.xlu0
        %v314 = vpop.trf.xlu0
        %v315 = vpop.trf.xlu0
        %v316 = vpop.trf.xlu0
        %vm317 = vcmask 130048
        %318 = vst.msk [vmem:[#allocation2] sm:$0xff] %vm317, %v301
        %319 = vst.msk [vmem:[#allocation2 + $0x8] sm:$0xff] %vm317, %v302
        %320 = vst.msk [vmem:[#allocation2 + $0x10] sm:$0xff] %vm317, %v303
        %vm321 = vcmask 122880
        %322 = vst.msk [vmem:[#allocation2 + $0x18] sm:$0x1] %vm321, %v304
        %s323 = scalar_lea.vmem %s280, 16
        %v324 = vld [vmem:[%s323] sm:$0xff]
        %v325 = vld [vmem:[%s323 + $0x8] sm:$0xff]
        %326 = vxpose.xlu0.b32.start [1/16] %v324, 128
        %327 = vxpose.xlu0.b32.cont [2/16] %v325, 128
        %328 = vxpose.xlu0.b32.cont [3/16] 0.0, 128
        %329 = vxpose.xlu0.b32.cont [4/16] 0.0, 128
        %330 = vxpose.xlu0.b32.cont [5/16] 0.0, 128
        %331 = vxpose.xlu0.b32.cont [6/16] 0.0, 128
        %332 = vxpose.xlu0.b32.cont [7/16] 0.0, 128
        %333 = vxpose.xlu0.b32.cont [8/16] 0.0, 128
        %334 = vxpose.xlu0.b32.cont [9/16] 0.0, 128
        %335 = vxpose.xlu0.b32.cont [10/16] 0.0, 128
        %336 = vxpose.xlu0.b32.cont [11/16] 0.0, 128
        %337 = vxpose.xlu0.b32.cont [12/16] 0.0, 128
        %338 = vxpose.xlu0.b32.cont [13/16] 0.0, 128
        %339 = vxpose.xlu0.b32.cont [14/16] 0.0, 128
        %340 = vxpose.xlu0.b32.cont [15/16] 0.0, 128
        %341 = vxpose.xlu0.b32.end [16/16] 0.0, 128
        %v342 = vpop.trf.xlu0
        %v343 = vpop.trf.xlu0
        %v344 = vpop.trf.xlu0
        %v345 = vpop.trf.xlu0
        %v346 = vpop.trf.xlu0
        %v347 = vpop.trf.xlu0
        %v348 = vpop.trf.xlu0
        %v349 = vpop.trf.xlu0
        %v350 = vpop.trf.xlu0
        %v351 = vpop.trf.xlu0
        %v352 = vpop.trf.xlu0
        %v353 = vpop.trf.xlu0
        %v354 = vpop.trf.xlu0
        %v355 = vpop.trf.xlu0
        %v356 = vpop.trf.xlu0
        %v357 = vpop.trf.xlu0
        %358 = vst.msk [vmem:[#allocation2 + $0x19] sm:$0xff] %vm317, %v342
        %359 = vst.msk [vmem:[#allocation2 + $0x21] sm:$0xff] %vm317, %v343
        %360 = vst.msk [vmem:[#allocation2 + $0x29] sm:$0xff] %vm317, %v344
        %361 = vst.msk [vmem:[#allocation2 + $0x31] sm:$0x1] %vm321, %v345
        %s362 = scalar_lea.vmem %s280, 32
        %v363 = vld [vmem:[%s362] sm:$0xff]
        %v364 = vld [vmem:[%s362 + $0x8] sm:$0xff]
        %365 = vxpose.xlu0.b32.start [1/16] %v363, 128
        %366 = vxpose.xlu0.b32.cont [2/16] %v364, 128
        %367 = vxpose.xlu0.b32.cont [3/16] 0.0, 128
        %368 = vxpose.xlu0.b32.cont [4/16] 0.0, 128
        %369 = vxpose.xlu0.b32.cont [5/16] 0.0, 128
        %370 = vxpose.xlu0.b32.cont [6/16] 0.0, 128
        %371 = vxpose.xlu0.b32.cont [7/16] 0.0, 128
        %372 = vxpose.xlu0.b32.cont [8/16] 0.0, 128
        %373 = vxpose.xlu0.b32.cont [9/16] 0.0, 128
        %374 = vxpose.xlu0.b32.cont [10/16] 0.0, 128
        %375 = vxpose.xlu0.b32.cont [11/16] 0.0, 128
        %376 = vxpose.xlu0.b32.cont [12/16] 0.0, 128
        %377 = vxpose.xlu0.b32.cont [13/16] 0.0, 128
        %378 = vxpose.xlu0.b32.cont [14/16] 0.0, 128
        %379 = vxpose.xlu0.b32.cont [15/16] 0.0, 128
        %380 = vxpose.xlu0.b32.end [16/16] 0.0, 128
        %v381 = vpop.trf.xlu0
        %v382 = vpop.trf.xlu0
        %v383 = vpop.trf.xlu0
        %v384 = vpop.trf.xlu0
        %v385 = vpop.trf.xlu0
        %v386 = vpop.trf.xlu0
        %v387 = vpop.trf.xlu0
        %v388 = vpop.trf.xlu0
        %v389 = vpop.trf.xlu0
        %v390 = vpop.trf.xlu0
        %v391 = vpop.trf.xlu0
        %v392 = vpop.trf.xlu0
        %v393 = vpop.trf.xlu0
        %v394 = vpop.trf.xlu0
        %v395 = vpop.trf.xlu0
        %v396 = vpop.trf.xlu0
        %397 = vst.msk [vmem:[#allocation2 + $0x32] sm:$0xff] %vm317, %v381
        %398 = vst.msk [vmem:[#allocation2 + $0x3a] sm:$0xff] %vm317, %v382
        %399 = vst.msk [vmem:[#allocation2 + $0x42] sm:$0xff] %vm317, %v383
        %400 = vst.msk [vmem:[#allocation2 + $0x4a] sm:$0x1] %vm321, %v384
        %s401 = scalar_lea.vmem %s280, 48
        %v402 = vld [vmem:[%s401] sm:$0xff]
        %v403 = vld [vmem:[%s401 + $0x8] sm:$0xff]
        %404 = vxpose.xlu0.b32.start [1/16] %v402, 128
        %405 = vxpose.xlu0.b32.cont [2/16] %v403, 128
        %406 = vxpose.xlu0.b32.cont [3/16] 0.0, 128
        %407 = vxpose.xlu0.b32.cont [4/16] 0.0, 128
        %408 = vxpose.xlu0.b32.cont [5/16] 0.0, 128
        %409 = vxpose.xlu0.b32.cont [6/16] 0.0, 128
        %410 = vxpose.xlu0.b32.cont [7/16] 0.0, 128
        %411 = vxpose.xlu0.b32.cont [8/16] 0.0, 128
        %412 = vxpose.xlu0.b32.cont [9/16] 0.0, 128
        %413 = vxpose.xlu0.b32.cont [10/16] 0.0, 128
        %414 = vxpose.xlu0.b32.cont [11/16] 0.0, 128
        %415 = vxpose.xlu0.b32.cont [12/16] 0.0, 128
        %416 = vxpose.xlu0.b32.cont [13/16] 0.0, 128
        %417 = vxpose.xlu0.b32.cont [14/16] 0.0, 128
        %418 = vxpose.xlu0.b32.cont [15/16] 0.0, 128
        %419 = vxpose.xlu0.b32.end [16/16] 0.0, 128
        %v420 = vpop.trf.xlu0
        %v421 = vpop.trf.xlu0
        %v422 = vpop.trf.xlu0
        %v423 = vpop.trf.xlu0
        %v424 = vpop.trf.xlu0
        %v425 = vpop.trf.xlu0
        %v426 = vpop.trf.xlu0
        %v427 = vpop.trf.xlu0
        %v428 = vpop.trf.xlu0
        %v429 = vpop.trf.xlu0
        %v430 = vpop.trf.xlu0
        %v431 = vpop.trf.xlu0
        %v432 = vpop.trf.xlu0
        %v433 = vpop.trf.xlu0
        %v434 = vpop.trf.xlu0
        %v435 = vpop.trf.xlu0
        %436 = vst.msk [vmem:[#allocation2 + $0x4b] sm:$0xff] %vm317, %v420
        %437 = vst.msk [vmem:[#allocation2 + $0x53] sm:$0xff] %vm317, %v421
        %438 = vst.msk [vmem:[#allocation2 + $0x5b] sm:$0xff] %vm317, %v422
        %439 = vst.msk [vmem:[#allocation2 + $0x63] sm:$0x1] %vm321, %v423
        %s440 = scalar_lea.vmem %s280, 64
        %v441 = vld [vmem:[%s440] sm:$0xff]
        %v442 = vld [vmem:[%s440 + $0x8] sm:$0xff]
        %443 = vxpose.xlu0.b32.start [1/16] %v441, 128
        %444 = vxpose.xlu0.b32.cont [2/16] %v442, 128
        %445 = vxpose.xlu0.b32.cont [3/16] 0.0, 128
        %446 = vxpose.xlu0.b32.cont [4/16] 0.0, 128
        %447 = vxpose.xlu0.b32.cont [5/16] 0.0, 128
        %448 = vxpose.xlu0.b32.cont [6/16] 0.0, 128
        %449 = vxpose.xlu0.b32.cont [7/16] 0.0, 128
        %450 = vxpose.xlu0.b32.cont [8/16] 0.0, 128
        %451 = vxpose.xlu0.b32.cont [9/16] 0.0, 128
        %452 = vxpose.xlu0.b32.cont [10/16] 0.0, 128
        %453 = vxpose.xlu0.b32.cont [11/16] 0.0, 128
        %454 = vxpose.xlu0.b32.cont [12/16] 0.0, 128
        %455 = vxpose.xlu0.b32.cont [13/16] 0.0, 128
        %456 = vxpose.xlu0.b32.cont [14/16] 0.0, 128
        %457 = vxpose.xlu0.b32.cont [15/16] 0.0, 128
        %458 = vxpose.xlu0.b32.end [16/16] 0.0, 128
        %v459 = vpop.trf.xlu0
        %v460 = vpop.trf.xlu0
        %v461 = vpop.trf.xlu0
        %v462 = vpop.trf.xlu0
        %v463 = vpop.trf.xlu0
        %v464 = vpop.trf.xlu0
        %v465 = vpop.trf.xlu0
        %v466 = vpop.trf.xlu0
        %v467 = vpop.trf.xlu0
        %v468 = vpop.trf.xlu0
        %v469 = vpop.trf.xlu0
        %v470 = vpop.trf.xlu0
        %v471 = vpop.trf.xlu0
        %v472 = vpop.trf.xlu0
        %v473 = vpop.trf.xlu0
        %v474 = vpop.trf.xlu0
        %475 = vst.msk [vmem:[#allocation2 + $0x64] sm:$0xff] %vm317, %v459
        %476 = vst.msk [vmem:[#allocation2 + $0x6c] sm:$0xff] %vm317, %v460
        %477 = vst.msk [vmem:[#allocation2 + $0x74] sm:$0xff] %vm317, %v461
        %478 = vst.msk [vmem:[#allocation2 + $0x7c] sm:$0x1] %vm321, %v462
        %s479 = scalar_lea.vmem %s280, 80
        %v480 = vld [vmem:[%s479] sm:$0xff]
        %v481 = vld [vmem:[%s479 + $0x8] sm:$0xff]
        %482 = vxpose.xlu0.b32.start [1/16] %v480, 128
        %483 = vxpose.xlu0.b32.cont [2/16] %v481, 128
        %484 = vxpose.xlu0.b32.cont [3/16] 0.0, 128
        %485 = vxpose.xlu0.b32.cont [4/16] 0.0, 128
        %486 = vxpose.xlu0.b32.cont [5/16] 0.0, 128
        %487 = vxpose.xlu0.b32.cont [6/16] 0.0, 128
        %488 = vxpose.xlu0.b32.cont [7/16] 0.0, 128
        %489 = vxpose.xlu0.b32.cont [8/16] 0.0, 128
        %490 = vxpose.xlu0.b32.cont [9/16] 0.0, 128
        %491 = vxpose.xlu0.b32.cont [10/16] 0.0, 128
        %492 = vxpose.xlu0.b32.cont [11/16] 0.0, 128
        %493 = vxpose.xlu0.b32.cont [12/16] 0.0, 128
        %494 = vxpose.xlu0.b32.cont [13/16] 0.0, 128
        %495 = vxpose.xlu0.b32.cont [14/16] 0.0, 128
        %496 = vxpose.xlu0.b32.cont [15/16] 0.0, 128
        %497 = vxpose.xlu0.b32.end [16/16] 0.0, 128
        %v498 = vpop.trf.xlu0
        %v499 = vpop.trf.xlu0
        %v500 = vpop.trf.xlu0
        %v501 = vpop.trf.xlu0
        %v502 = vpop.trf.xlu0
        %v503 = vpop.trf.xlu0
        %v504 = vpop.trf.xlu0
        %v505 = vpop.trf.xlu0
        %v506 = vpop.trf.xlu0
        %v507 = vpop.trf.xlu0
        %v508 = vpop.trf.xlu0
        %v509 = vpop.trf.xlu0
        %v510 = vpop.trf.xlu0
        %v511 = vpop.trf.xlu0
        %v512 = vpop.trf.xlu0
        %v513 = vpop.trf.xlu0
        %514 = vst.msk [vmem:[#allocation2 + $0x7d] sm:$0xff] %vm317, %v498
        %515 = vst.msk [vmem:[#allocation2 + $0x85] sm:$0xff] %vm317, %v499
        %516 = vst.msk [vmem:[#allocation2 + $0x8d] sm:$0xff] %vm317, %v500
        %517 = vst.msk [vmem:[#allocation2 + $0x95] sm:$0x1] %vm321, %v501
        %s518 = scalar_lea.vmem %s280, 96
        %v519 = vld [vmem:[%s518] sm:$0xff]
        %v520 = vld [vmem:[%s518 + $0x8] sm:$0xff]
        %521 = vxpose.xlu0.b32.start [1/16] %v519, 128
        %522 = vxpose.xlu0.b32.cont [2/16] %v520, 128
        %523 = vxpose.xlu0.b32.cont [3/16] 0.0, 128
        %524 = vxpose.xlu0.b32.cont [4/16] 0.0, 128
        %525 = vxpose.xlu0.b32.cont [5/16] 0.0, 128
        %526 = vxpose.xlu0.b32.cont [6/16] 0.0, 128
        %527 = vxpose.xlu0.b32.cont [7/16] 0.0, 128
        %528 = vxpose.xlu0.b32.cont [8/16] 0.0, 128
        %529 = vxpose.xlu0.b32.cont [9/16] 0.0, 128
        %530 = vxpose.xlu0.b32.cont [10/16] 0.0, 128
        %531 = vxpose.xlu0.b32.cont [11/16] 0.0, 128
        %532 = vxpose.xlu0.b32.cont [12/16] 0.0, 128
        %533 = vxpose.xlu0.b32.cont [13/16] 0.0, 128
        %534 = vxpose.xlu0.b32.cont [14/16] 0.0, 128
        %535 = vxpose.xlu0.b32.cont [15/16] 0.0, 128
        %536 = vxpose.xlu0.b32.end [16/16] 0.0, 128
        %v537 = vpop.trf.xlu0
        %v538 = vpop.trf.xlu0
        %v539 = vpop.trf.xlu0
        %v540 = vpop.trf.xlu0
        %v541 = vpop.trf.xlu0
        %v542 = vpop.trf.xlu0
        %v543 = vpop.trf.xlu0
        %v544 = vpop.trf.xlu0
        %v545 = vpop.trf.xlu0
        %v546 = vpop.trf.xlu0
        %v547 = vpop.trf.xlu0
        %v548 = vpop.trf.xlu0
        %v549 = vpop.trf.xlu0
        %v550 = vpop.trf.xlu0
        %v551 = vpop.trf.xlu0
        %v552 = vpop.trf.xlu0
        %553 = vst.msk [vmem:[#allocation2 + $0x96] sm:$0xff] %vm317, %v537
        %554 = vst.msk [vmem:[#allocation2 + $0x9e] sm:$0xff] %vm317, %v538
        %555 = vst.msk [vmem:[#allocation2 + $0xa6] sm:$0xff] %vm317, %v539
        %556 = vst.msk [vmem:[#allocation2 + $0xae] sm:$0x1] %vm321, %v540
        %s557 = scalar_lea.vmem %s280, 112
        %v558 = vld [vmem:[%s557] sm:$0xff]
        %v559 = vld [vmem:[%s557 + $0x8] sm:$0xff]
        %560 = vxpose.xlu0.b32.start [1/16] %v558, 128
        %561 = vxpose.xlu0.b32.cont [2/16] %v559, 128
        %562 = vxpose.xlu0.b32.cont [3/16] 0.0, 128
        %563 = vxpose.xlu0.b32.cont [4/16] 0.0, 128
        %564 = vxpose.xlu0.b32.cont [5/16] 0.0, 128
        %565 = vxpose.xlu0.b32.cont [6/16] 0.0, 128
        %566 = vxpose.xlu0.b32.cont [7/16] 0.0, 128
        %567 = vxpose.xlu0.b32.cont [8/16] 0.0, 128
        %568 = vxpose.xlu0.b32.cont [9/16] 0.0, 128
        %569 = vxpose.xlu0.b32.cont [10/16] 0.0, 128
        %570 = vxpose.xlu0.b32.cont [11/16] 0.0, 128
        %571 = vxpose.xlu0.b32.cont [12/16] 0.0, 128
        %572 = vxpose.xlu0.b32.cont [13/16] 0.0, 128
        %573 = vxpose.xlu0.b32.cont [14/16] 0.0, 128
        %574 = vxpose.xlu0.b32.cont [15/16] 0.0, 128
        %575 = vxpose.xlu0.b32.end [16/16] 0.0, 128
        %v576 = vpop.trf.xlu0
        %v577 = vpop.trf.xlu0
        %v578 = vpop.trf.xlu0
        %v579 = vpop.trf.xlu0
        %v580 = vpop.trf.xlu0
        %v581 = vpop.trf.xlu0
        %v582 = vpop.trf.xlu0
        %v583 = vpop.trf.xlu0
        %v584 = vpop.trf.xlu0
        %v585 = vpop.trf.xlu0
        %v586 = vpop.trf.xlu0
        %v587 = vpop.trf.xlu0
        %v588 = vpop.trf.xlu0
        %v589 = vpop.trf.xlu0
        %v590 = vpop.trf.xlu0
        %v591 = vpop.trf.xlu0
        %592 = vst.msk [vmem:[#allocation2 + $0xaf] sm:$0xff] %vm317, %v576
        %593 = vst.msk [vmem:[#allocation2 + $0xb7] sm:$0xff] %vm317, %v577
        %594 = vst.msk [vmem:[#allocation2 + $0xbf] sm:$0xff] %vm317, %v578
        %595 = vst.msk [vmem:[#allocation2 + $0xc7] sm:$0x1] %vm321, %v579
        %596 = vst.msk [vmem:[#allocation2 + $0xc8] sm:$0xff] %vm317, 0.0
        %vm597 = vcmask 125952
        %598 = vst.msk [vmem:[#allocation2 + $0xd0] sm:$0xf] %vm597, 0.0
        %vm599 = vcmask 195584
        %600 = vst.msk [vmem:[#allocation3 + $0xc8] sm:$0xff] %vm599, 0.0
        %vm601 = vcmask 191488
        %602 = vst.msk [vmem:[#allocation3 + $0xd0] sm:$0xf] %vm601, 0.0
        %v603 = vld [vmem:[#allocation2] sm:$0xff]
        %v604 = vld [vmem:[#allocation2 + $0x8] sm:$0xff]
        %v605 = vld [vmem:[#allocation2 + $0x10] sm:$0xff]
        %v606 = vld [vmem:[#allocation2 + $0x18] sm:$0xff]
        %v607 = vld [vmem:[#allocation2 + $0x20] sm:$0xff]
        %v608 = vld [vmem:[#allocation2 + $0x28] sm:$0xff]
        %v609 = vld [vmem:[#allocation2 + $0x30] sm:$0xff]
        %v610 = vld [vmem:[#allocation2 + $0x38] sm:$0xff]
        %v611 = vld [vmem:[#allocation2 + $0x40] sm:$0xff]
        %v612 = vld [vmem:[#allocation2 + $0x48] sm:$0xff]
        %v613 = vld [vmem:[#allocation2 + $0x50] sm:$0xff]
        %v614 = vld [vmem:[#allocation2 + $0x58] sm:$0xff]
        %v615 = vld [vmem:[#allocation2 + $0x60] sm:$0xff]
        %v616 = vld [vmem:[#allocation2 + $0x68] sm:$0xff]
        %v617 = vld [vmem:[#allocation2 + $0x70] sm:$0xff]
        %v618 = vld [vmem:[#allocation2 + $0x78] sm:$0xff]
        %v619 = vld [vmem:[#allocation2 + $0x80] sm:$0xff]
        %v620 = vld [vmem:[#allocation2 + $0x88] sm:$0xff]
        %v621 = vld [vmem:[#allocation2 + $0x90] sm:$0xff]
        %v622 = vld [vmem:[#allocation2 + $0x98] sm:$0xff]
        %v623 = vld [vmem:[#allocation2 + $0xa0] sm:$0xff]
        %v624 = vld [vmem:[#allocation2 + $0xa8] sm:$0xff]
        %v625 = vld [vmem:[#allocation2 + $0xb0] sm:$0xff]
        %v626 = vld [vmem:[#allocation2 + $0xb8] sm:$0xff]
        %v627 = vld [vmem:[#allocation2 + $0xc0] sm:$0xff]
        %v628 = vpack.c.bf16 %v604, %v603
        %v629 = vpack.c.bf16 %v606, %v605
        %v630 = vpack.c.bf16 %v608, %v607
        %v631 = vpack.c.bf16 %v610, %v609
        %v632 = vpack.c.bf16 %v612, %v611
        %v633 = vpack.c.bf16 %v614, %v613
        %v634 = vpack.c.bf16 %v616, %v615
        %v635 = vpack.c.bf16 %v618, %v617
        %v636 = vpack.c.bf16 %v620, %v619
        %v637 = vpack.c.bf16 %v622, %v621
        %v638 = vpack.c.bf16 %v624, %v623
        %v639 = vpack.c.bf16 %v626, %v625
        %v640 = vpack.c.bf16 %v627, %v627
        %v641 = vld [vmem:[%s1] sm:$0xf]
        %v642 = vld [vmem:[%s1 + $0x4] sm:$0xf]
        %v643 = vld [vmem:[#allocation2 + $0x1] sm:$0xff]
        %v644 = vld [vmem:[#allocation2 + $0x9] sm:$0xff]
        %v645 = vld [vmem:[#allocation2 + $0x11] sm:$0xff]
        %v646 = vld [vmem:[#allocation2 + $0x19] sm:$0xff]
        %v647 = vld [vmem:[#allocation2 + $0x21] sm:$0xff]
        %v648 = vld [vmem:[#allocation2 + $0x29] sm:$0xff]
        %v649 = vld [vmem:[#allocation2 + $0x31] sm:$0xff]
        %v650 = vld [vmem:[#allocation2 + $0x39] sm:$0xff]
        %v651 = vld [vmem:[#allocation2 + $0x41] sm:$0xff]
        %v652 = vld [vmem:[#allocation2 + $0x49] sm:$0xff]
        %v653 = vld [vmem:[#allocation2 + $0x51] sm:$0xff]
        %v654 = vld [vmem:[#allocation2 + $0x59] sm:$0xff]
        %v655 = vld [vmem:[#allocation2 + $0x61] sm:$0xff]
        %v656 = vld [vmem:[#allocation2 + $0x69] sm:$0xff]
        %v657 = vld [vmem:[#allocation2 + $0x71] sm:$0xff]
        %v658 = vld [vmem:[#allocation2 + $0x79] sm:$0xff]
        %v659 = vld [vmem:[#allocation2 + $0x81] sm:$0xff]
        %v660 = vld [vmem:[#allocation2 + $0x89] sm:$0xff]
        %v661 = vld [vmem:[#allocation2 + $0x91] sm:$0xff]
        %v662 = vld [vmem:[#allocation2 + $0x99] sm:$0xff]
        %v663 = vld [vmem:[#allocation2 + $0xa1] sm:$0xff]
        %v664 = vld [vmem:[#allocation2 + $0xa9] sm:$0xff]
        %v665 = vld [vmem:[#allocation2 + $0xb1] sm:$0xff]
        %v666 = vld [vmem:[#allocation2 + $0xb9] sm:$0xff]
        %v667 = vld [vmem:[#allocation2 + $0xc1] sm:$0xff]
        %v668 = vpack.c.bf16 %v644, %v643
        %v669 = vpack.c.bf16 %v646, %v645
        %v670 = vpack.c.bf16 %v648, %v647
        %v671 = vpack.c.bf16 %v650, %v649
        %v672 = vpack.c.bf16 %v652, %v651
        %v673 = vpack.c.bf16 %v654, %v653
        %v674 = vpack.c.bf16 %v656, %v655
        %v675 = vpack.c.bf16 %v658, %v657
        %v676 = vpack.c.bf16 %v660, %v659
        %v677 = vpack.c.bf16 %v662, %v661
        %v678 = vpack.c.bf16 %v664, %v663
        %v679 = vpack.c.bf16 %v666, %v665
        %v680 = vpack.c.bf16 %v667, %v667
        %s681 = scalar_lea.vmem %s1, 8
        %v682 = vld [vmem:[%s681] sm:$0xf]
        %v683 = vld [vmem:[%s681 + $0x4] sm:$0xf]
        %v686 = vunpack.c.l.b16 %v682
        %v687 = vunpack.c.l.b16 %v683
        %v688 = vpack.c.b16 %v687, %v686
        %v691 = vsel %vm317, %v668, 0
        %v694 = vsel %vm317, %v669, 0
        %v697 = vsel %vm317, %v670, 0
        %v700 = vsel %vm317, %v671, 0
        %v703 = vsel %vm317, %v672, 0
        %v706 = vsel %vm317, %v673, 0
        %v709 = vsel %vm317, %v674, 0
        %v712 = vsel %vm317, %v675, 0
        %v715 = vsel %vm317, %v676, 0
        %v718 = vsel %vm317, %v677, 0
        %v721 = vsel %vm317, %v678, 0
        %v724 = vsel %vm317, %v679, 0
        %v727 = vsel %vm317, %v680, 0
        %729 = vmatprep.subr.bf16.mxu0 0
        %730 = vmatpush1.bf16.msra.mxu0 %v688
        %731 = vmatprep.subr.bf16.mxu0 0
        %732 = vmatpush1.bf16.msra.mxu0 0
        %733 = vmatprep.subr.bf16.mxu0 0
        %734 = vmatpush1.bf16.msra.mxu0 0
        %735 = vmatprep.subr.bf16.mxu0 0
        %736 = vmatpush1.bf16.msra.mxu0 0
        %737 = vmatprep.subr.bf16.mxu0 0
        %738 = vmatpush1.bf16.msra.mxu0 0
        %739 = vmatprep.subr.bf16.mxu0 0
        %740 = vmatpush1.bf16.msra.mxu0 0
        %741 = vmatprep.subr.bf16.mxu0 0
        %742 = vmatpush1.bf16.msra.mxu0 0
        %743 = vmatprep.subr.bf16.mxu0 0
        %744 = vmatpush1.bf16.msra.mxu0 0
        %745 = vmatprep.subr.bf16.mxu0 0
        %746 = vmatpush1.bf16.msra.mxu0 0
        %747 = vmatprep.subr.bf16.mxu0 0
        %748 = vmatpush1.bf16.msra.mxu0 0
        %749 = vmatprep.subr.bf16.mxu0 0
        %750 = vmatpush1.bf16.msra.mxu0 0
        %751 = vmatprep.subr.bf16.mxu0 0
        %752 = vmatpush1.bf16.msra.mxu0 0
        %753 = vmatprep.subr.bf16.mxu0 0
        %754 = vmatpush1.bf16.msra.mxu0 0
        %755 = vmatprep.subr.bf16.mxu0 0
        %756 = vmatpush1.bf16.msra.mxu0 0
        %757 = vmatprep.subr.bf16.mxu0 0
        %758 = vmatpush1.bf16.msra.mxu0 0
        %759 = vmatprep.subr.bf16.mxu0 0
        %760 = vmatpush1.bf16.msra.mxu0 0
        %761 = vmatprep.mubr.bf16.mxu0 0
        %762 = vmatmul.mubr.bf16.gmra.mrb[0].mxu0 %v691
        %v763 = vpop.f32.mrb[0].mxu0
        %v764 = vadd.f32 0.0, %v763
        %v765 = vpop.f32.mrb[0].mxu0
        %v766 = vpop.f32.mrb[0].mxu0
        %v767 = vadd.f32 0.0, %v766
        %v768 = vpop.f32.mrb[0].mxu0
        %769 = vmatprep.mubr.bf16.mxu0 0
        %770 = vmatmul.mubr.bf16.gmra.mrb[0].mxu0 %v694
        %v771 = vpop.f32.mrb[0].mxu0
        %v772 = vadd.f32 0.0, %v771
        %v773 = vpop.f32.mrb[0].mxu0
        %v774 = vpop.f32.mrb[0].mxu0
        %v775 = vadd.f32 0.0, %v774
        %v776 = vpop.f32.mrb[0].mxu0
        %777 = vmatprep.mubr.bf16.mxu0 0
        %778 = vmatmul.mubr.bf16.gmra.mrb[0].mxu0 %v697
        %v779 = vpop.f32.mrb[0].mxu0
        %v780 = vadd.f32 0.0, %v779
        %v781 = vpop.f32.mrb[0].mxu0
        %v782 = vpop.f32.mrb[0].mxu0
        %v783 = vadd.f32 0.0, %v782
        %v784 = vpop.f32.mrb[0].mxu0
        %785 = vmatprep.mubr.bf16.mxu0 0
        %786 = vmatmul.mubr.bf16.gmra.mrb[0].mxu0 %v700
        %v787 = vpop.f32.mrb[0].mxu0
        %v788 = vadd.f32 0.0, %v787
        %v789 = vpop.f32.mrb[0].mxu0
        %v790 = vpop.f32.mrb[0].mxu0
        %v791 = vadd.f32 0.0, %v790
        %v792 = vpop.f32.mrb[0].mxu0
        %793 = vmatprep.mubr.bf16.mxu0 0
        %794 = vmatmul.mubr.bf16.gmra.mrb[0].mxu0 %v703
        %v795 = vpop.f32.mrb[0].mxu0
        %v796 = vadd.f32 0.0, %v795
        %v797 = vpop.f32.mrb[0].mxu0
        %v798 = vpop.f32.mrb[0].mxu0
        %v799 = vadd.f32 0.0, %v798
        %v800 = vpop.f32.mrb[0].mxu0
        %801 = vmatprep.mubr.bf16.mxu0 0
        %802 = vmatmul.mubr.bf16.gmra.mrb[0].mxu0 %v706
        %v803 = vpop.f32.mrb[0].mxu0
        %v804 = vadd.f32 0.0, %v803
        %v805 = vpop.f32.mrb[0].mxu0
        %v806 = vpop.f32.mrb[0].mxu0
        %v807 = vadd.f32 0.0, %v806
        %v808 = vpop.f32.mrb[0].mxu0
        %809 = vmatprep.mubr.bf16.mxu0 0
        %810 = vmatmul.mubr.bf16.gmra.mrb[0].mxu0 %v709
        %v811 = vpop.f32.mrb[0].mxu0
        %v812 = vadd.f32 0.0, %v811
        %v813 = vpop.f32.mrb[0].mxu0
        %v814 = vpop.f32.mrb[0].mxu0
        %v815 = vadd.f32 0.0, %v814
        %v816 = vpop.f32.mrb[0].mxu0
        %817 = vmatprep.mubr.bf16.mxu0 0
        %818 = vmatmul.mubr.bf16.gmra.mrb[0].mxu0 %v712
        %v819 = vpop.f32.mrb[0].mxu0
        %v820 = vadd.f32 0.0, %v819
        %v821 = vpop.f32.mrb[0].mxu0
        %v822 = vpop.f32.mrb[0].mxu0
        %v823 = vadd.f32 0.0, %v822
        %v824 = vpop.f32.mrb[0].mxu0
        %825 = vmatprep.mubr.bf16.mxu0 0
        %826 = vmatmul.mubr.bf16.gmra.mrb[0].mxu0 %v715
        %v827 = vpop.f32.mrb[0].mxu0
        %v828 = vadd.f32 0.0, %v827
        %v829 = vpop.f32.mrb[0].mxu0
        %v830 = vpop.f32.mrb[0].mxu0
        %v831 = vadd.f32 0.0, %v830
        %v832 = vpop.f32.mrb[0].mxu0
        %833 = vmatprep.mubr.bf16.mxu0 0
        %834 = vmatmul.mubr.bf16.gmra.mrb[0].mxu0 %v718
        %v835 = vpop.f32.mrb[0].mxu0
        %v836 = vadd.f32 0.0, %v835
        %v837 = vpop.f32.mrb[0].mxu0
        %v838 = vpop.f32.mrb[0].mxu0
        %v839 = vadd.f32 0.0, %v838
        %v840 = vpop.f32.mrb[0].mxu0
        %841 = vmatprep.mubr.bf16.mxu0 0
        %842 = vmatmul.mubr.bf16.gmra.mrb[0].mxu0 %v721
        %v843 = vpop.f32.mrb[0].mxu0
        %v844 = vadd.f32 0.0, %v843
        %v845 = vpop.f32.mrb[0].mxu0
        %v846 = vpop.f32.mrb[0].mxu0
        %v847 = vadd.f32 0.0, %v846
        %v848 = vpop.f32.mrb[0].mxu0
        %849 = vmatprep.mubr.bf16.mxu0 0
        %850 = vmatmul.mubr.bf16.gmra.mrb[0].mxu0 %v724
        %v851 = vpop.f32.mrb[0].mxu0
        %v852 = vadd.f32 0.0, %v851
        %v853 = vpop.f32.mrb[0].mxu0
        %v854 = vpop.f32.mrb[0].mxu0
        %v855 = vadd.f32 0.0, %v854
        %v856 = vpop.f32.mrb[0].mxu0
        %857 = vmatprep.mubr.bf16.mxu0 0
        %858 = vmatmul.mubr.bf16.gmra.mrb[0].mxu0 %v727
        %v859 = vpop.f32.mrb[0].mxu0
        %v860 = vadd.f32 0.0, %v859
        %v861 = vpop.f32.mrb[0].mxu0
        %v862 = vpop.f32.mrb[0].mxu0
        %v863 = vpop.f32.mrb[0].mxu0
        %864 = vdwg.mxu0
        %v867 = vunpack.c.l.b16 %v641
        %v868 = vunpack.c.l.b16 %v642
        %v869 = vpack.c.b16 %v868, %v867
        %v872 = vsel %vm317, %v628, 0
        %v875 = vsel %vm317, %v629, 0
        %v878 = vsel %vm317, %v630, 0
        %v881 = vsel %vm317, %v631, 0
        %v884 = vsel %vm317, %v632, 0
        %v887 = vsel %vm317, %v633, 0
        %v890 = vsel %vm317, %v634, 0
        %v893 = vsel %vm317, %v635, 0
        %v896 = vsel %vm317, %v636, 0
        %v899 = vsel %vm317, %v637, 0
        %v902 = vsel %vm317, %v638, 0
        %v905 = vsel %vm317, %v639, 0
        %v908 = vsel %vm317, %v640, 0
        %910 = vmatprep.subr.bf16.mxu0 0
        %911 = vmatpush1.bf16.msra.mxu0 %v869
        %912 = vmatprep.subr.bf16.mxu0 0
        %913 = vmatpush1.bf16.msra.mxu0 0
        %914 = vmatprep.subr.bf16.mxu0 0
        %915 = vmatpush1.bf16.msra.mxu0 0
        %916 = vmatprep.subr.bf16.mxu0 0
        %917 = vmatpush1.bf16.msra.mxu0 0
        %918 = vmatprep.subr.bf16.mxu0 0
        %919 = vmatpush1.bf16.msra.mxu0 0
        %920 = vmatprep.subr.bf16.mxu0 0
        %921 = vmatpush1.bf16.msra.mxu0 0
        %922 = vmatprep.subr.bf16.mxu0 0
        %923 = vmatpush1.bf16.msra.mxu0 0
        %924 = vmatprep.subr.bf16.mxu0 0
        %925 = vmatpush1.bf16.msra.mxu0 0
        %926 = vmatprep.subr.bf16.mxu0 0
        %927 = vmatpush1.bf16.msra.mxu0 0
        %928 = vmatprep.subr.bf16.mxu0 0
        %929 = vmatpush1.bf16.msra.mxu0 0
        %930 = vmatprep.subr.bf16.mxu0 0
        %931 = vmatpush1.bf16.msra.mxu0 0
        %932 = vmatprep.subr.bf16.mxu0 0
        %933 = vmatpush1.bf16.msra.mxu0 0
        %934 = vmatprep.subr.bf16.mxu0 0
        %935 = vmatpush1.bf16.msra.mxu0 0
        %936 = vmatprep.subr.bf16.mxu0 0
        %937 = vmatpush1.bf16.msra.mxu0 0
        %938 = vmatprep.subr.bf16.mxu0 0
        %939 = vmatpush1.bf16.msra.mxu0 0
        %940 = vmatprep.subr.bf16.mxu0 0
        %941 = vmatpush1.bf16.msra.mxu0 0
        %942 = vmatprep.mubr.bf16.mxu0 0
        %943 = vmatmul.mubr.bf16.gmra.mrb[0].mxu0 %v872
        %v944 = vpop.f32.mrb[0].mxu0
        %v945 = vadd.f32 %v764, %v944
        %v946 = vpop.f32.mrb[0].mxu0
        %v947 = vpop.f32.mrb[0].mxu0
        %v948 = vadd.f32 %v767, %v947
        %v949 = vpop.f32.mrb[0].mxu0
        %950 = vmatprep.mubr.bf16.mxu0 0
        %951 = vmatmul.mubr.bf16.gmra.mrb[0].mxu0 %v875
        %v952 = vpop.f32.mrb[0].mxu0
        %v953 = vadd.f32 %v772, %v952
        %v954 = vpop.f32.mrb[0].mxu0
        %v955 = vpop.f32.mrb[0].mxu0
        %v956 = vadd.f32 %v775, %v955
        %v957 = vpop.f32.mrb[0].mxu0
        %958 = vmatprep.mubr.bf16.mxu0 0
        %959 = vmatmul.mubr.bf16.gmra.mrb[0].mxu0 %v878
        %v960 = vpop.f32.mrb[0].mxu0
        %v961 = vadd.f32 %v780, %v960
        %v962 = vpop.f32.mrb[0].mxu0
        %v963 = vpop.f32.mrb[0].mxu0
        %v964 = vadd.f32 %v783, %v963
        %v965 = vpop.f32.mrb[0].mxu0
        %966 = vmatprep.mubr.bf16.mxu0 0
        %967 = vmatmul.mubr.bf16.gmra.mrb[0].mxu0 %v881
        %v968 = vpop.f32.mrb[0].mxu0
        %v969 = vadd.f32 %v788, %v968
        %v970 = vpop.f32.mrb[0].mxu0
        %v971 = vpop.f32.mrb[0].mxu0
        %v972 = vadd.f32 %v791, %v971
        %v973 = vpop.f32.mrb[0].mxu0
        %974 = vmatprep.mubr.bf16.mxu0 0
        %975 = vmatmul.mubr.bf16.gmra.mrb[0].mxu0 %v884
        %v976 = vpop.f32.mrb[0].mxu0
        %v977 = vadd.f32 %v796, %v976
        %v978 = vpop.f32.mrb[0].mxu0
        %v979 = vpop.f32.mrb[0].mxu0
        %v980 = vadd.f32 %v799, %v979
        %v981 = vpop.f32.mrb[0].mxu0
        %982 = vmatprep.mubr.bf16.mxu0 0
        %983 = vmatmul.mubr.bf16.gmra.mrb[0].mxu0 %v887
        %v984 = vpop.f32.mrb[0].mxu0
        %v985 = vadd.f32 %v804, %v984
        %v986 = vpop.f32.mrb[0].mxu0
        %v987 = vpop.f32.mrb[0].mxu0
        %v988 = vadd.f32 %v807, %v987
        %v989 = vpop.f32.mrb[0].mxu0
        %990 = vmatprep.mubr.bf16.mxu0 0
        %991 = vmatmul.mubr.bf16.gmra.mrb[0].mxu0 %v890
        %v992 = vpop.f32.mrb[0].mxu0
        %v993 = vadd.f32 %v812, %v992
        %v994 = vpop.f32.mrb[0].mxu0
        %v995 = vpop.f32.mrb[0].mxu0
        %v996 = vadd.f32 %v815, %v995
        %v997 = vpop.f32.mrb[0].mxu0
        %998 = vmatprep.mubr.bf16.mxu0 0
        %999 = vmatmul.mubr.bf16.gmra.mrb[0].mxu0 %v893
        %v1000 = vpop.f32.mrb[0].mxu0
        %v1001 = vadd.f32 %v820, %v1000
        %v1002 = vpop.f32.mrb[0].mxu0
        %v1003 = vpop.f32.mrb[0].mxu0
        %v1004 = vadd.f32 %v823, %v1003
        %v1005 = vpop.f32.mrb[0].mxu0
        %1006 = vmatprep.mubr.bf16.mxu0 0
        %1007 = vmatmul.mubr.bf16.gmra.mrb[0].mxu0 %v896
        %v1008 = vpop.f32.mrb[0].mxu0
        %v1009 = vadd.f32 %v828, %v1008
        %v1010 = vpop.f32.mrb[0].mxu0
        %v1011 = vpop.f32.mrb[0].mxu0
        %v1012 = vadd.f32 %v831, %v1011
        %v1013 = vpop.f32.mrb[0].mxu0
        %1014 = vmatprep.mubr.bf16.mxu0 0
        %1015 = vmatmul.mubr.bf16.gmra.mrb[0].mxu0 %v899
        %v1016 = vpop.f32.mrb[0].mxu0
        %v1017 = vadd.f32 %v836, %v1016
        %v1018 = vpop.f32.mrb[0].mxu0
        %v1019 = vpop.f32.mrb[0].mxu0
        %v1020 = vadd.f32 %v839, %v1019
        %v1021 = vpop.f32.mrb[0].mxu0
        %1022 = vmatprep.mubr.bf16.mxu0 0
        %1023 = vmatmul.mubr.bf16.gmra.mrb[0].mxu0 %v902
        %v1024 = vpop.f32.mrb[0].mxu0
        %v1025 = vadd.f32 %v844, %v1024
        %v1026 = vpop.f32.mrb[0].mxu0
        %v1027 = vpop.f32.mrb[0].mxu0
        %v1028 = vadd.f32 %v847, %v1027
        %v1029 = vpop.f32.mrb[0].mxu0
        %1030 = vmatprep.mubr.bf16.mxu0 0
        %1031 = vmatmul.mubr.bf16.gmra.mrb[0].mxu0 %v905
        %v1032 = vpop.f32.mrb[0].mxu0
        %v1033 = vadd.f32 %v852, %v1032
        %v1034 = vpop.f32.mrb[0].mxu0
        %v1035 = vpop.f32.mrb[0].mxu0
        %v1036 = vadd.f32 %v855, %v1035
        %v1037 = vpop.f32.mrb[0].mxu0
        %1038 = vmatprep.mubr.bf16.mxu0 0
        %1039 = vmatmul.mubr.bf16.gmra.mrb[0].mxu0 %v908
        %v1040 = vpop.f32.mrb[0].mxu0
        %v1041 = vadd.f32 %v860, %v1040
        %v1042 = vpop.f32.mrb[0].mxu0
        %v1043 = vpop.f32.mrb[0].mxu0
        %v1044 = vpop.f32.mrb[0].mxu0
        %1045 = vdwg.mxu0
        %v1046 = vld [vmem:[#allocation2 + $0x2] sm:$0xff]
        %v1047 = vld [vmem:[#allocation2 + $0xa] sm:$0xff]
        %v1048 = vld [vmem:[#allocation2 + $0x12] sm:$0xff]
        %v1049 = vld [vmem:[#allocation2 + $0x1a] sm:$0xff]
        %v1050 = vld [vmem:[#allocation2 + $0x22] sm:$0xff]
        %v1051 = vld [vmem:[#allocation2 + $0x2a] sm:$0xff]
        %v1052 = vld [vmem:[#allocation2 + $0x32] sm:$0xff]
        %v1053 = vld [vmem:[#allocation2 + $0x3a] sm:$0xff]
        %v1054 = vld [vmem:[#allocation2 + $0x42] sm:$0xff]
        %v1055 = vld [vmem:[#allocation2 + $0x4a] sm:$0xff]
        %v1056 = vld [vmem:[#allocation2 + $0x52] sm:$0xff]
        %v1057 = vld [vmem:[#allocation2 + $0x5a] sm:$0xff]
        %v1058 = vld [vmem:[#allocation2 + $0x62] sm:$0xff]
        %v1059 = vld [vmem:[#allocation2 + $0x6a] sm:$0xff]
        %v1060 = vld [vmem:[#allocation2 + $0x72] sm:$0xff]
        %v1061 = vld [vmem:[#allocation2 + $0x7a] sm:$0xff]
        %v1062 = vld [vmem:[#allocation2 + $0x82] sm:$0xff]
        %v1063 = vld [vmem:[#allocation2 + $0x8a] sm:$0xff]
        %v1064 = vld [vmem:[#allocation2 + $0x92] sm:$0xff]
        %v1065 = vld [vmem:[#allocation2 + $0x9a] sm:$0xff]
        %v1066 = vld [vmem:[#allocation2 + $0xa2] sm:$0xff]
        %v1067 = vld [vmem:[#allocation2 + $0xaa] sm:$0xff]
        %v1068 = vld [vmem:[#allocation2 + $0xb2] sm:$0xff]
        %v1069 = vld [vmem:[#allocation2 + $0xba] sm:$0xff]
        %v1070 = vld [vmem:[#allocation2 + $0xc2] sm:$0xff]
        %v1071 = vpack.c.bf16 %v1047, %v1046
        %v1072 = vpack.c.bf16 %v1049, %v1048
        %v1073 = vpack.c.bf16 %v1051, %v1050
        %v1074 = vpack.c.bf16 %v1053, %v1052
        %v1075 = vpack.c.bf16 %v1055, %v1054
        %v1076 = vpack.c.bf16 %v1057, %v1056
        %v1077 = vpack.c.bf16 %v1059, %v1058
        %v1078 = vpack.c.bf16 %v1061, %v1060
        %v1079 = vpack.c.bf16 %v1063, %v1062
        %v1080 = vpack.c.bf16 %v1065, %v1064
        %v1081 = vpack.c.bf16 %v1067, %v1066
        %v1082 = vpack.c.bf16 %v1069, %v1068
        %v1083 = vpack.c.bf16 %v1070, %v1070
        %s1084 = scalar_lea.vmem %s1, 16
        %v1085 = vld [vmem:[%s1084] sm:$0xf]
        %v1086 = vld [vmem:[%s1084 + $0x4] sm:$0xf]
        %v1089 = vunpack.c.l.b16 %v1085
        %v1090 = vunpack.c.l.b16 %v1086
        %v1091 = vpack.c.b16 %v1090, %v1089
        %v1094 = vsel %vm317, %v1071, 0
        %v1097 = vsel %vm317, %v1072, 0
        %v1100 = vsel %vm317, %v1073, 0
        %v1103 = vsel %vm317, %v1074, 0
        %v1106 = vsel %vm317, %v1075, 0
        %v1109 = vsel %vm317, %v1076, 0
        %v1112 = vsel %vm317, %v1077, 0
        %v1115 = vsel %vm317, %v1078, 0
        %v1118 = vsel %vm317, %v1079, 0
        %v1121 = vsel %vm317, %v1080, 0
        %v1124 = vsel %vm317, %v1081, 0
        %v1127 = vsel %vm317, %v1082, 0
        %v1130 = vsel %vm317, %v1083, 0
        %1132 = vmatprep.subr.bf16.mxu0 0
        %1133 = vmatpush1.bf16.msra.mxu0 %v1091
        %1134 = vmatprep.subr.bf16.mxu0 0
        %1135 = vmatpush1.bf16.msra.mxu0 0
        %1136 = vmatprep.subr.bf16.mxu0 0
        %1137 = vmatpush1.bf16.msra.mxu0 0
        %1138 = vmatprep.subr.bf16.mxu0 0
        %1139 = vmatpush1.bf16.msra.mxu0 0
        %1140 = vmatprep.subr.bf16.mxu0 0
        %1141 = vmatpush1.bf16.msra.mxu0 0
        %1142 = vmatprep.subr.bf16.mxu0 0
        %1143 = vmatpush1.bf16.msra.mxu0 0
        %1144 = vmatprep.subr.bf16.mxu0 0
        %1145 = vmatpush1.bf16.msra.mxu0 0
        %1146 = vmatprep.subr.bf16.mxu0 0
        %1147 = vmatpush1.bf16.msra.mxu0 0
        %1148 = vmatprep.subr.bf16.mxu0 0
        %1149 = vmatpush1.bf16.msra.mxu0 0
        %1150 = vmatprep.subr.bf16.mxu0 0
        %1151 = vmatpush1.bf16.msra.mxu0 0
        %1152 = vmatprep.subr.bf16.mxu0 0
        %1153 = vmatpush1.bf16.msra.mxu0 0
        %1154 = vmatprep.subr.bf16.mxu0 0
        %1155 = vmatpush1.bf16.msra.mxu0 0
        %1156 = vmatprep.subr.bf16.mxu0 0
        %1157 = vmatpush1.bf16.msra.mxu0 0
        %1158 = vmatprep.subr.bf16.mxu0 0
        %1159 = vmatpush1.bf16.msra.mxu0 0
        %1160 = vmatprep.subr.bf16.mxu0 0
        %1161 = vmatpush1.bf16.msra.mxu0 0
        %1162 = vmatprep.subr.bf16.mxu0 0
        %1163 = vmatpush1.bf16.msra.mxu0 0
        %1164 = vmatprep.mubr.bf16.mxu0 0
        %1165 = vmatmul.mubr.bf16.gmra.mrb[0].mxu0 %v1094
        %v1166 = vpop.f32.mrb[0].mxu0
        %v1167 = vadd.f32 0.0, %v1166
        %v1168 = vpop.f32.mrb[0].mxu0
        %v1169 = vpop.f32.mrb[0].mxu0
        %v1170 = vadd.f32 0.0, %v1169
        %v1171 = vpop.f32.mrb[0].mxu0
        %1172 = vmatprep.mubr.bf16.mxu0 0
        %1173 = vmatmul.mubr.bf16.gmra.mrb[0].mxu0 %v1097
        %v1174 = vpop.f32.mrb[0].mxu0
        %v1175 = vadd.f32 0.0, %v1174
        %v1176 = vpop.f32.mrb[0].mxu0
        %v1177 = vpop.f32.mrb[0].mxu0
        %v1178 = vadd.f32 0.0, %v1177
        %v1179 = vpop.f32.mrb[0].mxu0
        %1180 = vmatprep.mubr.bf16.mxu0 0
        %1181 = vmatmul.mubr.bf16.gmra.mrb[0].mxu0 %v1100
        %v1182 = vpop.f32.mrb[0].mxu0
        %v1183 = vadd.f32 0.0, %v1182
        %v1184 = vpop.f32.mrb[0].mxu0
        %v1185 = vpop.f32.mrb[0].mxu0
        %v1186 = vadd.f32 0.0, %v1185
        %v1187 = vpop.f32.mrb[0].mxu0
        %1188 = vmatprep.mubr.bf16.mxu0 0
        %1189 = vmatmul.mubr.bf16.gmra.mrb[0].mxu0 %v1103
        %v1190 = vpop.f32.mrb[0].mxu0
        %v1191 = vadd.f32 0.0, %v1190
        %v1192 = vpop.f32.mrb[0].mxu0
        %v1193 = vpop.f32.mrb[0].mxu0
        %v1194 = vadd.f32 0.0, %v1193
        %v1195 = vpop.f32.mrb[0].mxu0
        %1196 = vmatprep.mubr.bf16.mxu0 0
        %1197 = vmatmul.mubr.bf16.gmra.mrb[0].mxu0 %v1106
        %v1198 = vpop.f32.mrb[0].mxu0
        %v1199 = vadd.f32 0.0, %v1198
        %v1200 = vpop.f32.mrb[0].mxu0
        %v1201 = vpop.f32.mrb[0].mxu0
        %v1202 = vadd.f32 0.0, %v1201
        %v1203 = vpop.f32.mrb[0].mxu0
        %1204 = vmatprep.mubr.bf16.mxu0 0
        %1205 = vmatmul.mubr.bf16.gmra.mrb[0].mxu0 %v1109
        %v1206 = vpop.f32.mrb[0].mxu0
        %v1207 = vadd.f32 0.0, %v1206
        %v1208 = vpop.f32.mrb[0].mxu0
        %v1209 = vpop.f32.mrb[0].mxu0
        %v1210 = vadd.f32 0.0, %v1209
        %v1211 = vpop.f32.mrb[0].mxu0
        %1212 = vmatprep.mubr.bf16.mxu0 0
        %1213 = vmatmul.mubr.bf16.gmra.mrb[0].mxu0 %v1112
        %v1214 = vpop.f32.mrb[0].mxu0
        %v1215 = vadd.f32 0.0, %v1214
        %v1216 = vpop.f32.mrb[0].mxu0
        %v1217 = vpop.f32.mrb[0].mxu0
        %v1218 = vadd.f32 0.0, %v1217
        %v1219 = vpop.f32.mrb[0].mxu0
        %1220 = vmatprep.mubr.bf16.mxu0 0
        %1221 = vmatmul.mubr.bf16.gmra.mrb[0].mxu0 %v1115
        %v1222 = vpop.f32.mrb[0].mxu0
        %v1223 = vadd.f32 0.0, %v1222
        %v1224 = vpop.f32.mrb[0].mxu0
        %v1225 = vpop.f32.mrb[0].mxu0
        %v1226 = vadd.f32 0.0, %v1225
        %v1227 = vpop.f32.mrb[0].mxu0
        %1228 = vmatprep.mubr.bf16.mxu0 0
        %1229 = vmatmul.mubr.bf16.gmra.mrb[0].mxu0 %v1118
        %v1230 = vpop.f32.mrb[0].mxu0
        %v1231 = vadd.f32 0.0, %v1230
        %v1232 = vpop.f32.mrb[0].mxu0
        %v1233 = vpop.f32.mrb[0].mxu0
        %v1234 = vadd.f32 0.0, %v1233
        %v1235 = vpop.f32.mrb[0].mxu0
        %1236 = vmatprep.mubr.bf16.mxu0 0
        %1237 = vmatmul.mubr.bf16.gmra.mrb[0].mxu0 %v1121
        %v1238 = vpop.f32.mrb[0].mxu0
        %v1239 = vadd.f32 0.0, %v1238
        %v1240 = vpop.f32.mrb[0].mxu0
        %v1241 = vpop.f32.mrb[0].mxu0
        %v1242 = vadd.f32 0.0, %v1241
        %v1243 = vpop.f32.mrb[0].mxu0
        %1244 = vmatprep.mubr.bf16.mxu0 0
        %1245 = vmatmul.mubr.bf16.gmra.mrb[0].mxu0 %v1124
        %v1246 = vpop.f32.mrb[0].mxu0
        %v1247 = vadd.f32 0.0, %v1246
        %v1248 = vpop.f32.mrb[0].mxu0
        %v1249 = vpop.f32.mrb[0].mxu0
        %v1250 = vadd.f32 0.0, %v1249
        %v1251 = vpop.f32.mrb[0].mxu0
        %1252 = vmatprep.mubr.bf16.mxu0 0
        %1253 = vmatmul.mubr.bf16.gmra.mrb[0].mxu0 %v1127
        %v1254 = vpop.f32.mrb[0].mxu0
        %v1255 = vadd.f32 0.0, %v1254
        %v1256 = vpop.f32.mrb[0].mxu0
        %v1257 = vpop.f32.mrb[0].mxu0
        %v1258 = vadd.f32 0.0, %v1257
        %v1259 = vpop.f32.mrb[0].mxu0
        %1260 = vmatprep.mubr.bf16.mxu0 0
        %1261 = vmatmul.mubr.bf16.gmra.mrb[0].mxu0 %v1130
        %v1262 = vpop.f32.mrb[0].mxu0
        %v1263 = vadd.f32 0.0, %v1262
        %v1264 = vpop.f32.mrb[0].mxu0
        %v1265 = vpop.f32.mrb[0].mxu0
        %v1266 = vpop.f32.mrb[0].mxu0
        %1267 = vdwg.mxu0
        %v1268 = vadd.f32 %v945, %v1167
        %v1269 = vadd.f32 %v948, %v1170
        %v1270 = vadd.f32 %v953, %v1175
        %v1271 = vadd.f32 %v956, %v1178
        %v1272 = vadd.f32 %v961, %v1183
        %v1273 = vadd.f32 %v964, %v1186
        %v1274 = vadd.f32 %v969, %v1191
        %v1275 = vadd.f32 %v972, %v1194
        %v1276 = vadd.f32 %v977, %v1199
        %v1277 = vadd.f32 %v980, %v1202
        %v1278 = vadd.f32 %v985, %v1207
        %v1279 = vadd.f32 %v988, %v1210
        %v1280 = vadd.f32 %v993, %v1215
        %v1281 = vadd.f32 %v996, %v1218
        %v1282 = vadd.f32 %v1001, %v1223
        %v1283 = vadd.f32 %v1004, %v1226
        %v1284 = vadd.f32 %v1009, %v1231
        %v1285 = vadd.f32 %v1012, %v1234
        %v1286 = vadd.f32 %v1017, %v1239
        %v1287 = vadd.f32 %v1020, %v1242
        %v1288 = vadd.f32 %v1025, %v1247
        %v1289 = vadd.f32 %v1028, %v1250
        %v1290 = vadd.f32 %v1033, %v1255
        %v1291 = vadd.f32 %v1036, %v1258
        %v1292 = vadd.f32 %v1041, %v1263
        %v1293 = vld [vmem:[#allocation2 + $0x5] sm:$0xff]
        %v1294 = vld [vmem:[#allocation2 + $0xd] sm:$0xff]
        %v1295 = vld [vmem:[#allocation2 + $0x15] sm:$0xff]
        %v1296 = vld [vmem:[#allocation2 + $0x1d] sm:$0xff]
        %v1297 = vld [vmem:[#allocation2 + $0x25] sm:$0xff]
        %v1298 = vld [vmem:[#allocation2 + $0x2d] sm:$0xff]
        %v1299 = vld [vmem:[#allocation2 + $0x35] sm:$0xff]
        %v1300 = vld [vmem:[#allocation2 + $0x3d] sm:$0xff]
        %v1301 = vld [vmem:[#allocation2 + $0x45] sm:$0xff]
        %v1302 = vld [vmem:[#allocation2 + $0x4d] sm:$0xff]
        %v1303 = vld [vmem:[#allocation2 + $0x55] sm:$0xff]
        %v1304 = vld [vmem:[#allocation2 + $0x5d] sm:$0xff]
        %v1305 = vld [vmem:[#allocation2 + $0x65] sm:$0xff]
        %v1306 = vld [vmem:[#allocation2 + $0x6d] sm:$0xff]
        %v1307 = vld [vmem:[#allocation2 + $0x75] sm:$0xff]
        %v1308 = vld [vmem:[#allocation2 + $0x7d] sm:$0xff]
        %v1309 = vld [vmem:[#allocation2 + $0x85] sm:$0xff]
        %v1310 = vld [vmem:[#allocation2 + $0x8d] sm:$0xff]
        %v1311 = vld [vmem:[#allocation2 + $0x95] sm:$0xff]
        %v1312 = vld [vmem:[#allocation2 + $0x9d] sm:$0xff]
        %v1313 = vld [vmem:[#allocation2 + $0xa5] sm:$0xff]
        %v1314 = vld [vmem:[#allocation2 + $0xad] sm:$0xff]
        %v1315 = vld [vmem:[#allocation2 + $0xb5] sm:$0xff]
        %v1316 = vld [vmem:[#allocation2 + $0xbd] sm:$0xff]
        %v1317 = vld [vmem:[#allocation2 + $0xc5] sm:$0xff]
        %v1318 = vpack.c.bf16 %v1294, %v1293
        %v1319 = vpack.c.bf16 %v1296, %v1295
        %v1320 = vpack.c.bf16 %v1298, %v1297
        %v1321 = vpack.c.bf16 %v1300, %v1299
        %v1322 = vpack.c.bf16 %v1302, %v1301
        %v1323 = vpack.c.bf16 %v1304, %v1303
        %v1324 = vpack.c.bf16 %v1306, %v1305
        %v1325 = vpack.c.bf16 %v1308, %v1307
        %v1326 = vpack.c.bf16 %v1310, %v1309
        %v1327 = vpack.c.bf16 %v1312, %v1311
        %v1328 = vpack.c.bf16 %v1314, %v1313
        %v1329 = vpack.c.bf16 %v1316, %v1315
        %v1330 = vpack.c.bf16 %v1317, %v1317
        %s1331 = scalar_lea.vmem %s1, 24
        %v1332 = vld [vmem:[%s1331] sm:$0xf]
        %v1333 = vld [vmem:[%s1331 + $0x4] sm:$0xf]
        %v1336 = vunpack.c.l.b16 %v1332
        %v1337 = vunpack.c.l.b16 %v1333
        %v1338 = vpack.c.b16 %v1337, %v1336
        %v1341 = vsel %vm317, %v1318, 0
        %v1344 = vsel %vm317, %v1319, 0
        %v1347 = vsel %vm317, %v1320, 0
        %v1350 = vsel %vm317, %v1321, 0
        %v1353 = vsel %vm317, %v1322, 0
        %v1356 = vsel %vm317, %v1323, 0
        %v1359 = vsel %vm317, %v1324, 0
        %v1362 = vsel %vm317, %v1325, 0
        %v1365 = vsel %vm317, %v1326, 0
        %v1368 = vsel %vm317, %v1327, 0
        %v1371 = vsel %vm317, %v1328, 0
        %v1374 = vsel %vm317, %v1329, 0
        %v1377 = vsel %vm317, %v1330, 0
        %1379 = vmatprep.subr.bf16.mxu0 0
        %1380 = vmatpush1.bf16.msra.mxu0 %v1338
        %1381 = vmatprep.subr.bf16.mxu0 0
        %1382 = vmatpush1.bf16.msra.mxu0 0
        %1383 = vmatprep.subr.bf16.mxu0 0
        %1384 = vmatpush1.bf16.msra.mxu0 0
        %1385 = vmatprep.subr.bf16.mxu0 0
        %1386 = vmatpush1.bf16.msra.mxu0 0
        %1387 = vmatprep.subr.bf16.mxu0 0
        %1388 = vmatpush1.bf16.msra.mxu0 0
        %1389 = vmatprep.subr.bf16.mxu0 0
        %1390 = vmatpush1.bf16.msra.mxu0 0
        %1391 = vmatprep.subr.bf16.mxu0 0
        %1392 = vmatpush1.bf16.msra.mxu0 0
        %1393 = vmatprep.subr.bf16.mxu0 0
        %1394 = vmatpush1.bf16.msra.mxu0 0
        %1395 = vmatprep.subr.bf16.mxu0 0
        %1396 = vmatpush1.bf16.msra.mxu0 0
        %1397 = vmatprep.subr.bf16.mxu0 0
        %1398 = vmatpush1.bf16.msra.mxu0 0
        %1399 = vmatprep.subr.bf16.mxu0 0
        %1400 = vmatpush1.bf16.msra.mxu0 0
        %1401 = vmatprep.subr.bf16.mxu0 0
        %1402 = vmatpush1.bf16.msra.mxu0 0
        %1403 = vmatprep.subr.bf16.mxu0 0
        %1404 = vmatpush1.bf16.msra.mxu0 0
        %1405 = vmatprep.subr.bf16.mxu0 0
        %1406 = vmatpush1.bf16.msra.mxu0 0
        %1407 = vmatprep.subr.bf16.mxu0 0
        %1408 = vmatpush1.bf16.msra.mxu0 0
        %1409 = vmatprep.subr.bf16.mxu0 0
        %1410 = vmatpush1.bf16.msra.mxu0 0
        %1411 = vmatprep.mubr.bf16.mxu0 0
        %1412 = vmatmul.mubr.bf16.gmra.mrb[0].mxu0 %v1341
        %v1413 = vpop.f32.mrb[0].mxu0
        %v1414 = vadd.f32 0.0, %v1413
        %v1415 = vpop.f32.mrb[0].mxu0
        %v1416 = vpop.f32.mrb[0].mxu0
        %v1417 = vadd.f32 0.0, %v1416
        %v1418 = vpop.f32.mrb[0].mxu0
        %1419 = vmatprep.mubr.bf16.mxu0 0
        %1420 = vmatmul.mubr.bf16.gmra.mrb[0].mxu0 %v1344
        %v1421 = vpop.f32.mrb[0].mxu0
        %v1422 = vadd.f32 0.0, %v1421
        %v1423 = vpop.f32.mrb[0].mxu0
        %v1424 = vpop.f32.mrb[0].mxu0
        %v1425 = vadd.f32 0.0, %v1424
        %v1426 = vpop.f32.mrb[0].mxu0
        %1427 = vmatprep.mubr.bf16.mxu0 0
        %1428 = vmatmul.mubr.bf16.gmra.mrb[0].mxu0 %v1347
        %v1429 = vpop.f32.mrb[0].mxu0
        %v1430 = vadd.f32 0.0, %v1429
        %v1431 = vpop.f32.mrb[0].mxu0
        %v1432 = vpop.f32.mrb[0].mxu0
        %v1433 = vadd.f32 0.0, %v1432
        %v1434 = vpop.f32.mrb[0].mxu0
        %1435 = vmatprep.mubr.bf16.mxu0 0
        %1436 = vmatmul.mubr.bf16.gmra.mrb[0].mxu0 %v1350
        %v1437 = vpop.f32.mrb[0].mxu0
        %v1438 = vadd.f32 0.0, %v1437
        %v1439 = vpop.f32.mrb[0].mxu0
        %v1440 = vpop.f32.mrb[0].mxu0
        %v1441 = vadd.f32 0.0, %v1440
        %v1442 = vpop.f32.mrb[0].mxu0
        %1443 = vmatprep.mubr.bf16.mxu0 0
        %1444 = vmatmul.mubr.bf16.gmra.mrb[0].mxu0 %v1353
        %v1445 = vpop.f32.mrb[0].mxu0
        %v1446 = vadd.f32 0.0, %v1445
        %v1447 = vpop.f32.mrb[0].mxu0
        %v1448 = vpop.f32.mrb[0].mxu0
        %v1449 = vadd.f32 0.0, %v1448
        %v1450 = vpop.f32.mrb[0].mxu0
        %1451 = vmatprep.mubr.bf16.mxu0 0
        %1452 = vmatmul.mubr.bf16.gmra.mrb[0].mxu0 %v1356
        %v1453 = vpop.f32.mrb[0].mxu0
        %v1454 = vadd.f32 0.0, %v1453
        %v1455 = vpop.f32.mrb[0].mxu0
        %v1456 = vpop.f32.mrb[0].mxu0
        %v1457 = vadd.f32 0.0, %v1456
        %v1458 = vpop.f32.mrb[0].mxu0
        %1459 = vmatprep.mubr.bf16.mxu0 0
        %1460 = vmatmul.mubr.bf16.gmra.mrb[0].mxu0 %v1359
        %v1461 = vpop.f32.mrb[0].mxu0
        %v1462 = vadd.f32 0.0, %v1461
        %v1463 = vpop.f32.mrb[0].mxu0
        %v1464 = vpop.f32.mrb[0].mxu0
        %v1465 = vadd.f32 0.0, %v1464
        %v1466 = vpop.f32.mrb[0].mxu0
        %1467 = vmatprep.mubr.bf16.mxu0 0
        %1468 = vmatmul.mubr.bf16.gmra.mrb[0].mxu0 %v1362
        %v1469 = vpop.f32.mrb[0].mxu0
        %v1470 = vadd.f32 0.0, %v1469
        %v1471 = vpop.f32.mrb[0].mxu0
        %v1472 = vpop.f32.mrb[0].mxu0
        %v1473 = vadd.f32 0.0, %v1472
        %v1474 = vpop.f32.mrb[0].mxu0
        %1475 = vmatprep.mubr.bf16.mxu0 0
        %1476 = vmatmul.mubr.bf16.gmra.mrb[0].mxu0 %v1365
        %v1477 = vpop.f32.mrb[0].mxu0
        %v1478 = vadd.f32 0.0, %v1477
        %v1479 = vpop.f32.mrb[0].mxu0
        %v1480 = vpop.f32.mrb[0].mxu0
        %v1481 = vadd.f32 0.0, %v1480
        %v1482 = vpop.f32.mrb[0].mxu0
        %1483 = vmatprep.mubr.bf16.mxu0 0
        %1484 = vmatmul.mubr.bf16.gmra.mrb[0].mxu0 %v1368
        %v1485 = vpop.f32.mrb[0].mxu0
        %v1486 = vadd.f32 0.0, %v1485
        %v1487 = vpop.f32.mrb[0].mxu0
        %v1488 = vpop.f32.mrb[0].mxu0
        %v1489 = vadd.f32 0.0, %v1488
        %v1490 = vpop.f32.mrb[0].mxu0
        %1491 = vmatprep.mubr.bf16.mxu0 0
        %1492 = vmatmul.mubr.bf16.gmra.mrb[0].mxu0 %v1371
        %v1493 = vpop.f32.mrb[0].mxu0
        %v1494 = vadd.f32 0.0, %v1493
        %v1495 = vpop.f32.mrb[0].mxu0
        %v1496 = vpop.f32.mrb[0].mxu0
        %v1497 = vadd.f32 0.0, %v1496
        %v1498 = vpop.f32.mrb[0].mxu0
        %1499 = vmatprep.mubr.bf16.mxu0 0
        %1500 = vmatmul.mubr.bf16.gmra.mrb[0].mxu0 %v1374
        %v1501 = vpop.f32.mrb[0].mxu0
        %v1502 = vadd.f32 0.0, %v1501
        %v1503 = vpop.f32.mrb[0].mxu0
        %v1504 = vpop.f32.mrb[0].mxu0
        %v1505 = vadd.f32 0.0, %v1504
        %v1506 = vpop.f32.mrb[0].mxu0
        %1507 = vmatprep.mubr.bf16.mxu0 0
        %1508 = vmatmul.mubr.bf16.gmra.mrb[0].mxu0 %v1377
        %v1509 = vpop.f32.mrb[0].mxu0
        %v1510 = vadd.f32 0.0, %v1509
        %v1511 = vpop.f32.mrb[0].mxu0
        %v1512 = vpop.f32.mrb[0].mxu0
        %v1513 = vpop.f32.mrb[0].mxu0
        %1514 = vdwg.mxu0
        %v1515 = vadd.f32 %v1268, %v1414
        %v1516 = vadd.f32 %v1269, %v1417
        %v1517 = vadd.f32 %v1270, %v1422
        %v1518 = vadd.f32 %v1271, %v1425
        %v1519 = vadd.f32 %v1272, %v1430
        %v1520 = vadd.f32 %v1273, %v1433
        %v1521 = vadd.f32 %v1274, %v1438
        %v1522 = vadd.f32 %v1275, %v1441
        %v1523 = vadd.f32 %v1276, %v1446
        %v1524 = vadd.f32 %v1277, %v1449
        %v1525 = vadd.f32 %v1278, %v1454
        %v1526 = vadd.f32 %v1279, %v1457
        %v1527 = vadd.f32 %v1280, %v1462
        %v1528 = vadd.f32 %v1281, %v1465
        %v1529 = vadd.f32 %v1282, %v1470
        %v1530 = vadd.f32 %v1283, %v1473
        %v1531 = vadd.f32 %v1284, %v1478
        %v1532 = vadd.f32 %v1285, %v1481
        %v1533 = vadd.f32 %v1286, %v1486
        %v1534 = vadd.f32 %v1287, %v1489
        %v1535 = vadd.f32 %v1288, %v1494
        %v1536 = vadd.f32 %v1289, %v1497
        %v1537 = vadd.f32 %v1290, %v1502
        %v1538 = vadd.f32 %v1291, %v1505
        %v1539 = vadd.f32 %v1292, %v1510
        %v1540 = vld [vmem:[#allocation2 + $0x6] sm:$0xff]
        %v1541 = vld [vmem:[#allocation2 + $0xe] sm:$0xff]
        %v1542 = vld [vmem:[#allocation2 + $0x16] sm:$0xff]
        %v1543 = vld [vmem:[#allocation2 + $0x1e] sm:$0xff]
        %v1544 = vld [vmem:[#allocation2 + $0x26] sm:$0xff]
        %v1545 = vld [vmem:[#allocation2 + $0x2e] sm:$0xff]
        %v1546 = vld [vmem:[#allocation2 + $0x36] sm:$0xff]
        %v1547 = vld [vmem:[#allocation2 + $0x3e] sm:$0xff]
        %v1548 = vld [vmem:[#allocation2 + $0x46] sm:$0xff]
        %v1549 = vld [vmem:[#allocation2 + $0x4e] sm:$0xff]
        %v1550 = vld [vmem:[#allocation2 + $0x56] sm:$0xff]
        %v1551 = vld [vmem:[#allocation2 + $0x5e] sm:$0xff]
        %v1552 = vld [vmem:[#allocation2 + $0x66] sm:$0xff]
        %v1553 = vld [vmem:[#allocation2 + $0x6e] sm:$0xff]
        %v1554 = vld [vmem:[#allocation2 + $0x76] sm:$0xff]
        %v1555 = vld [vmem:[#allocation2 + $0x7e] sm:$0xff]
        %v1556 = vld [vmem:[#allocation2 + $0x86] sm:$0xff]
        %v1557 = vld [vmem:[#allocation2 + $0x8e] sm:$0xff]
        %v1558 = vld [vmem:[#allocation2 + $0x96] sm:$0xff]
        %v1559 = vld [vmem:[#allocation2 + $0x9e] sm:$0xff]
        %v1560 = vld [vmem:[#allocation2 + $0xa6] sm:$0xff]
        %v1561 = vld [vmem:[#allocation2 + $0xae] sm:$0xff]
        %v1562 = vld [vmem:[#allocation2 + $0xb6] sm:$0xff]
        %v1563 = vld [vmem:[#allocation2 + $0xbe] sm:$0xff]
        %v1564 = vld [vmem:[#allocation2 + $0xc6] sm:$0xff]
        %v1565 = vpack.c.bf16 %v1541, %v1540
        %v1566 = vpack.c.bf16 %v1543, %v1542
        %v1567 = vpack.c.bf16 %v1545, %v1544
        %v1568 = vpack.c.bf16 %v1547, %v1546
        %v1569 = vpack.c.bf16 %v1549, %v1548
        %v1570 = vpack.c.bf16 %v1551, %v1550
        %v1571 = vpack.c.bf16 %v1553, %v1552
        %v1572 = vpack.c.bf16 %v1555, %v1554
        %v1573 = vpack.c.bf16 %v1557, %v1556
        %v1574 = vpack.c.bf16 %v1559, %v1558
        %v1575 = vpack.c.bf16 %v1561, %v1560
        %v1576 = vpack.c.bf16 %v1563, %v1562
        %v1577 = vpack.c.bf16 %v1564, %v1564
        %s1578 = scalar_lea.vmem %s1, 32
        %v1579 = vld [vmem:[%s1578] sm:$0xf]
        %v1580 = vld [vmem:[%s1578 + $0x4] sm:$0xf]
        %v1583 = vunpack.c.l.b16 %v1579
        %v1584 = vunpack.c.l.b16 %v1580
        %v1585 = vpack.c.b16 %v1584, %v1583
        %v1588 = vsel %vm317, %v1565, 0
        %v1591 = vsel %vm317, %v1566, 0
        %v1594 = vsel %vm317, %v1567, 0
        %v1597 = vsel %vm317, %v1568, 0
        %v1600 = vsel %vm317, %v1569, 0
        %v1603 = vsel %vm317, %v1570, 0
        %v1606 = vsel %vm317, %v1571, 0
        %v1609 = vsel %vm317, %v1572, 0
        %v1612 = vsel %vm317, %v1573, 0
        %v1615 = vsel %vm317, %v1574, 0
        %v1618 = vsel %vm317, %v1575, 0
        %v1621 = vsel %vm317, %v1576, 0
        %v1624 = vsel %vm317, %v1577, 0
        %1626 = vmatprep.subr.bf16.mxu0 0
        %1627 = vmatpush1.bf16.msra.mxu0 %v1585
        %1628 = vmatprep.subr.bf16.mxu0 0
        %1629 = vmatpush1.bf16.msra.mxu0 0
        %1630 = vmatprep.subr.bf16.mxu0 0
        %1631 = vmatpush1.bf16.msra.mxu0 0
        %1632 = vmatprep.subr.bf16.mxu0 0
        %1633 = vmatpush1.bf16.msra.mxu0 0
        %1634 = vmatprep.subr.bf16.mxu0 0
        %1635 = vmatpush1.bf16.msra.mxu0 0
        %1636 = vmatprep.subr.bf16.mxu0 0
        %1637 = vmatpush1.bf16.msra.mxu0 0
        %1638 = vmatprep.subr.bf16.mxu0 0
        %1639 = vmatpush1.bf16.msra.mxu0 0
        %1640 = vmatprep.subr.bf16.mxu0 0
        %1641 = vmatpush1.bf16.msra.mxu0 0
        %1642 = vmatprep.subr.bf16.mxu0 0
        %1643 = vmatpush1.bf16.msra.mxu0 0
        %1644 = vmatprep.subr.bf16.mxu0 0
        %1645 = vmatpush1.bf16.msra.mxu0 0
        %1646 = vmatprep.subr.bf16.mxu0 0
        %1647 = vmatpush1.bf16.msra.mxu0 0
        %1648 = vmatprep.subr.bf16.mxu0 0
        %1649 = vmatpush1.bf16.msra.mxu0 0
        %1650 = vmatprep.subr.bf16.mxu0 0
        %1651 = vmatpush1.bf16.msra.mxu0 0
        %1652 = vmatprep.subr.bf16.mxu0 0
        %1653 = vmatpush1.bf16.msra.mxu0 0
        %1654 = vmatprep.subr.bf16.mxu0 0
        %1655 = vmatpush1.bf16.msra.mxu0 0
        %1656 = vmatprep.subr.bf16.mxu0 0
        %1657 = vmatpush1.bf16.msra.mxu0 0
        %1658 = vmatprep.mubr.bf16.mxu0 0
        %1659 = vmatmul.mubr.bf16.gmra.mrb[0].mxu0 %v1588
        %v1660 = vpop.f32.mrb[0].mxu0
        %v1661 = vadd.f32 0.0, %v1660
        %v1662 = vpop.f32.mrb[0].mxu0
        %v1663 = vpop.f32.mrb[0].mxu0
        %v1664 = vadd.f32 0.0, %v1663
        %v1665 = vpop.f32.mrb[0].mxu0
        %1666 = vmatprep.mubr.bf16.mxu0 0
        %1667 = vmatmul.mubr.bf16.gmra.mrb[0].mxu0 %v1591
        %v1668 = vpop.f32.mrb[0].mxu0
        %v1669 = vadd.f32 0.0, %v1668
        %v1670 = vpop.f32.mrb[0].mxu0
        %v1671 = vpop.f32.mrb[0].mxu0
        %v1672 = vadd.f32 0.0, %v1671
        %v1673 = vpop.f32.mrb[0].mxu0
        %1674 = vmatprep.mubr.bf16.mxu0 0
        %1675 = vmatmul.mubr.bf16.gmra.mrb[0].mxu0 %v1594
        %v1676 = vpop.f32.mrb[0].mxu0
        %v1677 = vadd.f32 0.0, %v1676
        %v1678 = vpop.f32.mrb[0].mxu0
        %v1679 = vpop.f32.mrb[0].mxu0
        %v1680 = vadd.f32 0.0, %v1679
        %v1681 = vpop.f32.mrb[0].mxu0
        %1682 = vmatprep.mubr.bf16.mxu0 0
        %1683 = vmatmul.mubr.bf16.gmra.mrb[0].mxu0 %v1597
        %v1684 = vpop.f32.mrb[0].mxu0
        %v1685 = vadd.f32 0.0, %v1684
        %v1686 = vpop.f32.mrb[0].mxu0
        %v1687 = vpop.f32.mrb[0].mxu0
        %v1688 = vadd.f32 0.0, %v1687
        %v1689 = vpop.f32.mrb[0].mxu0
        %1690 = vmatprep.mubr.bf16.mxu0 0
        %1691 = vmatmul.mubr.bf16.gmra.mrb[0].mxu0 %v1600
        %v1692 = vpop.f32.mrb[0].mxu0
        %v1693 = vadd.f32 0.0, %v1692
        %v1694 = vpop.f32.mrb[0].mxu0
        %v1695 = vpop.f32.mrb[0].mxu0
        %v1696 = vadd.f32 0.0, %v1695
        %v1697 = vpop.f32.mrb[0].mxu0
        %1698 = vmatprep.mubr.bf16.mxu0 0
        %1699 = vmatmul.mubr.bf16.gmra.mrb[0].mxu0 %v1603
        %v1700 = vpop.f32.mrb[0].mxu0
        %v1701 = vadd.f32 0.0, %v1700
        %v1702 = vpop.f32.mrb[0].mxu0
        %v1703 = vpop.f32.mrb[0].mxu0
        %v1704 = vadd.f32 0.0, %v1703
        %v1705 = vpop.f32.mrb[0].mxu0
        %1706 = vmatprep.mubr.bf16.mxu0 0
        %1707 = vmatmul.mubr.bf16.gmra.mrb[0].mxu0 %v1606
        %v1708 = vpop.f32.mrb[0].mxu0
        %v1709 = vadd.f32 0.0, %v1708
        %v1710 = vpop.f32.mrb[0].mxu0
        %v1711 = vpop.f32.mrb[0].mxu0
        %v1712 = vadd.f32 0.0, %v1711
        %v1713 = vpop.f32.mrb[0].mxu0
        %1714 = vmatprep.mubr.bf16.mxu0 0
        %1715 = vmatmul.mubr.bf16.gmra.mrb[0].mxu0 %v1609
        %v1716 = vpop.f32.mrb[0].mxu0
        %v1717 = vadd.f32 0.0, %v1716
        %v1718 = vpop.f32.mrb[0].mxu0
        %v1719 = vpop.f32.mrb[0].mxu0
        %v1720 = vadd.f32 0.0, %v1719
        %v1721 = vpop.f32.mrb[0].mxu0
        %1722 = vmatprep.mubr.bf16.mxu0 0
        %1723 = vmatmul.mubr.bf16.gmra.mrb[0].mxu0 %v1612
        %v1724 = vpop.f32.mrb[0].mxu0
        %v1725 = vadd.f32 0.0, %v1724
        %v1726 = vpop.f32.mrb[0].mxu0
        %v1727 = vpop.f32.mrb[0].mxu0
        %v1728 = vadd.f32 0.0, %v1727
        %v1729 = vpop.f32.mrb[0].mxu0
        %1730 = vmatprep.mubr.bf16.mxu0 0
        %1731 = vmatmul.mubr.bf16.gmra.mrb[0].mxu0 %v1615
        %v1732 = vpop.f32.mrb[0].mxu0
        %v1733 = vadd.f32 0.0, %v1732
        %v1734 = vpop.f32.mrb[0].mxu0
        %v1735 = vpop.f32.mrb[0].mxu0
        %v1736 = vadd.f32 0.0, %v1735
        %v1737 = vpop.f32.mrb[0].mxu0
        %1738 = vmatprep.mubr.bf16.mxu0 0
        %1739 = vmatmul.mubr.bf16.gmra.mrb[0].mxu0 %v1618
        %v1740 = vpop.f32.mrb[0].mxu0
        %v1741 = vadd.f32 0.0, %v1740
        %v1742 = vpop.f32.mrb[0].mxu0
        %v1743 = vpop.f32.mrb[0].mxu0
        %v1744 = vadd.f32 0.0, %v1743
        %v1745 = vpop.f32.mrb[0].mxu0
        %1746 = vmatprep.mubr.bf16.mxu0 0
        %1747 = vmatmul.mubr.bf16.gmra.mrb[0].mxu0 %v1621
        %v1748 = vpop.f32.mrb[0].mxu0
        %v1749 = vadd.f32 0.0, %v1748
        %v1750 = vpop.f32.mrb[0].mxu0
        %v1751 = vpop.f32.mrb[0].mxu0
        %v1752 = vadd.f32 0.0, %v1751
        %v1753 = vpop.f32.mrb[0].mxu0
        %1754 = vmatprep.mubr.bf16.mxu0 0
        %1755 = vmatmul.mubr.bf16.gmra.mrb[0].mxu0 %v1624
        %v1756 = vpop.f32.mrb[0].mxu0
        %v1757 = vadd.f32 0.0, %v1756
        %v1758 = vpop.f32.mrb[0].mxu0
        %v1759 = vpop.f32.mrb[0].mxu0
        %v1760 = vpop.f32.mrb[0].mxu0
        %1761 = vdwg.mxu0
        %v1762 = vadd.f32 %v1515, %v1661
        %v1763 = vadd.f32 %v1516, %v1664
        %v1764 = vadd.f32 %v1517, %v1669
        %v1765 = vadd.f32 %v1518, %v1672
        %v1766 = vadd.f32 %v1519, %v1677
        %v1767 = vadd.f32 %v1520, %v1680
        %v1768 = vadd.f32 %v1521, %v1685
        %v1769 = vadd.f32 %v1522, %v1688
        %v1770 = vadd.f32 %v1523, %v1693
        %v1771 = vadd.f32 %v1524, %v1696
        %v1772 = vadd.f32 %v1525, %v1701
        %v1773 = vadd.f32 %v1526, %v1704
        %v1774 = vadd.f32 %v1527, %v1709
        %v1775 = vadd.f32 %v1528, %v1712
        %v1776 = vadd.f32 %v1529, %v1717
        %v1777 = vadd.f32 %v1530, %v1720
        %v1778 = vadd.f32 %v1531, %v1725
        %v1779 = vadd.f32 %v1532, %v1728
        %v1780 = vadd.f32 %v1533, %v1733
        %v1781 = vadd.f32 %v1534, %v1736
        %v1782 = vadd.f32 %v1535, %v1741
        %v1783 = vadd.f32 %v1536, %v1744
        %v1784 = vadd.f32 %v1537, %v1749
        %v1785 = vadd.f32 %v1538, %v1752
        %v1786 = vadd.f32 %v1539, %v1757
        %v1787 = vld [vmem:[#allocation2 + $0x7] sm:$0xff]
        %v1788 = vld [vmem:[#allocation2 + $0xf] sm:$0xff]
        %v1789 = vld [vmem:[#allocation2 + $0x17] sm:$0xff]
        %v1790 = vld [vmem:[#allocation2 + $0x1f] sm:$0xff]
        %v1791 = vld [vmem:[#allocation2 + $0x27] sm:$0xff]
        %v1792 = vld [vmem:[#allocation2 + $0x2f] sm:$0xff]
        %v1793 = vld [vmem:[#allocation2 + $0x37] sm:$0xff]
        %v1794 = vld [vmem:[#allocation2 + $0x3f] sm:$0xff]
        %v1795 = vld [vmem:[#allocation2 + $0x47] sm:$0xff]
        %v1796 = vld [vmem:[#allocation2 + $0x4f] sm:$0xff]
        %v1797 = vld [vmem:[#allocation2 + $0x57] sm:$0xff]
        %v1798 = vld [vmem:[#allocation2 + $0x5f] sm:$0xff]
        %v1799 = vld [vmem:[#allocation2 + $0x67] sm:$0xff]
        %v1800 = vld [vmem:[#allocation2 + $0x6f] sm:$0xff]
        %v1801 = vld [vmem:[#allocation2 + $0x77] sm:$0xff]
        %v1802 = vld [vmem:[#allocation2 + $0x7f] sm:$0xff]
        %v1803 = vld [vmem:[#allocation2 + $0x87] sm:$0xff]
        %v1804 = vld [vmem:[#allocation2 + $0x8f] sm:$0xff]
        %v1805 = vld [vmem:[#allocation2 + $0x97] sm:$0xff]
        %v1806 = vld [vmem:[#allocation2 + $0x9f] sm:$0xff]
        %v1807 = vld [vmem:[#allocation2 + $0xa7] sm:$0xff]
        %v1808 = vld [vmem:[#allocation2 + $0xaf] sm:$0xff]
        %v1809 = vld [vmem:[#allocation2 + $0xb7] sm:$0xff]
        %v1810 = vld [vmem:[#allocation2 + $0xbf] sm:$0xff]
        %v1811 = vld [vmem:[#allocation2 + $0xc7] sm:$0xff]
        %v1812 = vpack.c.bf16 %v1788, %v1787
        %v1813 = vpack.c.bf16 %v1790, %v1789
        %v1814 = vpack.c.bf16 %v1792, %v1791
        %v1815 = vpack.c.bf16 %v1794, %v1793
        %v1816 = vpack.c.bf16 %v1796, %v1795
        %v1817 = vpack.c.bf16 %v1798, %v1797
        %v1818 = vpack.c.bf16 %v1800, %v1799
        %v1819 = vpack.c.bf16 %v1802, %v1801
        %v1820 = vpack.c.bf16 %v1804, %v1803
        %v1821 = vpack.c.bf16 %v1806, %v1805
        %v1822 = vpack.c.bf16 %v1808, %v1807
        %v1823 = vpack.c.bf16 %v1810, %v1809
        %v1824 = vpack.c.bf16 %v1811, %v1811
        %s1825 = scalar_lea.vmem %s1, 40
        %v1826 = vld [vmem:[%s1825] sm:$0xf]
        %v1827 = vld [vmem:[%s1825 + $0x4] sm:$0xf]
        %v1830 = vunpack.c.l.b16 %v1826
        %v1831 = vunpack.c.l.b16 %v1827
        %v1832 = vpack.c.b16 %v1831, %v1830
        %v1835 = vsel %vm317, %v1812, 0
        %v1838 = vsel %vm317, %v1813, 0
        %v1841 = vsel %vm317, %v1814, 0
        %v1844 = vsel %vm317, %v1815, 0
        %v1847 = vsel %vm317, %v1816, 0
        %v1850 = vsel %vm317, %v1817, 0
        %v1853 = vsel %vm317, %v1818, 0
        %v1856 = vsel %vm317, %v1819, 0
        %v1859 = vsel %vm317, %v1820, 0
        %v1862 = vsel %vm317, %v1821, 0
        %v1865 = vsel %vm317, %v1822, 0
        %v1868 = vsel %vm317, %v1823, 0
        %v1871 = vsel %vm317, %v1824, 0
        %1873 = vmatprep.subr.bf16.mxu0 0
        %1874 = vmatpush1.bf16.msra.mxu0 %v1832
        %1875 = vmatprep.subr.bf16.mxu0 0
        %1876 = vmatpush1.bf16.msra.mxu0 0
        %1877 = vmatprep.subr.bf16.mxu0 0
        %1878 = vmatpush1.bf16.msra.mxu0 0
        %1879 = vmatprep.subr.bf16.mxu0 0
        %1880 = vmatpush1.bf16.msra.mxu0 0
        %1881 = vmatprep.subr.bf16.mxu0 0
        %1882 = vmatpush1.bf16.msra.mxu0 0
        %1883 = vmatprep.subr.bf16.mxu0 0
        %1884 = vmatpush1.bf16.msra.mxu0 0
        %1885 = vmatprep.subr.bf16.mxu0 0
        %1886 = vmatpush1.bf16.msra.mxu0 0
        %1887 = vmatprep.subr.bf16.mxu0 0
        %1888 = vmatpush1.bf16.msra.mxu0 0
        %1889 = vmatprep.subr.bf16.mxu0 0
        %1890 = vmatpush1.bf16.msra.mxu0 0
        %1891 = vmatprep.subr.bf16.mxu0 0
        %1892 = vmatpush1.bf16.msra.mxu0 0
        %1893 = vmatprep.subr.bf16.mxu0 0
        %1894 = vmatpush1.bf16.msra.mxu0 0
        %1895 = vmatprep.subr.bf16.mxu0 0
        %1896 = vmatpush1.bf16.msra.mxu0 0
        %1897 = vmatprep.subr.bf16.mxu0 0
        %1898 = vmatpush1.bf16.msra.mxu0 0
        %1899 = vmatprep.subr.bf16.mxu0 0
        %1900 = vmatpush1.bf16.msra.mxu0 0
        %1901 = vmatprep.subr.bf16.mxu0 0
        %1902 = vmatpush1.bf16.msra.mxu0 0
        %1903 = vmatprep.subr.bf16.mxu0 0
        %1904 = vmatpush1.bf16.msra.mxu0 0
        %1905 = vmatprep.mubr.bf16.mxu0 0
        %1906 = vmatmul.mubr.bf16.gmra.mrb[0].mxu0 %v1835
        %v1907 = vpop.f32.mrb[0].mxu0
        %v1908 = vadd.f32 0.0, %v1907
        %v1909 = vpop.f32.mrb[0].mxu0
        %v1910 = vpop.f32.mrb[0].mxu0
        %v1911 = vadd.f32 0.0, %v1910
        %v1912 = vpop.f32.mrb[0].mxu0
        %1913 = vmatprep.mubr.bf16.mxu0 0
        %1914 = vmatmul.mubr.bf16.gmra.mrb[0].mxu0 %v1838
        %v1915 = vpop.f32.mrb[0].mxu0
        %v1916 = vadd.f32 0.0, %v1915
        %v1917 = vpop.f32.mrb[0].mxu0
        %v1918 = vpop.f32.mrb[0].mxu0
        %v1919 = vadd.f32 0.0, %v1918
        %v1920 = vpop.f32.mrb[0].mxu0
        %1921 = vmatprep.mubr.bf16.mxu0 0
        %1922 = vmatmul.mubr.bf16.gmra.mrb[0].mxu0 %v1841
        %v1923 = vpop.f32.mrb[0].mxu0
        %v1924 = vadd.f32 0.0, %v1923
        %v1925 = vpop.f32.mrb[0].mxu0
        %v1926 = vpop.f32.mrb[0].mxu0
        %v1927 = vadd.f32 0.0, %v1926
        %v1928 = vpop.f32.mrb[0].mxu0
        %1929 = vmatprep.mubr.bf16.mxu0 0
        %1930 = vmatmul.mubr.bf16.gmra.mrb[0].mxu0 %v1844
        %v1931 = vpop.f32.mrb[0].mxu0
        %v1932 = vadd.f32 0.0, %v1931
        %v1933 = vpop.f32.mrb[0].mxu0
        %v1934 = vpop.f32.mrb[0].mxu0
        %v1935 = vadd.f32 0.0, %v1934
        %v1936 = vpop.f32.mrb[0].mxu0
        %1937 = vmatprep.mubr.bf16.mxu0 0
        %1938 = vmatmul.mubr.bf16.gmra.mrb[0].mxu0 %v1847
        %v1939 = vpop.f32.mrb[0].mxu0
        %v1940 = vadd.f32 0.0, %v1939
        %v1941 = vpop.f32.mrb[0].mxu0
        %v1942 = vpop.f32.mrb[0].mxu0
        %v1943 = vadd.f32 0.0, %v1942
        %v1944 = vpop.f32.mrb[0].mxu0
        %1945 = vmatprep.mubr.bf16.mxu0 0
        %1946 = vmatmul.mubr.bf16.gmra.mrb[0].mxu0 %v1850
        %v1947 = vpop.f32.mrb[0].mxu0
        %v1948 = vadd.f32 0.0, %v1947
        %v1949 = vpop.f32.mrb[0].mxu0
        %v1950 = vpop.f32.mrb[0].mxu0
        %v1951 = vadd.f32 0.0, %v1950
        %v1952 = vpop.f32.mrb[0].mxu0
        %1953 = vmatprep.mubr.bf16.mxu0 0
        %1954 = vmatmul.mubr.bf16.gmra.mrb[0].mxu0 %v1853
        %v1955 = vpop.f32.mrb[0].mxu0
        %v1956 = vadd.f32 0.0, %v1955
        %v1957 = vpop.f32.mrb[0].mxu0
        %v1958 = vpop.f32.mrb[0].mxu0
        %v1959 = vadd.f32 0.0, %v1958
        %v1960 = vpop.f32.mrb[0].mxu0
        %1961 = vmatprep.mubr.bf16.mxu0 0
        %1962 = vmatmul.mubr.bf16.gmra.mrb[0].mxu0 %v1856
        %v1963 = vpop.f32.mrb[0].mxu0
        %v1964 = vadd.f32 0.0, %v1963
        %v1965 = vpop.f32.mrb[0].mxu0
        %v1966 = vpop.f32.mrb[0].mxu0
        %v1967 = vadd.f32 0.0, %v1966
        %v1968 = vpop.f32.mrb[0].mxu0
        %1969 = vmatprep.mubr.bf16.mxu0 0
        %1970 = vmatmul.mubr.bf16.gmra.mrb[0].mxu0 %v1859
        %v1971 = vpop.f32.mrb[0].mxu0
        %v1972 = vadd.f32 0.0, %v1971
        %v1973 = vpop.f32.mrb[0].mxu0
        %v1974 = vpop.f32.mrb[0].mxu0
        %v1975 = vadd.f32 0.0, %v1974
        %v1976 = vpop.f32.mrb[0].mxu0
        %1977 = vmatprep.mubr.bf16.mxu0 0
        %1978 = vmatmul.mubr.bf16.gmra.mrb[0].mxu0 %v1862
        %v1979 = vpop.f32.mrb[0].mxu0
        %v1980 = vadd.f32 0.0, %v1979
        %v1981 = vpop.f32.mrb[0].mxu0
        %v1982 = vpop.f32.mrb[0].mxu0
        %v1983 = vadd.f32 0.0, %v1982
        %v1984 = vpop.f32.mrb[0].mxu0
        %1985 = vmatprep.mubr.bf16.mxu0 0
        %1986 = vmatmul.mubr.bf16.gmra.mrb[0].mxu0 %v1865
        %v1987 = vpop.f32.mrb[0].mxu0
        %v1988 = vadd.f32 0.0, %v1987
        %v1989 = vpop.f32.mrb[0].mxu0
        %v1990 = vpop.f32.mrb[0].mxu0
        %v1991 = vadd.f32 0.0, %v1990
        %v1992 = vpop.f32.mrb[0].mxu0
        %1993 = vmatprep.mubr.bf16.mxu0 0
        %1994 = vmatmul.mubr.bf16.gmra.mrb[0].mxu0 %v1868
        %v1995 = vpop.f32.mrb[0].mxu0
        %v1996 = vadd.f32 0.0, %v1995
        %v1997 = vpop.f32.mrb[0].mxu0
        %v1998 = vpop.f32.mrb[0].mxu0
        %v1999 = vadd.f32 0.0, %v1998
        %v2000 = vpop.f32.mrb[0].mxu0
        %2001 = vmatprep.mubr.bf16.mxu0 0
        %2002 = vmatmul.mubr.bf16.gmra.mrb[0].mxu0 %v1871
        %v2003 = vpop.f32.mrb[0].mxu0
        %v2004 = vadd.f32 0.0, %v2003
        %v2005 = vpop.f32.mrb[0].mxu0
        %v2006 = vpop.f32.mrb[0].mxu0
        %v2007 = vpop.f32.mrb[0].mxu0
        %2008 = vdwg.mxu0
        %v2009 = vadd.f32 %v1762, %v1908
        %v2010 = vadd.f32 %v1763, %v1911
        %v2011 = vadd.f32 %v1764, %v1916
        %v2012 = vadd.f32 %v1765, %v1919
        %v2013 = vadd.f32 %v1766, %v1924
        %v2014 = vadd.f32 %v1767, %v1927
        %v2015 = vadd.f32 %v1768, %v1932
        %v2016 = vadd.f32 %v1769, %v1935
        %v2017 = vadd.f32 %v1770, %v1940
        %v2018 = vadd.f32 %v1771, %v1943
        %v2019 = vadd.f32 %v1772, %v1948
        %v2020 = vadd.f32 %v1773, %v1951
        %v2021 = vadd.f32 %v1774, %v1956
        %v2022 = vadd.f32 %v1775, %v1959
        %v2023 = vadd.f32 %v1776, %v1964
        %v2024 = vadd.f32 %v1777, %v1967
        %v2025 = vadd.f32 %v1778, %v1972
        %v2026 = vadd.f32 %v1779, %v1975
        %v2027 = vadd.f32 %v1780, %v1980
        %v2028 = vadd.f32 %v1781, %v1983
        %v2029 = vadd.f32 %v1782, %v1988
        %v2030 = vadd.f32 %v1783, %v1991
        %v2031 = vadd.f32 %v1784, %v1996
        %v2032 = vadd.f32 %v1785, %v1999
        %v2033 = vadd.f32 %v1786, %v2004
        %v2034 = vld [vmem:[#allocation2 + $0xa] sm:$0xff]
        %v2035 = vld [vmem:[#allocation2 + $0x12] sm:$0xff]
        %v2036 = vld [vmem:[#allocation2 + $0x1a] sm:$0xff]
        %v2037 = vld [vmem:[#allocation2 + $0x22] sm:$0xff]
        %v2038 = vld [vmem:[#allocation2 + $0x2a] sm:$0xff]
        %v2039 = vld [vmem:[#allocation2 + $0x32] sm:$0xff]
        %v2040 = vld [vmem:[#allocation2 + $0x3a] sm:$0xff]
        %v2041 = vld [vmem:[#allocation2 + $0x42] sm:$0xff]
        %v2042 = vld [vmem:[#allocation2 + $0x4a] sm:$0xff]
        %v2043 = vld [vmem:[#allocation2 + $0x52] sm:$0xff]
        %v2044 = vld [vmem:[#allocation2 + $0x5a] sm:$0xff]
        %v2045 = vld [vmem:[#allocation2 + $0x62] sm:$0xff]
        %v2046 = vld [vmem:[#allocation2 + $0x6a] sm:$0xff]
        %v2047 = vld [vmem:[#allocation2 + $0x72] sm:$0xff]
        %v2048 = vld [vmem:[#allocation2 + $0x7a] sm:$0xff]
        %v2049 = vld [vmem:[#allocation2 + $0x82] sm:$0xff]
        %v2050 = vld [vmem:[#allocation2 + $0x8a] sm:$0xff]
        %v2051 = vld [vmem:[#allocation2 + $0x92] sm:$0xff]
        %v2052 = vld [vmem:[#allocation2 + $0x9a] sm:$0xff]
        %v2053 = vld [vmem:[#allocation2 + $0xa2] sm:$0xff]
        %v2054 = vld [vmem:[#allocation2 + $0xaa] sm:$0xff]
        %v2055 = vld [vmem:[#allocation2 + $0xb2] sm:$0xff]
        %v2056 = vld [vmem:[#allocation2 + $0xba] sm:$0xff]
        %v2057 = vld [vmem:[#allocation2 + $0xc2] sm:$0xff]
        %v2058 = vld [vmem:[#allocation2 + $0xca] sm:$0xff]
        %v2059 = vpack.c.bf16 %v2035, %v2034
        %v2060 = vpack.c.bf16 %v2037, %v2036
        %v2061 = vpack.c.bf16 %v2039, %v2038
        %v2062 = vpack.c.bf16 %v2041, %v2040
        %v2063 = vpack.c.bf16 %v2043, %v2042
        %v2064 = vpack.c.bf16 %v2045, %v2044
        %v2065 = vpack.c.bf16 %v2047, %v2046
        %v2066 = vpack.c.bf16 %v2049, %v2048
        %v2067 = vpack.c.bf16 %v2051, %v2050
        %v2068 = vpack.c.bf16 %v2053, %v2052
        %v2069 = vpack.c.bf16 %v2055, %v2054
        %v2070 = vpack.c.bf16 %v2057, %v2056
        %v2071 = vpack.c.bf16 %v2058, %v2058
        %s2072 = scalar_lea.vmem %s1, 48
        %v2073 = vld [vmem:[%s2072] sm:$0xf]
        %v2074 = vld [vmem:[%s2072 + $0x4] sm:$0xf]
        %v2077 = vunpack.c.l.b16 %v2073
        %v2078 = vunpack.c.l.b16 %v2074
        %v2079 = vpack.c.b16 %v2078, %v2077
        %v2082 = vsel %vm317, %v2059, 0
        %v2085 = vsel %vm317, %v2060, 0
        %v2088 = vsel %vm317, %v2061, 0
        %v2091 = vsel %vm317, %v2062, 0
        %v2094 = vsel %vm317, %v2063, 0
        %v2097 = vsel %vm317, %v2064, 0
        %v2100 = vsel %vm317, %v2065, 0
        %v2103 = vsel %vm317, %v2066, 0
        %v2106 = vsel %vm317, %v2067, 0
        %v2109 = vsel %vm317, %v2068, 0
        %v2112 = vsel %vm317, %v2069, 0
        %v2115 = vsel %vm317, %v2070, 0
        %v2118 = vsel %vm317, %v2071, 0
        %2120 = vmatprep.subr.bf16.mxu0 0
        %2121 = vmatpush1.bf16.msra.mxu0 %v2079
        %2122 = vmatprep.subr.bf16.mxu0 0
        %2123 = vmatpush1.bf16.msra.mxu0 0
        %2124 = vmatprep.subr.bf16.mxu0 0
        %2125 = vmatpush1.bf16.msra.mxu0 0
        %2126 = vmatprep.subr.bf16.mxu0 0
        %2127 = vmatpush1.bf16.msra.mxu0 0
        %2128 = vmatprep.subr.bf16.mxu0 0
        %2129 = vmatpush1.bf16.msra.mxu0 0
        %2130 = vmatprep.subr.bf16.mxu0 0
        %2131 = vmatpush1.bf16.msra.mxu0 0
        %2132 = vmatprep.subr.bf16.mxu0 0
        %2133 = vmatpush1.bf16.msra.mxu0 0
        %2134 = vmatprep.subr.bf16.mxu0 0
        %2135 = vmatpush1.bf16.msra.mxu0 0
        %2136 = vmatprep.subr.bf16.mxu0 0
        %2137 = vmatpush1.bf16.msra.mxu0 0
        %2138 = vmatprep.subr.bf16.mxu0 0
        %2139 = vmatpush1.bf16.msra.mxu0 0
        %2140 = vmatprep.subr.bf16.mxu0 0
        %2141 = vmatpush1.bf16.msra.mxu0 0
        %2142 = vmatprep.subr.bf16.mxu0 0
        %2143 = vmatpush1.bf16.msra.mxu0 0
        %2144 = vmatprep.subr.bf16.mxu0 0
        %2145 = vmatpush1.bf16.msra.mxu0 0
        %2146 = vmatprep.subr.bf16.mxu0 0
        %2147 = vmatpush1.bf16.msra.mxu0 0
        %2148 = vmatprep.subr.bf16.mxu0 0
        %2149 = vmatpush1.bf16.msra.mxu0 0
        %2150 = vmatprep.subr.bf16.mxu0 0
        %2151 = vmatpush1.bf16.msra.mxu0 0
        %2152 = vmatprep.mubr.bf16.mxu0 0
        %2153 = vmatmul.mubr.bf16.gmra.mrb[0].mxu0 %v2082
        %v2154 = vpop.f32.mrb[0].mxu0
        %v2155 = vadd.f32 0.0, %v2154
        %v2156 = vpop.f32.mrb[0].mxu0
        %v2157 = vpop.f32.mrb[0].mxu0
        %v2158 = vadd.f32 0.0, %v2157
        %v2159 = vpop.f32.mrb[0].mxu0
        %2160 = vmatprep.mubr.bf16.mxu0 0
        %2161 = vmatmul.mubr.bf16.gmra.mrb[0].mxu0 %v2085
        %v2162 = vpop.f32.mrb[0].mxu0
        %v2163 = vadd.f32 0.0, %v2162
        %v2164 = vpop.f32.mrb[0].mxu0
        %v2165 = vpop.f32.mrb[0].mxu0
        %v2166 = vadd.f32 0.0, %v2165
        %v2167 = vpop.f32.mrb[0].mxu0
        %2168 = vmatprep.mubr.bf16.mxu0 0
        %2169 = vmatmul.mubr.bf16.gmra.mrb[0].mxu0 %v2088
        %v2170 = vpop.f32.mrb[0].mxu0
        %v2171 = vadd.f32 0.0, %v2170
        %v2172 = vpop.f32.mrb[0].mxu0
        %v2173 = vpop.f32.mrb[0].mxu0
        %v2174 = vadd.f32 0.0, %v2173
        %v2175 = vpop.f32.mrb[0].mxu0
        %2176 = vmatprep.mubr.bf16.mxu0 0
        %2177 = vmatmul.mubr.bf16.gmra.mrb[0].mxu0 %v2091
        %v2178 = vpop.f32.mrb[0].mxu0
        %v2179 = vadd.f32 0.0, %v2178
        %v2180 = vpop.f32.mrb[0].mxu0
        %v2181 = vpop.f32.mrb[0].mxu0
        %v2182 = vadd.f32 0.0, %v2181
        %v2183 = vpop.f32.mrb[0].mxu0
        %2184 = vmatprep.mubr.bf16.mxu0 0
        %2185 = vmatmul.mubr.bf16.gmra.mrb[0].mxu0 %v2094
        %v2186 = vpop.f32.mrb[0].mxu0
        %v2187 = vadd.f32 0.0, %v2186
        %v2188 = vpop.f32.mrb[0].mxu0
        %v2189 = vpop.f32.mrb[0].mxu0
        %v2190 = vadd.f32 0.0, %v2189
        %v2191 = vpop.f32.mrb[0].mxu0
        %2192 = vmatprep.mubr.bf16.mxu0 0
        %2193 = vmatmul.mubr.bf16.gmra.mrb[0].mxu0 %v2097
        %v2194 = vpop.f32.mrb[0].mxu0
        %v2195 = vadd.f32 0.0, %v2194
        %v2196 = vpop.f32.mrb[0].mxu0
        %v2197 = vpop.f32.mrb[0].mxu0
        %v2198 = vadd.f32 0.0, %v2197
        %v2199 = vpop.f32.mrb[0].mxu0
        %2200 = vmatprep.mubr.bf16.mxu0 0
        %2201 = vmatmul.mubr.bf16.gmra.mrb[0].mxu0 %v2100
        %v2202 = vpop.f32.mrb[0].mxu0
        %v2203 = vadd.f32 0.0, %v2202
        %v2204 = vpop.f32.mrb[0].mxu0
        %v2205 = vpop.f32.mrb[0].mxu0
        %v2206 = vadd.f32 0.0, %v2205
        %v2207 = vpop.f32.mrb[0].mxu0
        %2208 = vmatprep.mubr.bf16.mxu0 0
        %2209 = vmatmul.mubr.bf16.gmra.mrb[0].mxu0 %v2103
        %v2210 = vpop.f32.mrb[0].mxu0
        %v2211 = vadd.f32 0.0, %v2210
        %v2212 = vpop.f32.mrb[0].mxu0
        %v2213 = vpop.f32.mrb[0].mxu0
        %v2214 = vadd.f32 0.0, %v2213
        %v2215 = vpop.f32.mrb[0].mxu0
        %2216 = vmatprep.mubr.bf16.mxu0 0
        %2217 = vmatmul.mubr.bf16.gmra.mrb[0].mxu0 %v2106
        %v2218 = vpop.f32.mrb[0].mxu0
        %v2219 = vadd.f32 0.0, %v2218
        %v2220 = vpop.f32.mrb[0].mxu0
        %v2221 = vpop.f32.mrb[0].mxu0
        %v2222 = vadd.f32 0.0, %v2221
        %v2223 = vpop.f32.mrb[0].mxu0
        %2224 = vmatprep.mubr.bf16.mxu0 0
        %2225 = vmatmul.mubr.bf16.gmra.mrb[0].mxu0 %v2109
        %v2226 = vpop.f32.mrb[0].mxu0
        %v2227 = vadd.f32 0.0, %v2226
        %v2228 = vpop.f32.mrb[0].mxu0
        %v2229 = vpop.f32.mrb[0].mxu0
        %v2230 = vadd.f32 0.0, %v2229
        %v2231 = vpop.f32.mrb[0].mxu0
        %2232 = vmatprep.mubr.bf16.mxu0 0
        %2233 = vmatmul.mubr.bf16.gmra.mrb[0].mxu0 %v2112
        %v2234 = vpop.f32.mrb[0].mxu0
        %v2235 = vadd.f32 0.0, %v2234
        %v2236 = vpop.f32.mrb[0].mxu0
        %v2237 = vpop.f32.mrb[0].mxu0
        %v2238 = vadd.f32 0.0, %v2237
        %v2239 = vpop.f32.mrb[0].mxu0
        %2240 = vmatprep.mubr.bf16.mxu0 0
        %2241 = vmatmul.mubr.bf16.gmra.mrb[0].mxu0 %v2115
        %v2242 = vpop.f32.mrb[0].mxu0
        %v2243 = vadd.f32 0.0, %v2242
        %v2244 = vpop.f32.mrb[0].mxu0
        %v2245 = vpop.f32.mrb[0].mxu0
        %v2246 = vadd.f32 0.0, %v2245
        %v2247 = vpop.f32.mrb[0].mxu0
        %2248 = vmatprep.mubr.bf16.mxu0 0
        %2249 = vmatmul.mubr.bf16.gmra.mrb[0].mxu0 %v2118
        %v2250 = vpop.f32.mrb[0].mxu0
        %v2251 = vadd.f32 0.0, %v2250
        %v2252 = vpop.f32.mrb[0].mxu0
        %v2253 = vpop.f32.mrb[0].mxu0
        %v2254 = vpop.f32.mrb[0].mxu0
        %2255 = vdwg.mxu0
        %v2256 = vadd.f32 %v2009, %v2155
        %v2257 = vadd.f32 %v2010, %v2158
        %v2258 = vadd.f32 %v2011, %v2163
        %v2259 = vadd.f32 %v2012, %v2166
        %v2260 = vadd.f32 %v2013, %v2171
        %v2261 = vadd.f32 %v2014, %v2174
        %v2262 = vadd.f32 %v2015, %v2179
        %v2263 = vadd.f32 %v2016, %v2182
        %v2264 = vadd.f32 %v2017, %v2187
        %v2265 = vadd.f32 %v2018, %v2190
        %v2266 = vadd.f32 %v2019, %v2195
        %v2267 = vadd.f32 %v2020, %v2198
        %v2268 = vadd.f32 %v2021, %v2203
        %v2269 = vadd.f32 %v2022, %v2206
        %v2270 = vadd.f32 %v2023, %v2211
        %v2271 = vadd.f32 %v2024, %v2214
        %v2272 = vadd.f32 %v2025, %v2219
        %v2273 = vadd.f32 %v2026, %v2222
        %v2274 = vadd.f32 %v2027, %v2227
        %v2275 = vadd.f32 %v2028, %v2230
        %v2276 = vadd.f32 %v2029, %v2235
        %v2277 = vadd.f32 %v2030, %v2238
        %v2278 = vadd.f32 %v2031, %v2243
        %v2279 = vadd.f32 %v2032, %v2246
        %v2280 = vadd.f32 %v2033, %v2251
        %v2281 = vld [vmem:[#allocation2 + $0xb] sm:$0xff]
        %v2282 = vld [vmem:[#allocation2 + $0x13] sm:$0xff]
        %v2283 = vld [vmem:[#allocation2 + $0x1b] sm:$0xff]
        %v2284 = vld [vmem:[#allocation2 + $0x23] sm:$0xff]
        %v2285 = vld [vmem:[#allocation2 + $0x2b] sm:$0xff]
        %v2286 = vld [vmem:[#allocation2 + $0x33] sm:$0xff]
        %v2287 = vld [vmem:[#allocation2 + $0x3b] sm:$0xff]
        %v2288 = vld [vmem:[#allocation2 + $0x43] sm:$0xff]
        %v2289 = vld [vmem:[#allocation2 + $0x4b] sm:$0xff]
        %v2290 = vld [vmem:[#allocation2 + $0x53] sm:$0xff]
        %v2291 = vld [vmem:[#allocation2 + $0x5b] sm:$0xff]
        %v2292 = vld [vmem:[#allocation2 + $0x63] sm:$0xff]
        %v2293 = vld [vmem:[#allocation2 + $0x6b] sm:$0xff]
        %v2294 = vld [vmem:[#allocation2 + $0x73] sm:$0xff]
        %v2295 = vld [vmem:[#allocation2 + $0x7b] sm:$0xff]
        %v2296 = vld [vmem:[#allocation2 + $0x83] sm:$0xff]
        %v2297 = vld [vmem:[#allocation2 + $0x8b] sm:$0xff]
        %v2298 = vld [vmem:[#allocation2 + $0x93] sm:$0xff]
        %v2299 = vld [vmem:[#allocation2 + $0x9b] sm:$0xff]
        %v2300 = vld [vmem:[#allocation2 + $0xa3] sm:$0xff]
        %v2301 = vld [vmem:[#allocation2 + $0xab] sm:$0xff]
        %v2302 = vld [vmem:[#allocation2 + $0xb3] sm:$0xff]
        %v2303 = vld [vmem:[#allocation2 + $0xbb] sm:$0xff]
        %v2304 = vld [vmem:[#allocation2 + $0xc3] sm:$0xff]
        %v2305 = vld [vmem:[#allocation2 + $0xcb] sm:$0xff]
        %v2306 = vpack.c.bf16 %v2282, %v2281
        %v2307 = vpack.c.bf16 %v2284, %v2283
        %v2308 = vpack.c.bf16 %v2286, %v2285
        %v2309 = vpack.c.bf16 %v2288, %v2287
        %v2310 = vpack.c.bf16 %v2290, %v2289
        %v2311 = vpack.c.bf16 %v2292, %v2291
        %v2312 = vpack.c.bf16 %v2294, %v2293
        %v2313 = vpack.c.bf16 %v2296, %v2295
        %v2314 = vpack.c.bf16 %v2298, %v2297
        %v2315 = vpack.c.bf16 %v2300, %v2299
        %v2316 = vpack.c.bf16 %v2302, %v2301
        %v2317 = vpack.c.bf16 %v2304, %v2303
        %v2318 = vpack.c.bf16 %v2305, %v2305
        %s2319 = scalar_lea.vmem %s1, 56
        %v2320 = vld [vmem:[%s2319] sm:$0xf]
        %v2321 = vld [vmem:[%s2319 + $0x4] sm:$0xf]
        %v2324 = vunpack.c.l.b16 %v2320
        %v2325 = vunpack.c.l.b16 %v2321
        %v2326 = vpack.c.b16 %v2325, %v2324
        %v2329 = vsel %vm317, %v2306, 0
        %v2332 = vsel %vm317, %v2307, 0
        %v2335 = vsel %vm317, %v2308, 0
        %v2338 = vsel %vm317, %v2309, 0
        %v2341 = vsel %vm317, %v2310, 0
        %v2344 = vsel %vm317, %v2311, 0
        %v2347 = vsel %vm317, %v2312, 0
        %v2350 = vsel %vm317, %v2313, 0
        %v2353 = vsel %vm317, %v2314, 0
        %v2356 = vsel %vm317, %v2315, 0
        %v2359 = vsel %vm317, %v2316, 0
        %v2362 = vsel %vm317, %v2317, 0
        %v2365 = vsel %vm317, %v2318, 0
        %2367 = vmatprep.subr.bf16.mxu0 0
        %2368 = vmatpush1.bf16.msra.mxu0 %v2326
        %2369 = vmatprep.subr.bf16.mxu0 0
        %2370 = vmatpush1.bf16.msra.mxu0 0
        %2371 = vmatprep.subr.bf16.mxu0 0
        %2372 = vmatpush1.bf16.msra.mxu0 0
        %2373 = vmatprep.subr.bf16.mxu0 0
        %2374 = vmatpush1.bf16.msra.mxu0 0
        %2375 = vmatprep.subr.bf16.mxu0 0
        %2376 = vmatpush1.bf16.msra.mxu0 0
        %2377 = vmatprep.subr.bf16.mxu0 0
        %2378 = vmatpush1.bf16.msra.mxu0 0
        %2379 = vmatprep.subr.bf16.mxu0 0
        %2380 = vmatpush1.bf16.msra.mxu0 0
        %2381 = vmatprep.subr.bf16.mxu0 0
        %2382 = vmatpush1.bf16.msra.mxu0 0
        %2383 = vmatprep.subr.bf16.mxu0 0
        %2384 = vmatpush1.bf16.msra.mxu0 0
        %2385 = vmatprep.subr.bf16.mxu0 0
        %2386 = vmatpush1.bf16.msra.mxu0 0
        %2387 = vmatprep.subr.bf16.mxu0 0
        %2388 = vmatpush1.bf16.msra.mxu0 0
        %2389 = vmatprep.subr.bf16.mxu0 0
        %2390 = vmatpush1.bf16.msra.mxu0 0
        %2391 = vmatprep.subr.bf16.mxu0 0
        %2392 = vmatpush1.bf16.msra.mxu0 0
        %2393 = vmatprep.subr.bf16.mxu0 0
        %2394 = vmatpush1.bf16.msra.mxu0 0
        %2395 = vmatprep.subr.bf16.mxu0 0
        %2396 = vmatpush1.bf16.msra.mxu0 0
        %2397 = vmatprep.subr.bf16.mxu0 0
        %2398 = vmatpush1.bf16.msra.mxu0 0
        %2399 = vmatprep.mubr.bf16.mxu0 0
        %2400 = vmatmul.mubr.bf16.gmra.mrb[0].mxu0 %v2329
        %v2401 = vpop.f32.mrb[0].mxu0
        %v2402 = vadd.f32 0.0, %v2401
        %v2403 = vpop.f32.mrb[0].mxu0
        %v2404 = vpop.f32.mrb[0].mxu0
        %v2405 = vadd.f32 0.0, %v2404
        %v2406 = vpop.f32.mrb[0].mxu0
        %2407 = vmatprep.mubr.bf16.mxu0 0
        %2408 = vmatmul.mubr.bf16.gmra.mrb[0].mxu0 %v2332
        %v2409 = vpop.f32.mrb[0].mxu0
        %v2410 = vadd.f32 0.0, %v2409
        %v2411 = vpop.f32.mrb[0].mxu0
        %v2412 = vpop.f32.mrb[0].mxu0
        %v2413 = vadd.f32 0.0, %v2412
        %v2414 = vpop.f32.mrb[0].mxu0
        %2415 = vmatprep.mubr.bf16.mxu0 0
        %2416 = vmatmul.mubr.bf16.gmra.mrb[0].mxu0 %v2335
        %v2417 = vpop.f32.mrb[0].mxu0
        %v2418 = vadd.f32 0.0, %v2417
        %v2419 = vpop.f32.mrb[0].mxu0
        %v2420 = vpop.f32.mrb[0].mxu0
        %v2421 = vadd.f32 0.0, %v2420
        %v2422 = vpop.f32.mrb[0].mxu0
        %2423 = vmatprep.mubr.bf16.mxu0 0
        %2424 = vmatmul.mubr.bf16.gmra.mrb[0].mxu0 %v2338
        %v2425 = vpop.f32.mrb[0].mxu0
        %v2426 = vadd.f32 0.0, %v2425
        %v2427 = vpop.f32.mrb[0].mxu0
        %v2428 = vpop.f32.mrb[0].mxu0
        %v2429 = vadd.f32 0.0, %v2428
        %v2430 = vpop.f32.mrb[0].mxu0
        %2431 = vmatprep.mubr.bf16.mxu0 0
        %2432 = vmatmul.mubr.bf16.gmra.mrb[0].mxu0 %v2341
        %v2433 = vpop.f32.mrb[0].mxu0
        %v2434 = vadd.f32 0.0, %v2433
        %v2435 = vpop.f32.mrb[0].mxu0
        %v2436 = vpop.f32.mrb[0].mxu0
        %v2437 = vadd.f32 0.0, %v2436
        %v2438 = vpop.f32.mrb[0].mxu0
        %2439 = vmatprep.mubr.bf16.mxu0 0
        %2440 = vmatmul.mubr.bf16.gmra.mrb[0].mxu0 %v2344
        %v2441 = vpop.f32.mrb[0].mxu0
        %v2442 = vadd.f32 0.0, %v2441
        %v2443 = vpop.f32.mrb[0].mxu0
        %v2444 = vpop.f32.mrb[0].mxu0
        %v2445 = vadd.f32 0.0, %v2444
        %v2446 = vpop.f32.mrb[0].mxu0
        %2447 = vmatprep.mubr.bf16.mxu0 0
        %2448 = vmatmul.mubr.bf16.gmra.mrb[0].mxu0 %v2347
        %v2449 = vpop.f32.mrb[0].mxu0
        %v2450 = vadd.f32 0.0, %v2449
        %v2451 = vpop.f32.mrb[0].mxu0
        %v2452 = vpop.f32.mrb[0].mxu0
        %v2453 = vadd.f32 0.0, %v2452
        %v2454 = vpop.f32.mrb[0].mxu0
        %2455 = vmatprep.mubr.bf16.mxu0 0
        %2456 = vmatmul.mubr.bf16.gmra.mrb[0].mxu0 %v2350
        %v2457 = vpop.f32.mrb[0].mxu0
        %v2458 = vadd.f32 0.0, %v2457
        %v2459 = vpop.f32.mrb[0].mxu0
        %v2460 = vpop.f32.mrb[0].mxu0
        %v2461 = vadd.f32 0.0, %v2460
        %v2462 = vpop.f32.mrb[0].mxu0
        %2463 = vmatprep.mubr.bf16.mxu0 0
        %2464 = vmatmul.mubr.bf16.gmra.mrb[0].mxu0 %v2353
        %v2465 = vpop.f32.mrb[0].mxu0
        %v2466 = vadd.f32 0.0, %v2465
        %v2467 = vpop.f32.mrb[0].mxu0
        %v2468 = vpop.f32.mrb[0].mxu0
        %v2469 = vadd.f32 0.0, %v2468
        %v2470 = vpop.f32.mrb[0].mxu0
        %2471 = vmatprep.mubr.bf16.mxu0 0
        %2472 = vmatmul.mubr.bf16.gmra.mrb[0].mxu0 %v2356
        %v2473 = vpop.f32.mrb[0].mxu0
        %v2474 = vadd.f32 0.0, %v2473
        %v2475 = vpop.f32.mrb[0].mxu0
        %v2476 = vpop.f32.mrb[0].mxu0
        %v2477 = vadd.f32 0.0, %v2476
        %v2478 = vpop.f32.mrb[0].mxu0
        %2479 = vmatprep.mubr.bf16.mxu0 0
        %2480 = vmatmul.mubr.bf16.gmra.mrb[0].mxu0 %v2359
        %v2481 = vpop.f32.mrb[0].mxu0
        %v2482 = vadd.f32 0.0, %v2481
        %v2483 = vpop.f32.mrb[0].mxu0
        %v2484 = vpop.f32.mrb[0].mxu0
        %v2485 = vadd.f32 0.0, %v2484
        %v2486 = vpop.f32.mrb[0].mxu0
        %2487 = vmatprep.mubr.bf16.mxu0 0
        %2488 = vmatmul.mubr.bf16.gmra.mrb[0].mxu0 %v2362
        %v2489 = vpop.f32.mrb[0].mxu0
        %v2490 = vadd.f32 0.0, %v2489
        %v2491 = vpop.f32.mrb[0].mxu0
        %v2492 = vpop.f32.mrb[0].mxu0
        %v2493 = vadd.f32 0.0, %v2492
        %v2494 = vpop.f32.mrb[0].mxu0
        %2495 = vmatprep.mubr.bf16.mxu0 0
        %2496 = vmatmul.mubr.bf16.gmra.mrb[0].mxu0 %v2365
        %v2497 = vpop.f32.mrb[0].mxu0
        %v2498 = vadd.f32 0.0, %v2497
        %v2499 = vpop.f32.mrb[0].mxu0
        %v2500 = vpop.f32.mrb[0].mxu0
        %v2501 = vpop.f32.mrb[0].mxu0
        %2502 = vdwg.mxu0
        %v2503 = vadd.f32 %v2256, %v2402
        %v2504 = vadd.f32 %v2257, %v2405
        %v2505 = vadd.f32 %v2258, %v2410
        %v2506 = vadd.f32 %v2259, %v2413
        %v2507 = vadd.f32 %v2260, %v2418
        %v2508 = vadd.f32 %v2261, %v2421
        %v2509 = vadd.f32 %v2262, %v2426
        %v2510 = vadd.f32 %v2263, %v2429
        %v2511 = vadd.f32 %v2264, %v2434
        %v2512 = vadd.f32 %v2265, %v2437
        %v2513 = vadd.f32 %v2266, %v2442
        %v2514 = vadd.f32 %v2267, %v2445
        %v2515 = vadd.f32 %v2268, %v2450
        %v2516 = vadd.f32 %v2269, %v2453
        %v2517 = vadd.f32 %v2270, %v2458
        %v2518 = vadd.f32 %v2271, %v2461
        %v2519 = vadd.f32 %v2272, %v2466
        %v2520 = vadd.f32 %v2273, %v2469
        %v2521 = vadd.f32 %v2274, %v2474
        %v2522 = vadd.f32 %v2275, %v2477
        %v2523 = vadd.f32 %v2276, %v2482
        %v2524 = vadd.f32 %v2277, %v2485
        %v2525 = vadd.f32 %v2278, %v2490
        %v2526 = vadd.f32 %v2279, %v2493
        %v2527 = vadd.f32 %v2280, %v2498
        %v2528 = vld [vmem:[#allocation2 + $0xc] sm:$0xff]
        %v2529 = vld [vmem:[#allocation2 + $0x14] sm:$0xff]
        %v2530 = vld [vmem:[#allocation2 + $0x1c] sm:$0xff]
        %v2531 = vld [vmem:[#allocation2 + $0x24] sm:$0xff]
        %v2532 = vld [vmem:[#allocation2 + $0x2c] sm:$0xff]
        %v2533 = vld [vmem:[#allocation2 + $0x34] sm:$0xff]
        %v2534 = vld [vmem:[#allocation2 + $0x3c] sm:$0xff]
        %v2535 = vld [vmem:[#allocation2 + $0x44] sm:$0xff]
        %v2536 = vld [vmem:[#allocation2 + $0x4c] sm:$0xff]
        %v2537 = vld [vmem:[#allocation2 + $0x54] sm:$0xff]
        %v2538 = vld [vmem:[#allocation2 + $0x5c] sm:$0xff]
        %v2539 = vld [vmem:[#allocation2 + $0x64] sm:$0xff]
        %v2540 = vld [vmem:[#allocation2 + $0x6c] sm:$0xff]
        %v2541 = vld [vmem:[#allocation2 + $0x74] sm:$0xff]
        %v2542 = vld [vmem:[#allocation2 + $0x7c] sm:$0xff]
        %v2543 = vld [vmem:[#allocation2 + $0x84] sm:$0xff]
        %v2544 = vld [vmem:[#allocation2 + $0x8c] sm:$0xff]
        %v2545 = vld [vmem:[#allocation2 + $0x94] sm:$0xff]
        %v2546 = vld [vmem:[#allocation2 + $0x9c] sm:$0xff]
        %v2547 = vld [vmem:[#allocation2 + $0xa4] sm:$0xff]
        %v2548 = vld [vmem:[#allocation2 + $0xac] sm:$0xff]
        %v2549 = vld [vmem:[#allocation2 + $0xb4] sm:$0xff]
        %v2550 = vld [vmem:[#allocation2 + $0xbc] sm:$0xff]
        %v2551 = vld [vmem:[#allocation2 + $0xc4] sm:$0xff]
        %v2552 = vld [vmem:[#allocation2 + $0xcc] sm:$0xff]
        %v2553 = vpack.c.bf16 %v2529, %v2528
        %v2554 = vpack.c.bf16 %v2531, %v2530
        %v2555 = vpack.c.bf16 %v2533, %v2532
        %v2556 = vpack.c.bf16 %v2535, %v2534
        %v2557 = vpack.c.bf16 %v2537, %v2536
        %v2558 = vpack.c.bf16 %v2539, %v2538
        %v2559 = vpack.c.bf16 %v2541, %v2540
        %v2560 = vpack.c.bf16 %v2543, %v2542
        %v2561 = vpack.c.bf16 %v2545, %v2544
        %v2562 = vpack.c.bf16 %v2547, %v2546
        %v2563 = vpack.c.bf16 %v2549, %v2548
        %v2564 = vpack.c.bf16 %v2551, %v2550
        %v2565 = vpack.c.bf16 %v2552, %v2552
        %s2566 = scalar_lea.vmem %s1, 64
        %v2567 = vld [vmem:[%s2566] sm:$0xf]
        %v2568 = vld [vmem:[%s2566 + $0x4] sm:$0xf]
        %v2571 = vunpack.c.l.b16 %v2567
        %v2572 = vunpack.c.l.b16 %v2568
        %v2573 = vpack.c.b16 %v2572, %v2571
        %v2576 = vsel %vm317, %v2553, 0
        %v2579 = vsel %vm317, %v2554, 0
        %v2582 = vsel %vm317, %v2555, 0
        %v2585 = vsel %vm317, %v2556, 0
        %v2588 = vsel %vm317, %v2557, 0
        %v2591 = vsel %vm317, %v2558, 0
        %v2594 = vsel %vm317, %v2559, 0
        %v2597 = vsel %vm317, %v2560, 0
        %v2600 = vsel %vm317, %v2561, 0
        %v2603 = vsel %vm317, %v2562, 0
        %v2606 = vsel %vm317, %v2563, 0
        %v2609 = vsel %vm317, %v2564, 0
        %v2612 = vsel %vm317, %v2565, 0
        %2614 = vmatprep.subr.bf16.mxu0 0
        %2615 = vmatpush1.bf16.msra.mxu0 %v2573
        %2616 = vmatprep.subr.bf16.mxu0 0
        %2617 = vmatpush1.bf16.msra.mxu0 0
        %2618 = vmatprep.subr.bf16.mxu0 0
        %2619 = vmatpush1.bf16.msra.mxu0 0
        %2620 = vmatprep.subr.bf16.mxu0 0
        %2621 = vmatpush1.bf16.msra.mxu0 0
        %2622 = vmatprep.subr.bf16.mxu0 0
        %2623 = vmatpush1.bf16.msra.mxu0 0
        %2624 = vmatprep.subr.bf16.mxu0 0
        %2625 = vmatpush1.bf16.msra.mxu0 0
        %2626 = vmatprep.subr.bf16.mxu0 0
        %2627 = vmatpush1.bf16.msra.mxu0 0
        %2628 = vmatprep.subr.bf16.mxu0 0
        %2629 = vmatpush1.bf16.msra.mxu0 0
        %2630 = vmatprep.subr.bf16.mxu0 0
        %2631 = vmatpush1.bf16.msra.mxu0 0
        %2632 = vmatprep.subr.bf16.mxu0 0
        %2633 = vmatpush1.bf16.msra.mxu0 0
        %2634 = vmatprep.subr.bf16.mxu0 0
        %2635 = vmatpush1.bf16.msra.mxu0 0
        %2636 = vmatprep.subr.bf16.mxu0 0
        %2637 = vmatpush1.bf16.msra.mxu0 0
        %2638 = vmatprep.subr.bf16.mxu0 0
        %2639 = vmatpush1.bf16.msra.mxu0 0
        %2640 = vmatprep.subr.bf16.mxu0 0
        %2641 = vmatpush1.bf16.msra.mxu0 0
        %2642 = vmatprep.subr.bf16.mxu0 0
        %2643 = vmatpush1.bf16.msra.mxu0 0
        %2644 = vmatprep.subr.bf16.mxu0 0
        %2645 = vmatpush1.bf16.msra.mxu0 0
        %2646 = vmatprep.mubr.bf16.mxu0 0
        %2647 = vmatmul.mubr.bf16.gmra.mrb[0].mxu0 %v2576
        %v2648 = vpop.f32.mrb[0].mxu0
        %v2649 = vadd.f32 0.0, %v2648
        %v2650 = vpop.f32.mrb[0].mxu0
        %v2651 = vpop.f32.mrb[0].mxu0
        %v2652 = vadd.f32 0.0, %v2651
        %v2653 = vpop.f32.mrb[0].mxu0
        %2654 = vmatprep.mubr.bf16.mxu0 0
        %2655 = vmatmul.mubr.bf16.gmra.mrb[0].mxu0 %v2579
        %v2656 = vpop.f32.mrb[0].mxu0
        %v2657 = vadd.f32 0.0, %v2656
        %v2658 = vpop.f32.mrb[0].mxu0
        %v2659 = vpop.f32.mrb[0].mxu0
        %v2660 = vadd.f32 0.0, %v2659
        %v2661 = vpop.f32.mrb[0].mxu0
        %2662 = vmatprep.mubr.bf16.mxu0 0
        %2663 = vmatmul.mubr.bf16.gmra.mrb[0].mxu0 %v2582
        %v2664 = vpop.f32.mrb[0].mxu0
        %v2665 = vadd.f32 0.0, %v2664
        %v2666 = vpop.f32.mrb[0].mxu0
        %v2667 = vpop.f32.mrb[0].mxu0
        %v2668 = vadd.f32 0.0, %v2667
        %v2669 = vpop.f32.mrb[0].mxu0
        %2670 = vmatprep.mubr.bf16.mxu0 0
        %2671 = vmatmul.mubr.bf16.gmra.mrb[0].mxu0 %v2585
        %v2672 = vpop.f32.mrb[0].mxu0
        %v2673 = vadd.f32 0.0, %v2672
        %v2674 = vpop.f32.mrb[0].mxu0
        %v2675 = vpop.f32.mrb[0].mxu0
        %v2676 = vadd.f32 0.0, %v2675
        %v2677 = vpop.f32.mrb[0].mxu0
        %2678 = vmatprep.mubr.bf16.mxu0 0
        %2679 = vmatmul.mubr.bf16.gmra.mrb[0].mxu0 %v2588
        %v2680 = vpop.f32.mrb[0].mxu0
        %v2681 = vadd.f32 0.0, %v2680
        %v2682 = vpop.f32.mrb[0].mxu0
        %v2683 = vpop.f32.mrb[0].mxu0
        %v2684 = vadd.f32 0.0, %v2683
        %v2685 = vpop.f32.mrb[0].mxu0
        %2686 = vmatprep.mubr.bf16.mxu0 0
        %2687 = vmatmul.mubr.bf16.gmra.mrb[0].mxu0 %v2591
        %v2688 = vpop.f32.mrb[0].mxu0
        %v2689 = vadd.f32 0.0, %v2688
        %v2690 = vpop.f32.mrb[0].mxu0
        %v2691 = vpop.f32.mrb[0].mxu0
        %v2692 = vadd.f32 0.0, %v2691
        %v2693 = vpop.f32.mrb[0].mxu0
        %2694 = vmatprep.mubr.bf16.mxu0 0
        %2695 = vmatmul.mubr.bf16.gmra.mrb[0].mxu0 %v2594
        %v2696 = vpop.f32.mrb[0].mxu0
        %v2697 = vadd.f32 0.0, %v2696
        %v2698 = vpop.f32.mrb[0].mxu0
        %v2699 = vpop.f32.mrb[0].mxu0
        %v2700 = vadd.f32 0.0, %v2699
        %v2701 = vpop.f32.mrb[0].mxu0
        %2702 = vmatprep.mubr.bf16.mxu0 0
        %2703 = vmatmul.mubr.bf16.gmra.mrb[0].mxu0 %v2597
        %v2704 = vpop.f32.mrb[0].mxu0
        %v2705 = vadd.f32 0.0, %v2704
        %v2706 = vpop.f32.mrb[0].mxu0
        %v2707 = vpop.f32.mrb[0].mxu0
        %v2708 = vadd.f32 0.0, %v2707
        %v2709 = vpop.f32.mrb[0].mxu0
        %2710 = vmatprep.mubr.bf16.mxu0 0
        %2711 = vmatmul.mubr.bf16.gmra.mrb[0].mxu0 %v2600
        %v2712 = vpop.f32.mrb[0].mxu0
        %v2713 = vadd.f32 0.0, %v2712
        %v2714 = vpop.f32.mrb[0].mxu0
        %v2715 = vpop.f32.mrb[0].mxu0
        %v2716 = vadd.f32 0.0, %v2715
        %v2717 = vpop.f32.mrb[0].mxu0
        %2718 = vmatprep.mubr.bf16.mxu0 0
        %2719 = vmatmul.mubr.bf16.gmra.mrb[0].mxu0 %v2603
        %v2720 = vpop.f32.mrb[0].mxu0
        %v2721 = vadd.f32 0.0, %v2720
        %v2722 = vpop.f32.mrb[0].mxu0
        %v2723 = vpop.f32.mrb[0].mxu0
        %v2724 = vadd.f32 0.0, %v2723
        %v2725 = vpop.f32.mrb[0].mxu0
        %2726 = vmatprep.mubr.bf16.mxu0 0
        %2727 = vmatmul.mubr.bf16.gmra.mrb[0].mxu0 %v2606
        %v2728 = vpop.f32.mrb[0].mxu0
        %v2729 = vadd.f32 0.0, %v2728
        %v2730 = vpop.f32.mrb[0].mxu0
        %v2731 = vpop.f32.mrb[0].mxu0
        %v2732 = vadd.f32 0.0, %v2731
        %v2733 = vpop.f32.mrb[0].mxu0
        %2734 = vmatprep.mubr.bf16.mxu0 0
        %2735 = vmatmul.mubr.bf16.gmra.mrb[0].mxu0 %v2609
        %v2736 = vpop.f32.mrb[0].mxu0
        %v2737 = vadd.f32 0.0, %v2736
        %v2738 = vpop.f32.mrb[0].mxu0
        %v2739 = vpop.f32.mrb[0].mxu0
        %v2740 = vadd.f32 0.0, %v2739
        %v2741 = vpop.f32.mrb[0].mxu0
        %2742 = vmatprep.mubr.bf16.mxu0 0
        %2743 = vmatmul.mubr.bf16.gmra.mrb[0].mxu0 %v2612
        %v2744 = vpop.f32.mrb[0].mxu0
        %v2745 = vadd.f32 0.0, %v2744
        %v2746 = vpop.f32.mrb[0].mxu0
        %v2747 = vpop.f32.mrb[0].mxu0
        %v2748 = vpop.f32.mrb[0].mxu0
        %2749 = vdwg.mxu0
        %v2750 = vadd.f32 %v2503, %v2649
        %v2751 = vadd.f32 %v2504, %v2652
        %v2752 = vadd.f32 %v2505, %v2657
        %v2753 = vadd.f32 %v2506, %v2660
        %v2754 = vadd.f32 %v2507, %v2665
        %v2755 = vadd.f32 %v2508, %v2668
        %v2756 = vadd.f32 %v2509, %v2673
        %v2757 = vadd.f32 %v2510, %v2676
        %v2758 = vadd.f32 %v2511, %v2681
        %v2759 = vadd.f32 %v2512, %v2684
        %v2760 = vadd.f32 %v2513, %v2689
        %v2761 = vadd.f32 %v2514, %v2692
        %v2762 = vadd.f32 %v2515, %v2697
        %v2763 = vadd.f32 %v2516, %v2700
        %v2764 = vadd.f32 %v2517, %v2705
        %v2765 = vadd.f32 %v2518, %v2708
        %v2766 = vadd.f32 %v2519, %v2713
        %v2767 = vadd.f32 %v2520, %v2716
        %v2768 = vadd.f32 %v2521, %v2721
        %v2769 = vadd.f32 %v2522, %v2724
        %v2770 = vadd.f32 %v2523, %v2729
        %v2771 = vadd.f32 %v2524, %v2732
        %v2772 = vadd.f32 %v2525, %v2737
        %v2773 = vadd.f32 %v2526, %v2740
        %v2774 = vadd.f32 %v2527, %v2745
        %v2775 = vld [vmem:[%s2] sm:$0x1]
        %v2777 = vlaneseq
        %v2778 = vshrl.u32 %v2777, 7
        %v2779 = vsub.s32 0, %v2778
        %v2780 = vrot.slane %v2775, %v2779
        %v2782 = vadd.f32 %v2750, %v2780
        %v2783 = vadd.f32 %v2751, %v2780
        %v2784 = vadd.f32 %v2752, %v2780
        %v2785 = vadd.f32 %v2753, %v2780
        %v2786 = vadd.f32 %v2754, %v2780
        %v2787 = vadd.f32 %v2755, %v2780
        %v2788 = vadd.f32 %v2756, %v2780
        %v2789 = vadd.f32 %v2757, %v2780
        %v2790 = vadd.f32 %v2758, %v2780
        %v2791 = vadd.f32 %v2759, %v2780
        %v2792 = vadd.f32 %v2760, %v2780
        %v2793 = vadd.f32 %v2761, %v2780
        %v2794 = vadd.f32 %v2762, %v2780
        %v2795 = vadd.f32 %v2763, %v2780
        %v2796 = vadd.f32 %v2764, %v2780
        %v2797 = vadd.f32 %v2765, %v2780
        %v2798 = vadd.f32 %v2766, %v2780
        %v2799 = vadd.f32 %v2767, %v2780
        %v2800 = vadd.f32 %v2768, %v2780
        %v2801 = vadd.f32 %v2769, %v2780
        %v2802 = vadd.f32 %v2770, %v2780
        %v2803 = vadd.f32 %v2771, %v2780
        %v2804 = vadd.f32 %v2772, %v2780
        %v2805 = vadd.f32 %v2773, %v2780
        %v2806 = vadd.f32 %v2774, %v2780
        %v2807 = vmax.f32 %v2782, 0.0
        %v2808 = vmax.f32 %v2783, 0.0
        %v2809 = vmax.f32 %v2784, 0.0
        %v2810 = vmax.f32 %v2785, 0.0
        %v2811 = vmax.f32 %v2786, 0.0
        %v2812 = vmax.f32 %v2787, 0.0
        %v2813 = vmax.f32 %v2788, 0.0
        %v2814 = vmax.f32 %v2789, 0.0
        %v2815 = vmax.f32 %v2790, 0.0
        %v2816 = vmax.f32 %v2791, 0.0
        %v2817 = vmax.f32 %v2792, 0.0
        %v2818 = vmax.f32 %v2793, 0.0
        %v2819 = vmax.f32 %v2794, 0.0
        %v2820 = vmax.f32 %v2795, 0.0
        %v2821 = vmax.f32 %v2796, 0.0
        %v2822 = vmax.f32 %v2797, 0.0
        %v2823 = vmax.f32 %v2798, 0.0
        %v2824 = vmax.f32 %v2799, 0.0
        %v2825 = vmax.f32 %v2800, 0.0
        %v2826 = vmax.f32 %v2801, 0.0
        %v2827 = vmax.f32 %v2802, 0.0
        %v2828 = vmax.f32 %v2803, 0.0
        %v2829 = vmax.f32 %v2804, 0.0
        %v2830 = vmax.f32 %v2805, 0.0
        %v2831 = vmax.f32 %v2806, 0.0
        %2832 = vst.msk [vmem:[#allocation3] sm:$0xff] %vm599, %v2807
        %2833 = vst.msk [vmem:[#allocation3 + $0x8] sm:$0xff] %vm599, %v2808
        %2834 = vst.msk [vmem:[#allocation3 + $0x10] sm:$0xff] %vm599, %v2809
        %2835 = vst.msk [vmem:[#allocation3 + $0x18] sm:$0xff] %vm599, %v2810
        %2836 = vst.msk [vmem:[#allocation3 + $0x20] sm:$0xff] %vm599, %v2811
        %2837 = vst.msk [vmem:[#allocation3 + $0x28] sm:$0xff] %vm599, %v2812
        %2838 = vst.msk [vmem:[#allocation3 + $0x30] sm:$0xff] %vm599, %v2813
        %2839 = vst.msk [vmem:[#allocation3 + $0x38] sm:$0xff] %vm599, %v2814
        %2840 = vst.msk [vmem:[#allocation3 + $0x40] sm:$0xff] %vm599, %v2815
        %2841 = vst.msk [vmem:[#allocation3 + $0x48] sm:$0xff] %vm599, %v2816
        %2842 = vst.msk [vmem:[#allocation3 + $0x50] sm:$0xff] %vm599, %v2817
        %2843 = vst.msk [vmem:[#allocation3 + $0x58] sm:$0xff] %vm599, %v2818
        %2844 = vst.msk [vmem:[#allocation3 + $0x60] sm:$0xff] %vm599, %v2819
        %2845 = vst.msk [vmem:[#allocation3 + $0x68] sm:$0xff] %vm599, %v2820
        %2846 = vst.msk [vmem:[#allocation3 + $0x70] sm:$0xff] %vm599, %v2821
        %2847 = vst.msk [vmem:[#allocation3 + $0x78] sm:$0xff] %vm599, %v2822
        %2848 = vst.msk [vmem:[#allocation3 + $0x80] sm:$0xff] %vm599, %v2823
        %2849 = vst.msk [vmem:[#allocation3 + $0x88] sm:$0xff] %vm599, %v2824
        %2850 = vst.msk [vmem:[#allocation3 + $0x90] sm:$0xff] %vm599, %v2825
        %2851 = vst.msk [vmem:[#allocation3 + $0x98] sm:$0xff] %vm599, %v2826
        %2852 = vst.msk [vmem:[#allocation3 + $0xa0] sm:$0xff] %vm599, %v2827
        %2853 = vst.msk [vmem:[#allocation3 + $0xa8] sm:$0xff] %vm599, %v2828
        %2854 = vst.msk [vmem:[#allocation3 + $0xb0] sm:$0xff] %vm599, %v2829
        %2855 = vst.msk [vmem:[#allocation3 + $0xb8] sm:$0xff] %vm599, %v2830
        %2856 = vst.msk [vmem:[#allocation3 + $0xc0] sm:$0xff] %vm599, %v2831
        %v2857 = vld [vmem:[#allocation3] sm:$0xff]
        %v2858 = vld [vmem:[#allocation3 + $0x8] sm:$0xff]
        %v2859 = vld [vmem:[#allocation3 + $0x10] sm:$0xff]
        %v2860 = vld [vmem:[#allocation3 + $0x18] sm:$0xff]
        %v2861 = vld [vmem:[#allocation3 + $0x20] sm:$0xff]
        %v2862 = vld [vmem:[#allocation3 + $0x28] sm:$0xff]
        %v2863 = vld [vmem:[#allocation3 + $0x30] sm:$0xff]
        %v2864 = vld [vmem:[#allocation3 + $0x38] sm:$0xff]
        %v2865 = vld [vmem:[#allocation3 + $0x40] sm:$0xff]
        %v2866 = vld [vmem:[#allocation3 + $0x48] sm:$0xff]
        %v2867 = vld [vmem:[#allocation3 + $0x50] sm:$0xff]
        %v2868 = vld [vmem:[#allocation3 + $0x58] sm:$0xff]
        %v2869 = vld [vmem:[#allocation3 + $0x60] sm:$0xff]
        %v2870 = vld [vmem:[#allocation3 + $0x68] sm:$0xff]
        %v2871 = vld [vmem:[#allocation3 + $0x70] sm:$0xff]
        %v2872 = vld [vmem:[#allocation3 + $0x78] sm:$0xff]
        %v2873 = vld [vmem:[#allocation3 + $0x80] sm:$0xff]
        %v2874 = vld [vmem:[#allocation3 + $0x88] sm:$0xff]
        %v2875 = vld [vmem:[#allocation3 + $0x90] sm:$0xff]
        %v2876 = vld [vmem:[#allocation3 + $0x98] sm:$0xff]
        %v2877 = vld [vmem:[#allocation3 + $0xa0] sm:$0xff]
        %v2878 = vld [vmem:[#allocation3 + $0xa8] sm:$0xff]
        %v2879 = vld [vmem:[#allocation3 + $0xb0] sm:$0xff]
        %v2880 = vld [vmem:[#allocation3 + $0xb8] sm:$0xff]
        %v2881 = vld [vmem:[#allocation3 + $0xc0] sm:$0xff]
        %v2882 = vpack.c.bf16 %v2858, %v2857
        %v2883 = vpack.c.bf16 %v2860, %v2859
        %v2884 = vpack.c.bf16 %v2862, %v2861
        %v2885 = vpack.c.bf16 %v2864, %v2863
        %v2886 = vpack.c.bf16 %v2866, %v2865
        %v2887 = vpack.c.bf16 %v2868, %v2867
        %v2888 = vpack.c.bf16 %v2870, %v2869
        %v2889 = vpack.c.bf16 %v2872, %v2871
        %v2890 = vpack.c.bf16 %v2874, %v2873
        %v2891 = vpack.c.bf16 %v2876, %v2875
        %v2892 = vpack.c.bf16 %v2878, %v2877
        %v2893 = vpack.c.bf16 %v2880, %v2879
        %v2894 = vpack.c.bf16 %v2881, %v2881
        %v2895 = vld [vmem:[%s3] sm:$0xf]
        %v2896 = vld [vmem:[%s3 + $0x4] sm:$0xf]
        %v2897 = vld [vmem:[%s3 + $0x8] sm:$0xf]
        %v2898 = vld [vmem:[#allocation3 + $0x1] sm:$0xff]
        %v2899 = vld [vmem:[#allocation3 + $0x9] sm:$0xff]
        %v2900 = vld [vmem:[#allocation3 + $0x11] sm:$0xff]
        %v2901 = vld [vmem:[#allocation3 + $0x19] sm:$0xff]
        %v2902 = vld [vmem:[#allocation3 + $0x21] sm:$0xff]
        %v2903 = vld [vmem:[#allocation3 + $0x29] sm:$0xff]
        %v2904 = vld [vmem:[#allocation3 + $0x31] sm:$0xff]
        %v2905 = vld [vmem:[#allocation3 + $0x39] sm:$0xff]
        %v2906 = vld [vmem:[#allocation3 + $0x41] sm:$0xff]
        %v2907 = vld [vmem:[#allocation3 + $0x49] sm:$0xff]
        %v2908 = vld [vmem:[#allocation3 + $0x51] sm:$0xff]
        %v2909 = vld [vmem:[#allocation3 + $0x59] sm:$0xff]
        %v2910 = vld [vmem:[#allocation3 + $0x61] sm:$0xff]
        %v2911 = vld [vmem:[#allocation3 + $0x69] sm:$0xff]
        %v2912 = vld [vmem:[#allocation3 + $0x71] sm:$0xff]
        %v2913 = vld [vmem:[#allocation3 + $0x79] sm:$0xff]
        %v2914 = vld [vmem:[#allocation3 + $0x81] sm:$0xff]
        %v2915 = vld [vmem:[#allocation3 + $0x89] sm:$0xff]
        %v2916 = vld [vmem:[#allocation3 + $0x91] sm:$0xff]
        %v2917 = vld [vmem:[#allocation3 + $0x99] sm:$0xff]
        %v2918 = vld [vmem:[#allocation3 + $0xa1] sm:$0xff]
        %v2919 = vld [vmem:[#allocation3 + $0xa9] sm:$0xff]
        %v2920 = vld [vmem:[#allocation3 + $0xb1] sm:$0xff]
        %v2921 = vld [vmem:[#allocation3 + $0xb9] sm:$0xff]
        %v2922 = vld [vmem:[#allocation3 + $0xc1] sm:$0xff]
        %v2923 = vpack.c.bf16 %v2899, %v2898
        %v2924 = vpack.c.bf16 %v2901, %v2900
        %v2925 = vpack.c.bf16 %v2903, %v2902
        %v2926 = vpack.c.bf16 %v2905, %v2904
        %v2927 = vpack.c.bf16 %v2907, %v2906
        %v2928 = vpack.c.bf16 %v2909, %v2908
        %v2929 = vpack.c.bf16 %v2911, %v2910
        %v2930 = vpack.c.bf16 %v2913, %v2912
        %v2931 = vpack.c.bf16 %v2915, %v2914
        %v2932 = vpack.c.bf16 %v2917, %v2916
        %v2933 = vpack.c.bf16 %v2919, %v2918
        %v2934 = vpack.c.bf16 %v2921, %v2920
        %v2935 = vpack.c.bf16 %v2922, %v2922
        %s2936 = scalar_lea.vmem %s3, 12
        %v2937 = vld [vmem:[%s2936] sm:$0xf]
        %v2938 = vld [vmem:[%s2936 + $0x4] sm:$0xf]
        %v2939 = vld [vmem:[%s2936 + $0x8] sm:$0xf]
        %v2943 = vunpack.c.l.b16 %v2937
        %v2944 = vunpack.c.l.b16 %v2938
        %v2945 = vunpack.c.l.b16 %v2939
        %v2946 = vpack.c.b16 %v2944, %v2943
        %v2947 = vpack.c.b16 %v2945, %v2945
        %v2950 = vsel %vm599, %v2923, 0
        %v2953 = vsel %vm599, %v2924, 0
        %v2956 = vsel %vm599, %v2925, 0
        %v2959 = vsel %vm599, %v2926, 0
        %v2962 = vsel %vm599, %v2927, 0
        %v2965 = vsel %vm599, %v2928, 0
        %v2968 = vsel %vm599, %v2929, 0
        %v2971 = vsel %vm599, %v2930, 0
        %v2974 = vsel %vm599, %v2931, 0
        %v2977 = vsel %vm599, %v2932, 0
        %v2980 = vsel %vm599, %v2933, 0
        %v2983 = vsel %vm599, %v2934, 0
        %v2986 = vsel %vm599, %v2935, 0
        %vm2988 = vcmask 1043456
        %v2990 = vsel %vm2988, %v2947, 0
        %2992 = vmatprep.subr.bf16.mxu0 0
        %2993 = vmatpush1.bf16.msra.mxu0 %v2946
        %2994 = vmatprep.subr.bf16.mxu0 0
        %2995 = vmatpush1.bf16.msra.mxu0 %v2990
        %2996 = vmatprep.subr.bf16.mxu0 0
        %2997 = vmatpush1.bf16.msra.mxu0 0
        %2998 = vmatprep.subr.bf16.mxu0 0
        %2999 = vmatpush1.bf16.msra.mxu0 0
        %3000 = vmatprep.subr.bf16.mxu0 0
        %3001 = vmatpush1.bf16.msra.mxu0 0
        %3002 = vmatprep.subr.bf16.mxu0 0
        %3003 = vmatpush1.bf16.msra.mxu0 0
        %3004 = vmatprep.subr.bf16.mxu0 0
        %3005 = vmatpush1.bf16.msra.mxu0 0
        %3006 = vmatprep.subr.bf16.mxu0 0
        %3007 = vmatpush1.bf16.msra.mxu0 0
        %3008 = vmatprep.subr.bf16.mxu0 0
        %3009 = vmatpush1.bf16.msra.mxu0 0
        %3010 = vmatprep.subr.bf16.mxu0 0
        %3011 = vmatpush1.bf16.msra.mxu0 0
        %3012 = vmatprep.subr.bf16.mxu0 0
        %3013 = vmatpush1.bf16.msra.mxu0 0
        %3014 = vmatprep.subr.bf16.mxu0 0
        %3015 = vmatpush1.bf16.msra.mxu0 0
        %3016 = vmatprep.subr.bf16.mxu0 0
        %3017 = vmatpush1.bf16.msra.mxu0 0
        %3018 = vmatprep.subr.bf16.mxu0 0
        %3019 = vmatpush1.bf16.msra.mxu0 0
        %3020 = vmatprep.subr.bf16.mxu0 0
        %3021 = vmatpush1.bf16.msra.mxu0 0
        %3022 = vmatprep.subr.bf16.mxu0 0
        %3023 = vmatpush1.bf16.msra.mxu0 0
        %3024 = vmatprep.mubr.bf16.mxu0 0
        %3025 = vmatmul.mubr.bf16.gmra.mrb[0].mxu0 %v2950
        %v3026 = vpop.f32.mrb[0].mxu0
        %v3027 = vadd.f32 0.0, %v3026
        %v3028 = vpop.f32.mrb[0].mxu0
        %v3029 = vpop.f32.mrb[0].mxu0
        %v3030 = vpop.f32.mrb[0].mxu0
        %3031 = vmatprep.mubr.bf16.mxu0 0
        %3032 = vmatmul.mubr.bf16.gmra.mrb[0].mxu0 %v2953
        %v3033 = vpop.f32.mrb[0].mxu0
        %v3034 = vpop.f32.mrb[0].mxu0
        %v3035 = vpop.f32.mrb[0].mxu0
        %v3036 = vadd.f32 0.0, %v3035
        %v3037 = vpop.f32.mrb[0].mxu0
        %3038 = vmatprep.mubr.bf16.mxu0 0
        %3039 = vmatmul.mubr.bf16.gmra.mrb[0].mxu0 %v2956
        %v3040 = vpop.f32.mrb[0].mxu0
        %v3041 = vpop.f32.mrb[0].mxu0
        %v3042 = vpop.f32.mrb[0].mxu0
        %v3043 = vpop.f32.mrb[0].mxu0
        %3044 = vmatprep.mubr.bf16.mxu0 0
        %3045 = vmatmul.mubr.bf16.gmra.mrb[0].mxu0 %v2959
        %v3046 = vpop.f32.mrb[0].mxu0
        %v3047 = vadd.f32 0.0, %v3046
        %v3048 = vpop.f32.mrb[0].mxu0
        %v3049 = vpop.f32.mrb[0].mxu0
        %v3050 = vpop.f32.mrb[0].mxu0
        %3051 = vmatprep.mubr.bf16.mxu0 0
        %3052 = vmatmul.mubr.bf16.gmra.mrb[0].mxu0 %v2962
        %v3053 = vpop.f32.mrb[0].mxu0
        %v3054 = vpop.f32.mrb[0].mxu0
        %v3055 = vpop.f32.mrb[0].mxu0
        %v3056 = vadd.f32 0.0, %v3055
        %v3057 = vpop.f32.mrb[0].mxu0
        %3058 = vmatprep.mubr.bf16.mxu0 0
        %3059 = vmatmul.mubr.bf16.gmra.mrb[0].mxu0 %v2965
        %v3060 = vpop.f32.mrb[0].mxu0
        %v3061 = vpop.f32.mrb[0].mxu0
        %v3062 = vpop.f32.mrb[0].mxu0
        %v3063 = vpop.f32.mrb[0].mxu0
        %3064 = vmatprep.mubr.bf16.mxu0 0
        %3065 = vmatmul.mubr.bf16.gmra.mrb[0].mxu0 %v2968
        %v3066 = vpop.f32.mrb[0].mxu0
        %v3067 = vadd.f32 0.0, %v3066
        %v3068 = vpop.f32.mrb[0].mxu0
        %v3069 = vpop.f32.mrb[0].mxu0
        %v3070 = vpop.f32.mrb[0].mxu0
        %3071 = vmatprep.mubr.bf16.mxu0 0
        %3072 = vmatmul.mubr.bf16.gmra.mrb[0].mxu0 %v2971
        %v3073 = vpop.f32.mrb[0].mxu0
        %v3074 = vpop.f32.mrb[0].mxu0
        %v3075 = vpop.f32.mrb[0].mxu0
        %v3076 = vadd.f32 0.0, %v3075
        %v3077 = vpop.f32.mrb[0].mxu0
        %3078 = vmatprep.mubr.bf16.mxu0 0
        %3079 = vmatmul.mubr.bf16.gmra.mrb[0].mxu0 %v2974
        %v3080 = vpop.f32.mrb[0].mxu0
        %v3081 = vpop.f32.mrb[0].mxu0
        %v3082 = vpop.f32.mrb[0].mxu0
        %v3083 = vpop.f32.mrb[0].mxu0
        %3084 = vmatprep.mubr.bf16.mxu0 0
        %3085 = vmatmul.mubr.bf16.gmra.mrb[0].mxu0 %v2977
        %v3086 = vpop.f32.mrb[0].mxu0
        %v3087 = vadd.f32 0.0, %v3086
        %v3088 = vpop.f32.mrb[0].mxu0
        %v3089 = vpop.f32.mrb[0].mxu0
        %v3090 = vpop.f32.mrb[0].mxu0
        %3091 = vmatprep.mubr.bf16.mxu0 0
        %3092 = vmatmul.mubr.bf16.gmra.mrb[0].mxu0 %v2980
        %v3093 = vpop.f32.mrb[0].mxu0
        %v3094 = vpop.f32.mrb[0].mxu0
        %v3095 = vpop.f32.mrb[0].mxu0
        %v3096 = vadd.f32 0.0, %v3095
        %v3097 = vpop.f32.mrb[0].mxu0
        %3098 = vmatprep.mubr.bf16.mxu0 0
        %3099 = vmatmul.mubr.bf16.gmra.mrb[0].mxu0 %v2983
        %v3100 = vpop.f32.mrb[0].mxu0
        %v3101 = vpop.f32.mrb[0].mxu0
        %v3102 = vpop.f32.mrb[0].mxu0
        %v3103 = vpop.f32.mrb[0].mxu0
        %3104 = vmatprep.mubr.bf16.mxu0 0
        %3105 = vmatmul.mubr.bf16.gmra.mrb[0].mxu0 %v2986
        %v3106 = vpop.f32.mrb[0].mxu0
        %v3107 = vpop.f32.mrb[0].mxu0
        %v3108 = vpop.f32.mrb[0].mxu0
        %v3109 = vpop.f32.mrb[0].mxu0
        %3110 = vdwg.mxu0
        %v3114 = vunpack.c.l.b16 %v2895
        %v3115 = vunpack.c.l.b16 %v2896
        %v3116 = vunpack.c.l.b16 %v2897
        %v3117 = vpack.c.b16 %v3115, %v3114
        %v3118 = vpack.c.b16 %v3116, %v3116
        %v3121 = vsel %vm599, %v2882, 0
        %v3124 = vsel %vm599, %v2883, 0
        %v3127 = vsel %vm599, %v2884, 0
        %v3130 = vsel %vm599, %v2885, 0
        %v3133 = vsel %vm599, %v2886, 0
        %v3136 = vsel %vm599, %v2887, 0
        %v3139 = vsel %vm599, %v2888, 0
        %v3142 = vsel %vm599, %v2889, 0
        %v3145 = vsel %vm599, %v2890, 0
        %v3148 = vsel %vm599, %v2891, 0
        %v3151 = vsel %vm599, %v2892, 0
        %v3154 = vsel %vm599, %v2893, 0
        %v3157 = vsel %vm599, %v2894, 0
        %v3160 = vsel %vm2988, %v3118, 0
        %3162 = vmatprep.subr.bf16.mxu0 0
        %3163 = vmatpush1.bf16.msra.mxu0 %v3117
        %3164 = vmatprep.subr.bf16.mxu0 0
        %3165 = vmatpush1.bf16.msra.mxu0 %v3160
        %3166 = vmatprep.subr.bf16.mxu0 0
        %3167 = vmatpush1.bf16.msra.mxu0 0
        %3168 = vmatprep.subr.bf16.mxu0 0
        %3169 = vmatpush1.bf16.msra.mxu0 0
        %3170 = vmatprep.subr.bf16.mxu0 0
        %3171 = vmatpush1.bf16.msra.mxu0 0
        %3172 = vmatprep.subr.bf16.mxu0 0
        %3173 = vmatpush1.bf16.msra.mxu0 0
        %3174 = vmatprep.subr.bf16.mxu0 0
        %3175 = vmatpush1.bf16.msra.mxu0 0
        %3176 = vmatprep.subr.bf16.mxu0 0
        %3177 = vmatpush1.bf16.msra.mxu0 0
        %3178 = vmatprep.subr.bf16.mxu0 0
        %3179 = vmatpush1.bf16.msra.mxu0 0
        %3180 = vmatprep.subr.bf16.mxu0 0
        %3181 = vmatpush1.bf16.msra.mxu0 0
        %3182 = vmatprep.subr.bf16.mxu0 0
        %3183 = vmatpush1.bf16.msra.mxu0 0
        %3184 = vmatprep.subr.bf16.mxu0 0
        %3185 = vmatpush1.bf16.msra.mxu0 0
        %3186 = vmatprep.subr.bf16.mxu0 0
        %3187 = vmatpush1.bf16.msra.mxu0 0
        %3188 = vmatprep.subr.bf16.mxu0 0
        %3189 = vmatpush1.bf16.msra.mxu0 0
        %3190 = vmatprep.subr.bf16.mxu0 0
        %3191 = vmatpush1.bf16.msra.mxu0 0
        %3192 = vmatprep.subr.bf16.mxu0 0
        %3193 = vmatpush1.bf16.msra.mxu0 0
        %3194 = vmatprep.mubr.bf16.mxu0 0
        %3195 = vmatmul.mubr.bf16.gmra.mrb[0].mxu0 %v3121
        %v3196 = vpop.f32.mrb[0].mxu0
        %v3197 = vadd.f32 %v3027, %v3196
        %v3198 = vpop.f32.mrb[0].mxu0
        %v3199 = vpop.f32.mrb[0].mxu0
        %v3200 = vpop.f32.mrb[0].mxu0
        %3201 = vmatprep.mubr.bf16.mxu0 0
        %3202 = vmatmul.mubr.bf16.gmra.mrb[0].mxu0 %v3124
        %v3203 = vpop.f32.mrb[0].mxu0
        %v3204 = vpop.f32.mrb[0].mxu0
        %v3205 = vpop.f32.mrb[0].mxu0
        %v3206 = vadd.f32 %v3036, %v3205
        %v3207 = vpop.f32.mrb[0].mxu0
        %3208 = vmatprep.mubr.bf16.mxu0 0
        %3209 = vmatmul.mubr.bf16.gmra.mrb[0].mxu0 %v3127
        %v3210 = vpop.f32.mrb[0].mxu0
        %v3211 = vpop.f32.mrb[0].mxu0
        %v3212 = vpop.f32.mrb[0].mxu0
        %v3213 = vpop.f32.mrb[0].mxu0
        %3214 = vmatprep.mubr.bf16.mxu0 0
        %3215 = vmatmul.mubr.bf16.gmra.mrb[0].mxu0 %v3130
        %v3216 = vpop.f32.mrb[0].mxu0
        %v3217 = vadd.f32 %v3047, %v3216
        %v3218 = vpop.f32.mrb[0].mxu0
        %v3219 = vpop.f32.mrb[0].mxu0
        %v3220 = vpop.f32.mrb[0].mxu0
        %3221 = vmatprep.mubr.bf16.mxu0 0
        %3222 = vmatmul.mubr.bf16.gmra.mrb[0].mxu0 %v3133
        %v3223 = vpop.f32.mrb[0].mxu0
        %v3224 = vpop.f32.mrb[0].mxu0
        %v3225 = vpop.f32.mrb[0].mxu0
        %v3226 = vadd.f32 %v3056, %v3225
        %v3227 = vpop.f32.mrb[0].mxu0
        %3228 = vmatprep.mubr.bf16.mxu0 0
        %3229 = vmatmul.mubr.bf16.gmra.mrb[0].mxu0 %v3136
        %v3230 = vpop.f32.mrb[0].mxu0
        %v3231 = vpop.f32.mrb[0].mxu0
        %v3232 = vpop.f32.mrb[0].mxu0
        %v3233 = vpop.f32.mrb[0].mxu0
        %3234 = vmatprep.mubr.bf16.mxu0 0
        %3235 = vmatmul.mubr.bf16.gmra.mrb[0].mxu0 %v3139
        %v3236 = vpop.f32.mrb[0].mxu0
        %v3237 = vadd.f32 %v3067, %v3236
        %v3238 = vpop.f32.mrb[0].mxu0
        %v3239 = vpop.f32.mrb[0].mxu0
        %v3240 = vpop.f32.mrb[0].mxu0
        %3241 = vmatprep.mubr.bf16.mxu0 0
        %3242 = vmatmul.mubr.bf16.gmra.mrb[0].mxu0 %v3142
        %v3243 = vpop.f32.mrb[0].mxu0
        %v3244 = vpop.f32.mrb[0].mxu0
        %v3245 = vpop.f32.mrb[0].mxu0
        %v3246 = vadd.f32 %v3076, %v3245
        %v3247 = vpop.f32.mrb[0].mxu0
        %3248 = vmatprep.mubr.bf16.mxu0 0
        %3249 = vmatmul.mubr.bf16.gmra.mrb[0].mxu0 %v3145
        %v3250 = vpop.f32.mrb[0].mxu0
        %v3251 = vpop.f32.mrb[0].mxu0
        %v3252 = vpop.f32.mrb[0].mxu0
        %v3253 = vpop.f32.mrb[0].mxu0
        %3254 = vmatprep.mubr.bf16.mxu0 0
        %3255 = vmatmul.mubr.bf16.gmra.mrb[0].mxu0 %v3148
        %v3256 = vpop.f32.mrb[0].mxu0
        %v3257 = vadd.f32 %v3087, %v3256
        %v3258 = vpop.f32.mrb[0].mxu0
        %v3259 = vpop.f32.mrb[0].mxu0
        %v3260 = vpop.f32.mrb[0].mxu0
        %3261 = vmatprep.mubr.bf16.mxu0 0
        %3262 = vmatmul.mubr.bf16.gmra.mrb[0].mxu0 %v3151
        %v3263 = vpop.f32.mrb[0].mxu0
        %v3264 = vpop.f32.mrb[0].mxu0
        %v3265 = vpop.f32.mrb[0].mxu0
        %v3266 = vadd.f32 %v3096, %v3265
        %v3267 = vpop.f32.mrb[0].mxu0
        %3268 = vmatprep.mubr.bf16.mxu0 0
        %3269 = vmatmul.mubr.bf16.gmra.mrb[0].mxu0 %v3154
        %v3270 = vpop.f32.mrb[0].mxu0
        %v3271 = vpop.f32.mrb[0].mxu0
        %v3272 = vpop.f32.mrb[0].mxu0
        %v3273 = vpop.f32.mrb[0].mxu0
        %3274 = vmatprep.mubr.bf16.mxu0 0
        %3275 = vmatmul.mubr.bf16.gmra.mrb[0].mxu0 %v3157
        %v3276 = vpop.f32.mrb[0].mxu0
        %v3277 = vpop.f32.mrb[0].mxu0
        %v3278 = vpop.f32.mrb[0].mxu0
        %v3279 = vpop.f32.mrb[0].mxu0
        %3280 = vdwg.mxu0
        %v3281 = vld [vmem:[#allocation3 + $0x2] sm:$0xff]
        %v3282 = vld [vmem:[#allocation3 + $0xa] sm:$0xff]
        %v3283 = vld [vmem:[#allocation3 + $0x12] sm:$0xff]
        %v3284 = vld [vmem:[#allocation3 + $0x1a] sm:$0xff]
        %v3285 = vld [vmem:[#allocation3 + $0x22] sm:$0xff]
        %v3286 = vld [vmem:[#allocation3 + $0x2a] sm:$0xff]
        %v3287 = vld [vmem:[#allocation3 + $0x32] sm:$0xff]
        %v3288 = vld [vmem:[#allocation3 + $0x3a] sm:$0xff]
        %v3289 = vld [vmem:[#allocation3 + $0x42] sm:$0xff]
        %v3290 = vld [vmem:[#allocation3 + $0x4a] sm:$0xff]
        %v3291 = vld [vmem:[#allocation3 + $0x52] sm:$0xff]
        %v3292 = vld [vmem:[#allocation3 + $0x5a] sm:$0xff]
        %v3293 = vld [vmem:[#allocation3 + $0x62] sm:$0xff]
        %v3294 = vld [vmem:[#allocation3 + $0x6a] sm:$0xff]
        %v3295 = vld [vmem:[#allocation3 + $0x72] sm:$0xff]
        %v3296 = vld [vmem:[#allocation3 + $0x7a] sm:$0xff]
        %v3297 = vld [vmem:[#allocation3 + $0x82] sm:$0xff]
        %v3298 = vld [vmem:[#allocation3 + $0x8a] sm:$0xff]
        %v3299 = vld [vmem:[#allocation3 + $0x92] sm:$0xff]
        %v3300 = vld [vmem:[#allocation3 + $0x9a] sm:$0xff]
        %v3301 = vld [vmem:[#allocation3 + $0xa2] sm:$0xff]
        %v3302 = vld [vmem:[#allocation3 + $0xaa] sm:$0xff]
        %v3303 = vld [vmem:[#allocation3 + $0xb2] sm:$0xff]
        %v3304 = vld [vmem:[#allocation3 + $0xba] sm:$0xff]
        %v3305 = vld [vmem:[#allocation3 + $0xc2] sm:$0xff]
        %v3306 = vpack.c.bf16 %v3282, %v3281
        %v3307 = vpack.c.bf16 %v3284, %v3283
        %v3308 = vpack.c.bf16 %v3286, %v3285
        %v3309 = vpack.c.bf16 %v3288, %v3287
        %v3310 = vpack.c.bf16 %v3290, %v3289
        %v3311 = vpack.c.bf16 %v3292, %v3291
        %v3312 = vpack.c.bf16 %v3294, %v3293
        %v3313 = vpack.c.bf16 %v3296, %v3295
        %v3314 = vpack.c.bf16 %v3298, %v3297
        %v3315 = vpack.c.bf16 %v3300, %v3299
        %v3316 = vpack.c.bf16 %v3302, %v3301
        %v3317 = vpack.c.bf16 %v3304, %v3303
        %v3318 = vpack.c.bf16 %v3305, %v3305
        %s3319 = scalar_lea.vmem %s3, 24
        %v3320 = vld [vmem:[%s3319] sm:$0xf]
        %v3321 = vld [vmem:[%s3319 + $0x4] sm:$0xf]
        %v3322 = vld [vmem:[%s3319 + $0x8] sm:$0xf]
        %v3326 = vunpack.c.l.b16 %v3320
        %v3327 = vunpack.c.l.b16 %v3321
        %v3328 = vunpack.c.l.b16 %v3322
        %v3329 = vpack.c.b16 %v3327, %v3326
        %v3330 = vpack.c.b16 %v3328, %v3328
        %v3333 = vsel %vm599, %v3306, 0
        %v3336 = vsel %vm599, %v3307, 0
        %v3339 = vsel %vm599, %v3308, 0
        %v3342 = vsel %vm599, %v3309, 0
        %v3345 = vsel %vm599, %v3310, 0
        %v3348 = vsel %vm599, %v3311, 0
        %v3351 = vsel %vm599, %v3312, 0
        %v3354 = vsel %vm599, %v3313, 0
        %v3357 = vsel %vm599, %v3314, 0
        %v3360 = vsel %vm599, %v3315, 0
        %v3363 = vsel %vm599, %v3316, 0
        %v3366 = vsel %vm599, %v3317, 0
        %v3369 = vsel %vm599, %v3318, 0
        %v3372 = vsel %vm2988, %v3330, 0
        %3374 = vmatprep.subr.bf16.mxu0 0
        %3375 = vmatpush1.bf16.msra.mxu0 %v3329
        %3376 = vmatprep.subr.bf16.mxu0 0
        %3377 = vmatpush1.bf16.msra.mxu0 %v3372
        %3378 = vmatprep.subr.bf16.mxu0 0
        %3379 = vmatpush1.bf16.msra.mxu0 0
        %3380 = vmatprep.subr.bf16.mxu0 0
        %3381 = vmatpush1.bf16.msra.mxu0 0
        %3382 = vmatprep.subr.bf16.mxu0 0
        %3383 = vmatpush1.bf16.msra.mxu0 0
        %3384 = vmatprep.subr.bf16.mxu0 0
        %3385 = vmatpush1.bf16.msra.mxu0 0
        %3386 = vmatprep.subr.bf16.mxu0 0
        %3387 = vmatpush1.bf16.msra.mxu0 0
        %3388 = vmatprep.subr.bf16.mxu0 0
        %3389 = vmatpush1.bf16.msra.mxu0 0
        %3390 = vmatprep.subr.bf16.mxu0 0
        %3391 = vmatpush1.bf16.msra.mxu0 0
        %3392 = vmatprep.subr.bf16.mxu0 0
        %3393 = vmatpush1.bf16.msra.mxu0 0
        %3394 = vmatprep.subr.bf16.mxu0 0
        %3395 = vmatpush1.bf16.msra.mxu0 0
        %3396 = vmatprep.subr.bf16.mxu0 0
        %3397 = vmatpush1.bf16.msra.mxu0 0
        %3398 = vmatprep.subr.bf16.mxu0 0
        %3399 = vmatpush1.bf16.msra.mxu0 0
        %3400 = vmatprep.subr.bf16.mxu0 0
        %3401 = vmatpush1.bf16.msra.mxu0 0
        %3402 = vmatprep.subr.bf16.mxu0 0
        %3403 = vmatpush1.bf16.msra.mxu0 0
        %3404 = vmatprep.subr.bf16.mxu0 0
        %3405 = vmatpush1.bf16.msra.mxu0 0
        %3406 = vmatprep.mubr.bf16.mxu0 0
        %3407 = vmatmul.mubr.bf16.gmra.mrb[0].mxu0 %v3333
        %v3408 = vpop.f32.mrb[0].mxu0
        %v3409 = vadd.f32 0.0, %v3408
        %v3410 = vpop.f32.mrb[0].mxu0
        %v3411 = vpop.f32.mrb[0].mxu0
        %v3412 = vpop.f32.mrb[0].mxu0
        %3413 = vmatprep.mubr.bf16.mxu0 0
        %3414 = vmatmul.mubr.bf16.gmra.mrb[0].mxu0 %v3336
        %v3415 = vpop.f32.mrb[0].mxu0
        %v3416 = vpop.f32.mrb[0].mxu0
        %v3417 = vpop.f32.mrb[0].mxu0
        %v3418 = vadd.f32 0.0, %v3417
        %v3419 = vpop.f32.mrb[0].mxu0
        %3420 = vmatprep.mubr.bf16.mxu0 0
        %3421 = vmatmul.mubr.bf16.gmra.mrb[0].mxu0 %v3339
        %v3422 = vpop.f32.mrb[0].mxu0
        %v3423 = vpop.f32.mrb[0].mxu0
        %v3424 = vpop.f32.mrb[0].mxu0
        %v3425 = vpop.f32.mrb[0].mxu0
        %3426 = vmatprep.mubr.bf16.mxu0 0
        %3427 = vmatmul.mubr.bf16.gmra.mrb[0].mxu0 %v3342
        %v3428 = vpop.f32.mrb[0].mxu0
        %v3429 = vadd.f32 0.0, %v3428
        %v3430 = vpop.f32.mrb[0].mxu0
        %v3431 = vpop.f32.mrb[0].mxu0
        %v3432 = vpop.f32.mrb[0].mxu0
        %3433 = vmatprep.mubr.bf16.mxu0 0
        %3434 = vmatmul.mubr.bf16.gmra.mrb[0].mxu0 %v3345
        %v3435 = vpop.f32.mrb[0].mxu0
        %v3436 = vpop.f32.mrb[0].mxu0
        %v3437 = vpop.f32.mrb[0].mxu0
        %v3438 = vadd.f32 0.0, %v3437
        %v3439 = vpop.f32.mrb[0].mxu0
        %3440 = vmatprep.mubr.bf16.mxu0 0
        %3441 = vmatmul.mubr.bf16.gmra.mrb[0].mxu0 %v3348
        %v3442 = vpop.f32.mrb[0].mxu0
        %v3443 = vpop.f32.mrb[0].mxu0
        %v3444 = vpop.f32.mrb[0].mxu0
        %v3445 = vpop.f32.mrb[0].mxu0
        %3446 = vmatprep.mubr.bf16.mxu0 0
        %3447 = vmatmul.mubr.bf16.gmra.mrb[0].mxu0 %v3351
        %v3448 = vpop.f32.mrb[0].mxu0
        %v3449 = vadd.f32 0.0, %v3448
        %v3450 = vpop.f32.mrb[0].mxu0
        %v3451 = vpop.f32.mrb[0].mxu0
        %v3452 = vpop.f32.mrb[0].mxu0
        %3453 = vmatprep.mubr.bf16.mxu0 0
        %3454 = vmatmul.mubr.bf16.gmra.mrb[0].mxu0 %v3354
        %v3455 = vpop.f32.mrb[0].mxu0
        %v3456 = vpop.f32.mrb[0].mxu0
        %v3457 = vpop.f32.mrb[0].mxu0
        %v3458 = vadd.f32 0.0, %v3457
        %v3459 = vpop.f32.mrb[0].mxu0
        %3460 = vmatprep.mubr.bf16.mxu0 0
        %3461 = vmatmul.mubr.bf16.gmra.mrb[0].mxu0 %v3357
        %v3462 = vpop.f32.mrb[0].mxu0
        %v3463 = vpop.f32.mrb[0].mxu0
        %v3464 = vpop.f32.mrb[0].mxu0
        %v3465 = vpop.f32.mrb[0].mxu0
        %3466 = vmatprep.mubr.bf16.mxu0 0
        %3467 = vmatmul.mubr.bf16.gmra.mrb[0].mxu0 %v3360
        %v3468 = vpop.f32.mrb[0].mxu0
        %v3469 = vadd.f32 0.0, %v3468
        %v3470 = vpop.f32.mrb[0].mxu0
        %v3471 = vpop.f32.mrb[0].mxu0
        %v3472 = vpop.f32.mrb[0].mxu0
        %3473 = vmatprep.mubr.bf16.mxu0 0
        %3474 = vmatmul.mubr.bf16.gmra.mrb[0].mxu0 %v3363
        %v3475 = vpop.f32.mrb[0].mxu0
        %v3476 = vpop.f32.mrb[0].mxu0
        %v3477 = vpop.f32.mrb[0].mxu0
        %v3478 = vadd.f32 0.0, %v3477
        %v3479 = vpop.f32.mrb[0].mxu0
        %3480 = vmatprep.mubr.bf16.mxu0 0
        %3481 = vmatmul.mubr.bf16.gmra.mrb[0].mxu0 %v3366
        %v3482 = vpop.f32.mrb[0].mxu0
        %v3483 = vpop.f32.mrb[0].mxu0
        %v3484 = vpop.f32.mrb[0].mxu0
        %v3485 = vpop.f32.mrb[0].mxu0
        %3486 = vmatprep.mubr.bf16.mxu0 0
        %3487 = vmatmul.mubr.bf16.gmra.mrb[0].mxu0 %v3369
        %v3488 = vpop.f32.mrb[0].mxu0
        %v3489 = vpop.f32.mrb[0].mxu0
        %v3490 = vpop.f32.mrb[0].mxu0
        %v3491 = vpop.f32.mrb[0].mxu0
        %3492 = vdwg.mxu0
        %v3493 = vadd.f32 %v3197, %v3409
        %v3494 = vadd.f32 %v3206, %v3418
        %v3495 = vadd.f32 %v3217, %v3429
        %v3496 = vadd.f32 %v3226, %v3438
        %v3497 = vadd.f32 %v3237, %v3449
        %v3498 = vadd.f32 %v3246, %v3458
        %v3499 = vadd.f32 %v3257, %v3469
        %v3500 = vadd.f32 %v3266, %v3478
        %v3501 = vld [vmem:[#allocation3 + $0x5] sm:$0xff]
        %v3502 = vld [vmem:[#allocation3 + $0xd] sm:$0xff]
        %v3503 = vld [vmem:[#allocation3 + $0x15] sm:$0xff]
        %v3504 = vld [vmem:[#allocation3 + $0x1d] sm:$0xff]
        %v3505 = vld [vmem:[#allocation3 + $0x25] sm:$0xff]
        %v3506 = vld [vmem:[#allocation3 + $0x2d] sm:$0xff]
        %v3507 = vld [vmem:[#allocation3 + $0x35] sm:$0xff]
        %v3508 = vld [vmem:[#allocation3 + $0x3d] sm:$0xff]
        %v3509 = vld [vmem:[#allocation3 + $0x45] sm:$0xff]
        %v3510 = vld [vmem:[#allocation3 + $0x4d] sm:$0xff]
        %v3511 = vld [vmem:[#allocation3 + $0x55] sm:$0xff]
        %v3512 = vld [vmem:[#allocation3 + $0x5d] sm:$0xff]
        %v3513 = vld [vmem:[#allocation3 + $0x65] sm:$0xff]
        %v3514 = vld [vmem:[#allocation3 + $0x6d] sm:$0xff]
        %v3515 = vld [vmem:[#allocation3 + $0x75] sm:$0xff]
        %v3516 = vld [vmem:[#allocation3 + $0x7d] sm:$0xff]
        %v3517 = vld [vmem:[#allocation3 + $0x85] sm:$0xff]
        %v3518 = vld [vmem:[#allocation3 + $0x8d] sm:$0xff]
        %v3519 = vld [vmem:[#allocation3 + $0x95] sm:$0xff]
        %v3520 = vld [vmem:[#allocation3 + $0x9d] sm:$0xff]
        %v3521 = vld [vmem:[#allocation3 + $0xa5] sm:$0xff]
        %v3522 = vld [vmem:[#allocation3 + $0xad] sm:$0xff]
        %v3523 = vld [vmem:[#allocation3 + $0xb5] sm:$0xff]
        %v3524 = vld [vmem:[#allocation3 + $0xbd] sm:$0xff]
        %v3525 = vld [vmem:[#allocation3 + $0xc5] sm:$0xff]
        %v3526 = vpack.c.bf16 %v3502, %v3501
        %v3527 = vpack.c.bf16 %v3504, %v3503
        %v3528 = vpack.c.bf16 %v3506, %v3505
        %v3529 = vpack.c.bf16 %v3508, %v3507
        %v3530 = vpack.c.bf16 %v3510, %v3509
        %v3531 = vpack.c.bf16 %v3512, %v3511
        %v3532 = vpack.c.bf16 %v3514, %v3513
        %v3533 = vpack.c.bf16 %v3516, %v3515
        %v3534 = vpack.c.bf16 %v3518, %v3517
        %v3535 = vpack.c.bf16 %v3520, %v3519
        %v3536 = vpack.c.bf16 %v3522, %v3521
        %v3537 = vpack.c.bf16 %v3524, %v3523
        %v3538 = vpack.c.bf16 %v3525, %v3525
        %s3539 = scalar_lea.vmem %s3, 36
        %v3540 = vld [vmem:[%s3539] sm:$0xf]
        %v3541 = vld [vmem:[%s3539 + $0x4] sm:$0xf]
        %v3542 = vld [vmem:[%s3539 + $0x8] sm:$0xf]
        %v3546 = vunpack.c.l.b16 %v3540
        %v3547 = vunpack.c.l.b16 %v3541
        %v3548 = vunpack.c.l.b16 %v3542
        %v3549 = vpack.c.b16 %v3547, %v3546
        %v3550 = vpack.c.b16 %v3548, %v3548
        %v3553 = vsel %vm599, %v3526, 0
        %v3556 = vsel %vm599, %v3527, 0
        %v3559 = vsel %vm599, %v3528, 0
        %v3562 = vsel %vm599, %v3529, 0
        %v3565 = vsel %vm599, %v3530, 0
        %v3568 = vsel %vm599, %v3531, 0
        %v3571 = vsel %vm599, %v3532, 0
        %v3574 = vsel %vm599, %v3533, 0
        %v3577 = vsel %vm599, %v3534, 0
        %v3580 = vsel %vm599, %v3535, 0
        %v3583 = vsel %vm599, %v3536, 0
        %v3586 = vsel %vm599, %v3537, 0
        %v3589 = vsel %vm599, %v3538, 0
        %v3592 = vsel %vm2988, %v3550, 0
        %3594 = vmatprep.subr.bf16.mxu0 0
        %3595 = vmatpush1.bf16.msra.mxu0 %v3549
        %3596 = vmatprep.subr.bf16.mxu0 0
        %3597 = vmatpush1.bf16.msra.mxu0 %v3592
        %3598 = vmatprep.subr.bf16.mxu0 0
        %3599 = vmatpush1.bf16.msra.mxu0 0
        %3600 = vmatprep.subr.bf16.mxu0 0
        %3601 = vmatpush1.bf16.msra.mxu0 0
        %3602 = vmatprep.subr.bf16.mxu0 0
        %3603 = vmatpush1.bf16.msra.mxu0 0
        %3604 = vmatprep.subr.bf16.mxu0 0
        %3605 = vmatpush1.bf16.msra.mxu0 0
        %3606 = vmatprep.subr.bf16.mxu0 0
        %3607 = vmatpush1.bf16.msra.mxu0 0
        %3608 = vmatprep.subr.bf16.mxu0 0
        %3609 = vmatpush1.bf16.msra.mxu0 0
        %3610 = vmatprep.subr.bf16.mxu0 0
        %3611 = vmatpush1.bf16.msra.mxu0 0
        %3612 = vmatprep.subr.bf16.mxu0 0
        %3613 = vmatpush1.bf16.msra.mxu0 0
        %3614 = vmatprep.subr.bf16.mxu0 0
        %3615 = vmatpush1.bf16.msra.mxu0 0
        %3616 = vmatprep.subr.bf16.mxu0 0
        %3617 = vmatpush1.bf16.msra.mxu0 0
        %3618 = vmatprep.subr.bf16.mxu0 0
        %3619 = vmatpush1.bf16.msra.mxu0 0
        %3620 = vmatprep.subr.bf16.mxu0 0
        %3621 = vmatpush1.bf16.msra.mxu0 0
        %3622 = vmatprep.subr.bf16.mxu0 0
        %3623 = vmatpush1.bf16.msra.mxu0 0
        %3624 = vmatprep.subr.bf16.mxu0 0
        %3625 = vmatpush1.bf16.msra.mxu0 0
        %3626 = vmatprep.mubr.bf16.mxu0 0
        %3627 = vmatmul.mubr.bf16.gmra.mrb[0].mxu0 %v3553
        %v3628 = vpop.f32.mrb[0].mxu0
        %v3629 = vadd.f32 0.0, %v3628
        %v3630 = vpop.f32.mrb[0].mxu0
        %v3631 = vpop.f32.mrb[0].mxu0
        %v3632 = vpop.f32.mrb[0].mxu0
        %3633 = vmatprep.mubr.bf16.mxu0 0
        %3634 = vmatmul.mubr.bf16.gmra.mrb[0].mxu0 %v3556
        %v3635 = vpop.f32.mrb[0].mxu0
        %v3636 = vpop.f32.mrb[0].mxu0
        %v3637 = vpop.f32.mrb[0].mxu0
        %v3638 = vadd.f32 0.0, %v3637
        %v3639 = vpop.f32.mrb[0].mxu0
        %3640 = vmatprep.mubr.bf16.mxu0 0
        %3641 = vmatmul.mubr.bf16.gmra.mrb[0].mxu0 %v3559
        %v3642 = vpop.f32.mrb[0].mxu0
        %v3643 = vpop.f32.mrb[0].mxu0
        %v3644 = vpop.f32.mrb[0].mxu0
        %v3645 = vpop.f32.mrb[0].mxu0
        %3646 = vmatprep.mubr.bf16.mxu0 0
        %3647 = vmatmul.mubr.bf16.gmra.mrb[0].mxu0 %v3562
        %v3648 = vpop.f32.mrb[0].mxu0
        %v3649 = vadd.f32 0.0, %v3648
        %v3650 = vpop.f32.mrb[0].mxu0
        %v3651 = vpop.f32.mrb[0].mxu0
        %v3652 = vpop.f32.mrb[0].mxu0
        %3653 = vmatprep.mubr.bf16.mxu0 0
        %3654 = vmatmul.mubr.bf16.gmra.mrb[0].mxu0 %v3565
        %v3655 = vpop.f32.mrb[0].mxu0
        %v3656 = vpop.f32.mrb[0].mxu0
        %v3657 = vpop.f32.mrb[0].mxu0
        %v3658 = vadd.f32 0.0, %v3657
        %v3659 = vpop.f32.mrb[0].mxu0
        %3660 = vmatprep.mubr.bf16.mxu0 0
        %3661 = vmatmul.mubr.bf16.gmra.mrb[0].mxu0 %v3568
        %v3662 = vpop.f32.mrb[0].mxu0
        %v3663 = vpop.f32.mrb[0].mxu0
        %v3664 = vpop.f32.mrb[0].mxu0
        %v3665 = vpop.f32.mrb[0].mxu0
        %3666 = vmatprep.mubr.bf16.mxu0 0
        %3667 = vmatmul.mubr.bf16.gmra.mrb[0].mxu0 %v3571
        %v3668 = vpop.f32.mrb[0].mxu0
        %v3669 = vadd.f32 0.0, %v3668
        %v3670 = vpop.f32.mrb[0].mxu0
        %v3671 = vpop.f32.mrb[0].mxu0
        %v3672 = vpop.f32.mrb[0].mxu0
        %3673 = vmatprep.mubr.bf16.mxu0 0
        %3674 = vmatmul.mubr.bf16.gmra.mrb[0].mxu0 %v3574
        %v3675 = vpop.f32.mrb[0].mxu0
        %v3676 = vpop.f32.mrb[0].mxu0
        %v3677 = vpop.f32.mrb[0].mxu0
        %v3678 = vadd.f32 0.0, %v3677
        %v3679 = vpop.f32.mrb[0].mxu0
        %3680 = vmatprep.mubr.bf16.mxu0 0
        %3681 = vmatmul.mubr.bf16.gmra.mrb[0].mxu0 %v3577
        %v3682 = vpop.f32.mrb[0].mxu0
        %v3683 = vpop.f32.mrb[0].mxu0
        %v3684 = vpop.f32.mrb[0].mxu0
        %v3685 = vpop.f32.mrb[0].mxu0
        %3686 = vmatprep.mubr.bf16.mxu0 0
        %3687 = vmatmul.mubr.bf16.gmra.mrb[0].mxu0 %v3580
        %v3688 = vpop.f32.mrb[0].mxu0
        %v3689 = vadd.f32 0.0, %v3688
        %v3690 = vpop.f32.mrb[0].mxu0
        %v3691 = vpop.f32.mrb[0].mxu0
        %v3692 = vpop.f32.mrb[0].mxu0
        %3693 = vmatprep.mubr.bf16.mxu0 0
        %3694 = vmatmul.mubr.bf16.gmra.mrb[0].mxu0 %v3583
        %v3695 = vpop.f32.mrb[0].mxu0
        %v3696 = vpop.f32.mrb[0].mxu0
        %v3697 = vpop.f32.mrb[0].mxu0
        %v3698 = vadd.f32 0.0, %v3697
        %v3699 = vpop.f32.mrb[0].mxu0
        %3700 = vmatprep.mubr.bf16.mxu0 0
        %3701 = vmatmul.mubr.bf16.gmra.mrb[0].mxu0 %v3586
        %v3702 = vpop.f32.mrb[0].mxu0
        %v3703 = vpop.f32.mrb[0].mxu0
        %v3704 = vpop.f32.mrb[0].mxu0
        %v3705 = vpop.f32.mrb[0].mxu0
        %3706 = vmatprep.mubr.bf16.mxu0 0
        %3707 = vmatmul.mubr.bf16.gmra.mrb[0].mxu0 %v3589
        %v3708 = vpop.f32.mrb[0].mxu0
        %v3709 = vpop.f32.mrb[0].mxu0
        %v3710 = vpop.f32.mrb[0].mxu0
        %v3711 = vpop.f32.mrb[0].mxu0
        %3712 = vdwg.mxu0
        %v3713 = vadd.f32 %v3493, %v3629
        %v3714 = vadd.f32 %v3494, %v3638
        %v3715 = vadd.f32 %v3495, %v3649
        %v3716 = vadd.f32 %v3496, %v3658
        %v3717 = vadd.f32 %v3497, %v3669
        %v3718 = vadd.f32 %v3498, %v3678
        %v3719 = vadd.f32 %v3499, %v3689
        %v3720 = vadd.f32 %v3500, %v3698
        %v3721 = vld [vmem:[#allocation3 + $0x6] sm:$0xff]
        %v3722 = vld [vmem:[#allocation3 + $0xe] sm:$0xff]
        %v3723 = vld [vmem:[#allocation3 + $0x16] sm:$0xff]
        %v3724 = vld [vmem:[#allocation3 + $0x1e] sm:$0xff]
        %v3725 = vld [vmem:[#allocation3 + $0x26] sm:$0xff]
        %v3726 = vld [vmem:[#allocation3 + $0x2e] sm:$0xff]
        %v3727 = vld [vmem:[#allocation3 + $0x36] sm:$0xff]
        %v3728 = vld [vmem:[#allocation3 + $0x3e] sm:$0xff]
        %v3729 = vld [vmem:[#allocation3 + $0x46] sm:$0xff]
        %v3730 = vld [vmem:[#allocation3 + $0x4e] sm:$0xff]
        %v3731 = vld [vmem:[#allocation3 + $0x56] sm:$0xff]
        %v3732 = vld [vmem:[#allocation3 + $0x5e] sm:$0xff]
        %v3733 = vld [vmem:[#allocation3 + $0x66] sm:$0xff]
        %v3734 = vld [vmem:[#allocation3 + $0x6e] sm:$0xff]
        %v3735 = vld [vmem:[#allocation3 + $0x76] sm:$0xff]
        %v3736 = vld [vmem:[#allocation3 + $0x7e] sm:$0xff]
        %v3737 = vld [vmem:[#allocation3 + $0x86] sm:$0xff]
        %v3738 = vld [vmem:[#allocation3 + $0x8e] sm:$0xff]
        %v3739 = vld [vmem:[#allocation3 + $0x96] sm:$0xff]
        %v3740 = vld [vmem:[#allocation3 + $0x9e] sm:$0xff]
        %v3741 = vld [vmem:[#allocation3 + $0xa6] sm:$0xff]
        %v3742 = vld [vmem:[#allocation3 + $0xae] sm:$0xff]
        %v3743 = vld [vmem:[#allocation3 + $0xb6] sm:$0xff]
        %v3744 = vld [vmem:[#allocation3 + $0xbe] sm:$0xff]
        %v3745 = vld [vmem:[#allocation3 + $0xc6] sm:$0xff]
        %v3746 = vpack.c.bf16 %v3722, %v3721
        %v3747 = vpack.c.bf16 %v3724, %v3723
        %v3748 = vpack.c.bf16 %v3726, %v3725
        %v3749 = vpack.c.bf16 %v3728, %v3727
        %v3750 = vpack.c.bf16 %v3730, %v3729
        %v3751 = vpack.c.bf16 %v3732, %v3731
        %v3752 = vpack.c.bf16 %v3734, %v3733
        %v3753 = vpack.c.bf16 %v3736, %v3735
        %v3754 = vpack.c.bf16 %v3738, %v3737
        %v3755 = vpack.c.bf16 %v3740, %v3739
        %v3756 = vpack.c.bf16 %v3742, %v3741
        %v3757 = vpack.c.bf16 %v3744, %v3743
        %v3758 = vpack.c.bf16 %v3745, %v3745
        %s3759 = scalar_lea.vmem %s3, 48
        %v3760 = vld [vmem:[%s3759] sm:$0xf]
        %v3761 = vld [vmem:[%s3759 + $0x4] sm:$0xf]
        %v3762 = vld [vmem:[%s3759 + $0x8] sm:$0xf]
        %v3766 = vunpack.c.l.b16 %v3760
        %v3767 = vunpack.c.l.b16 %v3761
        %v3768 = vunpack.c.l.b16 %v3762
        %v3769 = vpack.c.b16 %v3767, %v3766
        %v3770 = vpack.c.b16 %v3768, %v3768
        %v3773 = vsel %vm599, %v3746, 0
        %v3776 = vsel %vm599, %v3747, 0
        %v3779 = vsel %vm599, %v3748, 0
        %v3782 = vsel %vm599, %v3749, 0
        %v3785 = vsel %vm599, %v3750, 0
        %v3788 = vsel %vm599, %v3751, 0
        %v3791 = vsel %vm599, %v3752, 0
        %v3794 = vsel %vm599, %v3753, 0
        %v3797 = vsel %vm599, %v3754, 0
        %v3800 = vsel %vm599, %v3755, 0
        %v3803 = vsel %vm599, %v3756, 0
        %v3806 = vsel %vm599, %v3757, 0
        %v3809 = vsel %vm599, %v3758, 0
        %v3812 = vsel %vm2988, %v3770, 0
        %3814 = vmatprep.subr.bf16.mxu0 0
        %3815 = vmatpush1.bf16.msra.mxu0 %v3769
        %3816 = vmatprep.subr.bf16.mxu0 0
        %3817 = vmatpush1.bf16.msra.mxu0 %v3812
        %3818 = vmatprep.subr.bf16.mxu0 0
        %3819 = vmatpush1.bf16.msra.mxu0 0
        %3820 = vmatprep.subr.bf16.mxu0 0
        %3821 = vmatpush1.bf16.msra.mxu0 0
        %3822 = vmatprep.subr.bf16.mxu0 0
        %3823 = vmatpush1.bf16.msra.mxu0 0
        %3824 = vmatprep.subr.bf16.mxu0 0
        %3825 = vmatpush1.bf16.msra.mxu0 0
        %3826 = vmatprep.subr.bf16.mxu0 0
        %3827 = vmatpush1.bf16.msra.mxu0 0
        %3828 = vmatprep.subr.bf16.mxu0 0
        %3829 = vmatpush1.bf16.msra.mxu0 0
        %3830 = vmatprep.subr.bf16.mxu0 0
        %3831 = vmatpush1.bf16.msra.mxu0 0
        %3832 = vmatprep.subr.bf16.mxu0 0
        %3833 = vmatpush1.bf16.msra.mxu0 0
        %3834 = vmatprep.subr.bf16.mxu0 0
        %3835 = vmatpush1.bf16.msra.mxu0 0
        %3836 = vmatprep.subr.bf16.mxu0 0
        %3837 = vmatpush1.bf16.msra.mxu0 0
        %3838 = vmatprep.subr.bf16.mxu0 0
        %3839 = vmatpush1.bf16.msra.mxu0 0
        %3840 = vmatprep.subr.bf16.mxu0 0
        %3841 = vmatpush1.bf16.msra.mxu0 0
        %3842 = vmatprep.subr.bf16.mxu0 0
        %3843 = vmatpush1.bf16.msra.mxu0 0
        %3844 = vmatprep.subr.bf16.mxu0 0
        %3845 = vmatpush1.bf16.msra.mxu0 0
        %3846 = vmatprep.mubr.bf16.mxu0 0
        %3847 = vmatmul.mubr.bf16.gmra.mrb[0].mxu0 %v3773
        %v3848 = vpop.f32.mrb[0].mxu0
        %v3849 = vadd.f32 0.0, %v3848
        %v3850 = vpop.f32.mrb[0].mxu0
        %v3851 = vpop.f32.mrb[0].mxu0
        %v3852 = vpop.f32.mrb[0].mxu0
        %3853 = vmatprep.mubr.bf16.mxu0 0
        %3854 = vmatmul.mubr.bf16.gmra.mrb[0].mxu0 %v3776
        %v3855 = vpop.f32.mrb[0].mxu0
        %v3856 = vpop.f32.mrb[0].mxu0
        %v3857 = vpop.f32.mrb[0].mxu0
        %v3858 = vadd.f32 0.0, %v3857
        %v3859 = vpop.f32.mrb[0].mxu0
        %3860 = vmatprep.mubr.bf16.mxu0 0
        %3861 = vmatmul.mubr.bf16.gmra.mrb[0].mxu0 %v3779
        %v3862 = vpop.f32.mrb[0].mxu0
        %v3863 = vpop.f32.mrb[0].mxu0
        %v3864 = vpop.f32.mrb[0].mxu0
        %v3865 = vpop.f32.mrb[0].mxu0
        %3866 = vmatprep.mubr.bf16.mxu0 0
        %3867 = vmatmul.mubr.bf16.gmra.mrb[0].mxu0 %v3782
        %v3868 = vpop.f32.mrb[0].mxu0
        %v3869 = vadd.f32 0.0, %v3868
        %v3870 = vpop.f32.mrb[0].mxu0
        %v3871 = vpop.f32.mrb[0].mxu0
        %v3872 = vpop.f32.mrb[0].mxu0
        %3873 = vmatprep.mubr.bf16.mxu0 0
        %3874 = vmatmul.mubr.bf16.gmra.mrb[0].mxu0 %v3785
        %v3875 = vpop.f32.mrb[0].mxu0
        %v3876 = vpop.f32.mrb[0].mxu0
        %v3877 = vpop.f32.mrb[0].mxu0
        %v3878 = vadd.f32 0.0, %v3877
        %v3879 = vpop.f32.mrb[0].mxu0
        %3880 = vmatprep.mubr.bf16.mxu0 0
        %3881 = vmatmul.mubr.bf16.gmra.mrb[0].mxu0 %v3788
        %v3882 = vpop.f32.mrb[0].mxu0
        %v3883 = vpop.f32.mrb[0].mxu0
        %v3884 = vpop.f32.mrb[0].mxu0
        %v3885 = vpop.f32.mrb[0].mxu0
        %3886 = vmatprep.mubr.bf16.mxu0 0
        %3887 = vmatmul.mubr.bf16.gmra.mrb[0].mxu0 %v3791
        %v3888 = vpop.f32.mrb[0].mxu0
        %v3889 = vadd.f32 0.0, %v3888
        %v3890 = vpop.f32.mrb[0].mxu0
        %v3891 = vpop.f32.mrb[0].mxu0
        %v3892 = vpop.f32.mrb[0].mxu0
        %3893 = vmatprep.mubr.bf16.mxu0 0
        %3894 = vmatmul.mubr.bf16.gmra.mrb[0].mxu0 %v3794
        %v3895 = vpop.f32.mrb[0].mxu0
        %v3896 = vpop.f32.mrb[0].mxu0
        %v3897 = vpop.f32.mrb[0].mxu0
        %v3898 = vadd.f32 0.0, %v3897
        %v3899 = vpop.f32.mrb[0].mxu0
        %3900 = vmatprep.mubr.bf16.mxu0 0
        %3901 = vmatmul.mubr.bf16.gmra.mrb[0].mxu0 %v3797
        %v3902 = vpop.f32.mrb[0].mxu0
        %v3903 = vpop.f32.mrb[0].mxu0
        %v3904 = vpop.f32.mrb[0].mxu0
        %v3905 = vpop.f32.mrb[0].mxu0
        %3906 = vmatprep.mubr.bf16.mxu0 0
        %3907 = vmatmul.mubr.bf16.gmra.mrb[0].mxu0 %v3800
        %v3908 = vpop.f32.mrb[0].mxu0
        %v3909 = vadd.f32 0.0, %v3908
        %v3910 = vpop.f32.mrb[0].mxu0
        %v3911 = vpop.f32.mrb[0].mxu0
        %v3912 = vpop.f32.mrb[0].mxu0
        %3913 = vmatprep.mubr.bf16.mxu0 0
        %3914 = vmatmul.mubr.bf16.gmra.mrb[0].mxu0 %v3803
        %v3915 = vpop.f32.mrb[0].mxu0
        %v3916 = vpop.f32.mrb[0].mxu0
        %v3917 = vpop.f32.mrb[0].mxu0
        %v3918 = vadd.f32 0.0, %v3917
        %v3919 = vpop.f32.mrb[0].mxu0
        %3920 = vmatprep.mubr.bf16.mxu0 0
        %3921 = vmatmul.mubr.bf16.gmra.mrb[0].mxu0 %v3806
        %v3922 = vpop.f32.mrb[0].mxu0
        %v3923 = vpop.f32.mrb[0].mxu0
        %v3924 = vpop.f32.mrb[0].mxu0
        %v3925 = vpop.f32.mrb[0].mxu0
        %3926 = vmatprep.mubr.bf16.mxu0 0
        %3927 = vmatmul.mubr.bf16.gmra.mrb[0].mxu0 %v3809
        %v3928 = vpop.f32.mrb[0].mxu0
        %v3929 = vpop.f32.mrb[0].mxu0
        %v3930 = vpop.f32.mrb[0].mxu0
        %v3931 = vpop.f32.mrb[0].mxu0
        %3932 = vdwg.mxu0
        %v3933 = vadd.f32 %v3713, %v3849
        %v3934 = vadd.f32 %v3714, %v3858
        %v3935 = vadd.f32 %v3715, %v3869
        %v3936 = vadd.f32 %v3716, %v3878
        %v3937 = vadd.f32 %v3717, %v3889
        %v3938 = vadd.f32 %v3718, %v3898
        %v3939 = vadd.f32 %v3719, %v3909
        %v3940 = vadd.f32 %v3720, %v3918
        %v3941 = vld [vmem:[#allocation3 + $0x7] sm:$0xff]
        %v3942 = vld [vmem:[#allocation3 + $0xf] sm:$0xff]
        %v3943 = vld [vmem:[#allocation3 + $0x17] sm:$0xff]
        %v3944 = vld [vmem:[#allocation3 + $0x1f] sm:$0xff]
        %v3945 = vld [vmem:[#allocation3 + $0x27] sm:$0xff]
        %v3946 = vld [vmem:[#allocation3 + $0x2f] sm:$0xff]
        %v3947 = vld [vmem:[#allocation3 + $0x37] sm:$0xff]
        %v3948 = vld [vmem:[#allocation3 + $0x3f] sm:$0xff]
        %v3949 = vld [vmem:[#allocation3 + $0x47] sm:$0xff]
        %v3950 = vld [vmem:[#allocation3 + $0x4f] sm:$0xff]
        %v3951 = vld [vmem:[#allocation3 + $0x57] sm:$0xff]
        %v3952 = vld [vmem:[#allocation3 + $0x5f] sm:$0xff]
        %v3953 = vld [vmem:[#allocation3 + $0x67] sm:$0xff]
        %v3954 = vld [vmem:[#allocation3 + $0x6f] sm:$0xff]
        %v3955 = vld [vmem:[#allocation3 + $0x77] sm:$0xff]
        %v3956 = vld [vmem:[#allocation3 + $0x7f] sm:$0xff]
        %v3957 = vld [vmem:[#allocation3 + $0x87] sm:$0xff]
        %v3958 = vld [vmem:[#allocation3 + $0x8f] sm:$0xff]
        %v3959 = vld [vmem:[#allocation3 + $0x97] sm:$0xff]
        %v3960 = vld [vmem:[#allocation3 + $0x9f] sm:$0xff]
        %v3961 = vld [vmem:[#allocation3 + $0xa7] sm:$0xff]
        %v3962 = vld [vmem:[#allocation3 + $0xaf] sm:$0xff]
        %v3963 = vld [vmem:[#allocation3 + $0xb7] sm:$0xff]
        %v3964 = vld [vmem:[#allocation3 + $0xbf] sm:$0xff]
        %v3965 = vld [vmem:[#allocation3 + $0xc7] sm:$0xff]
        %v3966 = vpack.c.bf16 %v3942, %v3941
        %v3967 = vpack.c.bf16 %v3944, %v3943
        %v3968 = vpack.c.bf16 %v3946, %v3945
        %v3969 = vpack.c.bf16 %v3948, %v3947
        %v3970 = vpack.c.bf16 %v3950, %v3949
        %v3971 = vpack.c.bf16 %v3952, %v3951
        %v3972 = vpack.c.bf16 %v3954, %v3953
        %v3973 = vpack.c.bf16 %v3956, %v3955
        %v3974 = vpack.c.bf16 %v3958, %v3957
        %v3975 = vpack.c.bf16 %v3960, %v3959
        %v3976 = vpack.c.bf16 %v3962, %v3961
        %v3977 = vpack.c.bf16 %v3964, %v3963
        %v3978 = vpack.c.bf16 %v3965, %v3965
        %s3979 = scalar_lea.vmem %s3, 60
        %v3980 = vld [vmem:[%s3979] sm:$0xf]
        %v3981 = vld [vmem:[%s3979 + $0x4] sm:$0xf]
        %v3982 = vld [vmem:[%s3979 + $0x8] sm:$0xf]
        %v3986 = vunpack.c.l.b16 %v3980
        %v3987 = vunpack.c.l.b16 %v3981
        %v3988 = vunpack.c.l.b16 %v3982
        %v3989 = vpack.c.b16 %v3987, %v3986
        %v3990 = vpack.c.b16 %v3988, %v3988
        %v3993 = vsel %vm599, %v3966, 0
        %v3996 = vsel %vm599, %v3967, 0
        %v3999 = vsel %vm599, %v3968, 0
        %v4002 = vsel %vm599, %v3969, 0
        %v4005 = vsel %vm599, %v3970, 0
        %v4008 = vsel %vm599, %v3971, 0
        %v4011 = vsel %vm599, %v3972, 0
        %v4014 = vsel %vm599, %v3973, 0
        %v4017 = vsel %vm599, %v3974, 0
        %v4020 = vsel %vm599, %v3975, 0
        %v4023 = vsel %vm599, %v3976, 0
        %v4026 = vsel %vm599, %v3977, 0
        %v4029 = vsel %vm599, %v3978, 0
        %v4032 = vsel %vm2988, %v3990, 0
        %4034 = vmatprep.subr.bf16.mxu0 0
        %4035 = vmatpush1.bf16.msra.mxu0 %v3989
        %4036 = vmatprep.subr.bf16.mxu0 0
        %4037 = vmatpush1.bf16.msra.mxu0 %v4032
        %4038 = vmatprep.subr.bf16.mxu0 0
        %4039 = vmatpush1.bf16.msra.mxu0 0
        %4040 = vmatprep.subr.bf16.mxu0 0
        %4041 = vmatpush1.bf16.msra.mxu0 0
        %4042 = vmatprep.subr.bf16.mxu0 0
        %4043 = vmatpush1.bf16.msra.mxu0 0
        %4044 = vmatprep.subr.bf16.mxu0 0
        %4045 = vmatpush1.bf16.msra.mxu0 0
        %4046 = vmatprep.subr.bf16.mxu0 0
        %4047 = vmatpush1.bf16.msra.mxu0 0
        %4048 = vmatprep.subr.bf16.mxu0 0
        %4049 = vmatpush1.bf16.msra.mxu0 0
        %4050 = vmatprep.subr.bf16.mxu0 0
        %4051 = vmatpush1.bf16.msra.mxu0 0
        %4052 = vmatprep.subr.bf16.mxu0 0
        %4053 = vmatpush1.bf16.msra.mxu0 0
        %4054 = vmatprep.subr.bf16.mxu0 0
        %4055 = vmatpush1.bf16.msra.mxu0 0
        %4056 = vmatprep.subr.bf16.mxu0 0
        %4057 = vmatpush1.bf16.msra.mxu0 0
        %4058 = vmatprep.subr.bf16.mxu0 0
        %4059 = vmatpush1.bf16.msra.mxu0 0
        %4060 = vmatprep.subr.bf16.mxu0 0
        %4061 = vmatpush1.bf16.msra.mxu0 0
        %4062 = vmatprep.subr.bf16.mxu0 0
        %4063 = vmatpush1.bf16.msra.mxu0 0
        %4064 = vmatprep.subr.bf16.mxu0 0
        %4065 = vmatpush1.bf16.msra.mxu0 0
        %4066 = vmatprep.mubr.bf16.mxu0 0
        %4067 = vmatmul.mubr.bf16.gmra.mrb[0].mxu0 %v3993
        %v4068 = vpop.f32.mrb[0].mxu0
        %v4069 = vadd.f32 0.0, %v4068
        %v4070 = vpop.f32.mrb[0].mxu0
        %v4071 = vpop.f32.mrb[0].mxu0
        %v4072 = vpop.f32.mrb[0].mxu0
        %4073 = vmatprep.mubr.bf16.mxu0 0
        %4074 = vmatmul.mubr.bf16.gmra.mrb[0].mxu0 %v3996
        %v4075 = vpop.f32.mrb[0].mxu0
        %v4076 = vpop.f32.mrb[0].mxu0
        %v4077 = vpop.f32.mrb[0].mxu0
        %v4078 = vadd.f32 0.0, %v4077
        %v4079 = vpop.f32.mrb[0].mxu0
        %4080 = vmatprep.mubr.bf16.mxu0 0
        %4081 = vmatmul.mubr.bf16.gmra.mrb[0].mxu0 %v3999
        %v4082 = vpop.f32.mrb[0].mxu0
        %v4083 = vpop.f32.mrb[0].mxu0
        %v4084 = vpop.f32.mrb[0].mxu0
        %v4085 = vpop.f32.mrb[0].mxu0
        %4086 = vmatprep.mubr.bf16.mxu0 0
        %4087 = vmatmul.mubr.bf16.gmra.mrb[0].mxu0 %v4002
        %v4088 = vpop.f32.mrb[0].mxu0
        %v4089 = vadd.f32 0.0, %v4088
        %v4090 = vpop.f32.mrb[0].mxu0
        %v4091 = vpop.f32.mrb[0].mxu0
        %v4092 = vpop.f32.mrb[0].mxu0
        %4093 = vmatprep.mubr.bf16.mxu0 0
        %4094 = vmatmul.mubr.bf16.gmra.mrb[0].mxu0 %v4005
        %v4095 = vpop.f32.mrb[0].mxu0
        %v4096 = vpop.f32.mrb[0].mxu0
        %v4097 = vpop.f32.mrb[0].mxu0
        %v4098 = vadd.f32 0.0, %v4097
        %v4099 = vpop.f32.mrb[0].mxu0
        %4100 = vmatprep.mubr.bf16.mxu0 0
        %4101 = vmatmul.mubr.bf16.gmra.mrb[0].mxu0 %v4008
        %v4102 = vpop.f32.mrb[0].mxu0
        %v4103 = vpop.f32.mrb[0].mxu0
        %v4104 = vpop.f32.mrb[0].mxu0
        %v4105 = vpop.f32.mrb[0].mxu0
        %4106 = vmatprep.mubr.bf16.mxu0 0
        %4107 = vmatmul.mubr.bf16.gmra.mrb[0].mxu0 %v4011
        %v4108 = vpop.f32.mrb[0].mxu0
        %v4109 = vadd.f32 0.0, %v4108
        %v4110 = vpop.f32.mrb[0].mxu0
        %v4111 = vpop.f32.mrb[0].mxu0
        %v4112 = vpop.f32.mrb[0].mxu0
        %4113 = vmatprep.mubr.bf16.mxu0 0
        %4114 = vmatmul.mubr.bf16.gmra.mrb[0].mxu0 %v4014
        %v4115 = vpop.f32.mrb[0].mxu0
        %v4116 = vpop.f32.mrb[0].mxu0
        %v4117 = vpop.f32.mrb[0].mxu0
        %v4118 = vadd.f32 0.0, %v4117
        %v4119 = vpop.f32.mrb[0].mxu0
        %4120 = vmatprep.mubr.bf16.mxu0 0
        %4121 = vmatmul.mubr.bf16.gmra.mrb[0].mxu0 %v4017
        %v4122 = vpop.f32.mrb[0].mxu0
        %v4123 = vpop.f32.mrb[0].mxu0
        %v4124 = vpop.f32.mrb[0].mxu0
        %v4125 = vpop.f32.mrb[0].mxu0
        %4126 = vmatprep.mubr.bf16.mxu0 0
        %4127 = vmatmul.mubr.bf16.gmra.mrb[0].mxu0 %v4020
        %v4128 = vpop.f32.mrb[0].mxu0
        %v4129 = vadd.f32 0.0, %v4128
        %v4130 = vpop.f32.mrb[0].mxu0
        %v4131 = vpop.f32.mrb[0].mxu0
        %v4132 = vpop.f32.mrb[0].mxu0
        %4133 = vmatprep.mubr.bf16.mxu0 0
        %4134 = vmatmul.mubr.bf16.gmra.mrb[0].mxu0 %v4023
        %v4135 = vpop.f32.mrb[0].mxu0
        %v4136 = vpop.f32.mrb[0].mxu0
        %v4137 = vpop.f32.mrb[0].mxu0
        %v4138 = vadd.f32 0.0, %v4137
        %v4139 = vpop.f32.mrb[0].mxu0
        %4140 = vmatprep.mubr.bf16.mxu0 0
        %4141 = vmatmul.mubr.bf16.gmra.mrb[0].mxu0 %v4026
        %v4142 = vpop.f32.mrb[0].mxu0
        %v4143 = vpop.f32.mrb[0].mxu0
        %v4144 = vpop.f32.mrb[0].mxu0
        %v4145 = vpop.f32.mrb[0].mxu0
        %4146 = vmatprep.mubr.bf16.mxu0 0
        %4147 = vmatmul.mubr.bf16.gmra.mrb[0].mxu0 %v4029
        %v4148 = vpop.f32.mrb[0].mxu0
        %v4149 = vpop.f32.mrb[0].mxu0
        %v4150 = vpop.f32.mrb[0].mxu0
        %v4151 = vpop.f32.mrb[0].mxu0
        %4152 = vdwg.mxu0
        %v4153 = vadd.f32 %v3933, %v4069
        %v4154 = vadd.f32 %v3934, %v4078
        %v4155 = vadd.f32 %v3935, %v4089
        %v4156 = vadd.f32 %v3936, %v4098
        %v4157 = vadd.f32 %v3937, %v4109
        %v4158 = vadd.f32 %v3938, %v4118
        %v4159 = vadd.f32 %v3939, %v4129
        %v4160 = vadd.f32 %v3940, %v4138
        %v4161 = vld [vmem:[#allocation3 + $0xa] sm:$0xff]
        %v4162 = vld [vmem:[#allocation3 + $0x12] sm:$0xff]
        %v4163 = vld [vmem:[#allocation3 + $0x1a] sm:$0xff]
        %v4164 = vld [vmem:[#allocation3 + $0x22] sm:$0xff]
        %v4165 = vld [vmem:[#allocation3 + $0x2a] sm:$0xff]
        %v4166 = vld [vmem:[#allocation3 + $0x32] sm:$0xff]
        %v4167 = vld [vmem:[#allocation3 + $0x3a] sm:$0xff]
        %v4168 = vld [vmem:[#allocation3 + $0x42] sm:$0xff]
        %v4169 = vld [vmem:[#allocation3 + $0x4a] sm:$0xff]
        %v4170 = vld [vmem:[#allocation3 + $0x52] sm:$0xff]
        %v4171 = vld [vmem:[#allocation3 + $0x5a] sm:$0xff]
        %v4172 = vld [vmem:[#allocation3 + $0x62] sm:$0xff]
        %v4173 = vld [vmem:[#allocation3 + $0x6a] sm:$0xff]
        %v4174 = vld [vmem:[#allocation3 + $0x72] sm:$0xff]
        %v4175 = vld [vmem:[#allocation3 + $0x7a] sm:$0xff]
        %v4176 = vld [vmem:[#allocation3 + $0x82] sm:$0xff]
        %v4177 = vld [vmem:[#allocation3 + $0x8a] sm:$0xff]
        %v4178 = vld [vmem:[#allocation3 + $0x92] sm:$0xff]
        %v4179 = vld [vmem:[#allocation3 + $0x9a] sm:$0xff]
        %v4180 = vld [vmem:[#allocation3 + $0xa2] sm:$0xff]
        %v4181 = vld [vmem:[#allocation3 + $0xaa] sm:$0xff]
        %v4182 = vld [vmem:[#allocation3 + $0xb2] sm:$0xff]
        %v4183 = vld [vmem:[#allocation3 + $0xba] sm:$0xff]
        %v4184 = vld [vmem:[#allocation3 + $0xc2] sm:$0xff]
        %v4185 = vld [vmem:[#allocation3 + $0xca] sm:$0xff]
        %v4186 = vpack.c.bf16 %v4162, %v4161
        %v4187 = vpack.c.bf16 %v4164, %v4163
        %v4188 = vpack.c.bf16 %v4166, %v4165
        %v4189 = vpack.c.bf16 %v4168, %v4167
        %v4190 = vpack.c.bf16 %v4170, %v4169
        %v4191 = vpack.c.bf16 %v4172, %v4171
        %v4192 = vpack.c.bf16 %v4174, %v4173
        %v4193 = vpack.c.bf16 %v4176, %v4175
        %v4194 = vpack.c.bf16 %v4178, %v4177
        %v4195 = vpack.c.bf16 %v4180, %v4179
        %v4196 = vpack.c.bf16 %v4182, %v4181
        %v4197 = vpack.c.bf16 %v4184, %v4183
        %v4198 = vpack.c.bf16 %v4185, %v4185
        %s4199 = scalar_lea.vmem %s3, 72
        %v4200 = vld [vmem:[%s4199] sm:$0xf]
        %v4201 = vld [vmem:[%s4199 + $0x4] sm:$0xf]
        %v4202 = vld [vmem:[%s4199 + $0x8] sm:$0xf]
        %v4206 = vunpack.c.l.b16 %v4200
        %v4207 = vunpack.c.l.b16 %v4201
        %v4208 = vunpack.c.l.b16 %v4202
        %v4209 = vpack.c.b16 %v4207, %v4206
        %v4210 = vpack.c.b16 %v4208, %v4208
        %v4213 = vsel %vm599, %v4186, 0
        %v4216 = vsel %vm599, %v4187, 0
        %v4219 = vsel %vm599, %v4188, 0
        %v4222 = vsel %vm599, %v4189, 0
        %v4225 = vsel %vm599, %v4190, 0
        %v4228 = vsel %vm599, %v4191, 0
        %v4231 = vsel %vm599, %v4192, 0
        %v4234 = vsel %vm599, %v4193, 0
        %v4237 = vsel %vm599, %v4194, 0
        %v4240 = vsel %vm599, %v4195, 0
        %v4243 = vsel %vm599, %v4196, 0
        %v4246 = vsel %vm599, %v4197, 0
        %v4249 = vsel %vm599, %v4198, 0
        %v4252 = vsel %vm2988, %v4210, 0
        %4254 = vmatprep.subr.bf16.mxu0 0
        %4255 = vmatpush1.bf16.msra.mxu0 %v4209
        %4256 = vmatprep.subr.bf16.mxu0 0
        %4257 = vmatpush1.bf16.msra.mxu0 %v4252
        %4258 = vmatprep.subr.bf16.mxu0 0
        %4259 = vmatpush1.bf16.msra.mxu0 0
        %4260 = vmatprep.subr.bf16.mxu0 0
        %4261 = vmatpush1.bf16.msra.mxu0 0
        %4262 = vmatprep.subr.bf16.mxu0 0
        %4263 = vmatpush1.bf16.msra.mxu0 0
        %4264 = vmatprep.subr.bf16.mxu0 0
        %4265 = vmatpush1.bf16.msra.mxu0 0
        %4266 = vmatprep.subr.bf16.mxu0 0
        %4267 = vmatpush1.bf16.msra.mxu0 0
        %4268 = vmatprep.subr.bf16.mxu0 0
        %4269 = vmatpush1.bf16.msra.mxu0 0
        %4270 = vmatprep.subr.bf16.mxu0 0
        %4271 = vmatpush1.bf16.msra.mxu0 0
        %4272 = vmatprep.subr.bf16.mxu0 0
        %4273 = vmatpush1.bf16.msra.mxu0 0
        %4274 = vmatprep.subr.bf16.mxu0 0
        %4275 = vmatpush1.bf16.msra.mxu0 0
        %4276 = vmatprep.subr.bf16.mxu0 0
        %4277 = vmatpush1.bf16.msra.mxu0 0
        %4278 = vmatprep.subr.bf16.mxu0 0
        %4279 = vmatpush1.bf16.msra.mxu0 0
        %4280 = vmatprep.subr.bf16.mxu0 0
        %4281 = vmatpush1.bf16.msra.mxu0 0
        %4282 = vmatprep.subr.bf16.mxu0 0
        %4283 = vmatpush1.bf16.msra.mxu0 0
        %4284 = vmatprep.subr.bf16.mxu0 0
        %4285 = vmatpush1.bf16.msra.mxu0 0
        %4286 = vmatprep.mubr.bf16.mxu0 0
        %4287 = vmatmul.mubr.bf16.gmra.mrb[0].mxu0 %v4213
        %v4288 = vpop.f32.mrb[0].mxu0
        %v4289 = vadd.f32 0.0, %v4288
        %v4290 = vpop.f32.mrb[0].mxu0
        %v4291 = vpop.f32.mrb[0].mxu0
        %v4292 = vpop.f32.mrb[0].mxu0
        %4293 = vmatprep.mubr.bf16.mxu0 0
        %4294 = vmatmul.mubr.bf16.gmra.mrb[0].mxu0 %v4216
        %v4295 = vpop.f32.mrb[0].mxu0
        %v4296 = vpop.f32.mrb[0].mxu0
        %v4297 = vpop.f32.mrb[0].mxu0
        %v4298 = vadd.f32 0.0, %v4297
        %v4299 = vpop.f32.mrb[0].mxu0
        %4300 = vmatprep.mubr.bf16.mxu0 0
        %4301 = vmatmul.mubr.bf16.gmra.mrb[0].mxu0 %v4219
        %v4302 = vpop.f32.mrb[0].mxu0
        %v4303 = vpop.f32.mrb[0].mxu0
        %v4304 = vpop.f32.mrb[0].mxu0
        %v4305 = vpop.f32.mrb[0].mxu0
        %4306 = vmatprep.mubr.bf16.mxu0 0
        %4307 = vmatmul.mubr.bf16.gmra.mrb[0].mxu0 %v4222
        %v4308 = vpop.f32.mrb[0].mxu0
        %v4309 = vadd.f32 0.0, %v4308
        %v4310 = vpop.f32.mrb[0].mxu0
        %v4311 = vpop.f32.mrb[0].mxu0
        %v4312 = vpop.f32.mrb[0].mxu0
        %4313 = vmatprep.mubr.bf16.mxu0 0
        %4314 = vmatmul.mubr.bf16.gmra.mrb[0].mxu0 %v4225
        %v4315 = vpop.f32.mrb[0].mxu0
        %v4316 = vpop.f32.mrb[0].mxu0
        %v4317 = vpop.f32.mrb[0].mxu0
        %v4318 = vadd.f32 0.0, %v4317
        %v4319 = vpop.f32.mrb[0].mxu0
        %4320 = vmatprep.mubr.bf16.mxu0 0
        %4321 = vmatmul.mubr.bf16.gmra.mrb[0].mxu0 %v4228
        %v4322 = vpop.f32.mrb[0].mxu0
        %v4323 = vpop.f32.mrb[0].mxu0
        %v4324 = vpop.f32.mrb[0].mxu0
        %v4325 = vpop.f32.mrb[0].mxu0
        %4326 = vmatprep.mubr.bf16.mxu0 0
        %4327 = vmatmul.mubr.bf16.gmra.mrb[0].mxu0 %v4231
        %v4328 = vpop.f32.mrb[0].mxu0
        %v4329 = vadd.f32 0.0, %v4328
        %v4330 = vpop.f32.mrb[0].mxu0
        %v4331 = vpop.f32.mrb[0].mxu0
        %v4332 = vpop.f32.mrb[0].mxu0
        %4333 = vmatprep.mubr.bf16.mxu0 0
        %4334 = vmatmul.mubr.bf16.gmra.mrb[0].mxu0 %v4234
        %v4335 = vpop.f32.mrb[0].mxu0
        %v4336 = vpop.f32.mrb[0].mxu0
        %v4337 = vpop.f32.mrb[0].mxu0
        %v4338 = vadd.f32 0.0, %v4337
        %v4339 = vpop.f32.mrb[0].mxu0
        %4340 = vmatprep.mubr.bf16.mxu0 0
        %4341 = vmatmul.mubr.bf16.gmra.mrb[0].mxu0 %v4237
        %v4342 = vpop.f32.mrb[0].mxu0
        %v4343 = vpop.f32.mrb[0].mxu0
        %v4344 = vpop.f32.mrb[0].mxu0
        %v4345 = vpop.f32.mrb[0].mxu0
        %4346 = vmatprep.mubr.bf16.mxu0 0
        %4347 = vmatmul.mubr.bf16.gmra.mrb[0].mxu0 %v4240
        %v4348 = vpop.f32.mrb[0].mxu0
        %v4349 = vadd.f32 0.0, %v4348
        %v4350 = vpop.f32.mrb[0].mxu0
        %v4351 = vpop.f32.mrb[0].mxu0
        %v4352 = vpop.f32.mrb[0].mxu0
        %4353 = vmatprep.mubr.bf16.mxu0 0
        %4354 = vmatmul.mubr.bf16.gmra.mrb[0].mxu0 %v4243
        %v4355 = vpop.f32.mrb[0].mxu0
        %v4356 = vpop.f32.mrb[0].mxu0
        %v4357 = vpop.f32.mrb[0].mxu0
        %v4358 = vadd.f32 0.0, %v4357
        %v4359 = vpop.f32.mrb[0].mxu0
        %4360 = vmatprep.mubr.bf16.mxu0 0
        %4361 = vmatmul.mubr.bf16.gmra.mrb[0].mxu0 %v4246
        %v4362 = vpop.f32.mrb[0].mxu0
        %v4363 = vpop.f32.mrb[0].mxu0
        %v4364 = vpop.f32.mrb[0].mxu0
        %v4365 = vpop.f32.mrb[0].mxu0
        %4366 = vmatprep.mubr.bf16.mxu0 0
        %4367 = vmatmul.mubr.bf16.gmra.mrb[0].mxu0 %v4249
        %v4368 = vpop.f32.mrb[0].mxu0
        %v4369 = vpop.f32.mrb[0].mxu0
        %v4370 = vpop.f32.mrb[0].mxu0
        %v4371 = vpop.f32.mrb[0].mxu0
        %4372 = vdwg.mxu0
        %v4373 = vadd.f32 %v4153, %v4289
        %v4374 = vadd.f32 %v4154, %v4298
        %v4375 = vadd.f32 %v4155, %v4309
        %v4376 = vadd.f32 %v4156, %v4318
        %v4377 = vadd.f32 %v4157, %v4329
        %v4378 = vadd.f32 %v4158, %v4338
        %v4379 = vadd.f32 %v4159, %v4349
        %v4380 = vadd.f32 %v4160, %v4358
        %v4381 = vld [vmem:[#allocation3 + $0xb] sm:$0xff]
        %v4382 = vld [vmem:[#allocation3 + $0x13] sm:$0xff]
        %v4383 = vld [vmem:[#allocation3 + $0x1b] sm:$0xff]
        %v4384 = vld [vmem:[#allocation3 + $0x23] sm:$0xff]
        %v4385 = vld [vmem:[#allocation3 + $0x2b] sm:$0xff]
        %v4386 = vld [vmem:[#allocation3 + $0x33] sm:$0xff]
        %v4387 = vld [vmem:[#allocation3 + $0x3b] sm:$0xff]
        %v4388 = vld [vmem:[#allocation3 + $0x43] sm:$0xff]
        %v4389 = vld [vmem:[#allocation3 + $0x4b] sm:$0xff]
        %v4390 = vld [vmem:[#allocation3 + $0x53] sm:$0xff]
        %v4391 = vld [vmem:[#allocation3 + $0x5b] sm:$0xff]
        %v4392 = vld [vmem:[#allocation3 + $0x63] sm:$0xff]
        %v4393 = vld [vmem:[#allocation3 + $0x6b] sm:$0xff]
        %v4394 = vld [vmem:[#allocation3 + $0x73] sm:$0xff]
        %v4395 = vld [vmem:[#allocation3 + $0x7b] sm:$0xff]
        %v4396 = vld [vmem:[#allocation3 + $0x83] sm:$0xff]
        %v4397 = vld [vmem:[#allocation3 + $0x8b] sm:$0xff]
        %v4398 = vld [vmem:[#allocation3 + $0x93] sm:$0xff]
        %v4399 = vld [vmem:[#allocation3 + $0x9b] sm:$0xff]
        %v4400 = vld [vmem:[#allocation3 + $0xa3] sm:$0xff]
        %v4401 = vld [vmem:[#allocation3 + $0xab] sm:$0xff]
        %v4402 = vld [vmem:[#allocation3 + $0xb3] sm:$0xff]
        %v4403 = vld [vmem:[#allocation3 + $0xbb] sm:$0xff]
        %v4404 = vld [vmem:[#allocation3 + $0xc3] sm:$0xff]
        %v4405 = vld [vmem:[#allocation3 + $0xcb] sm:$0xff]
        %v4406 = vpack.c.bf16 %v4382, %v4381
        %v4407 = vpack.c.bf16 %v4384, %v4383
        %v4408 = vpack.c.bf16 %v4386, %v4385
        %v4409 = vpack.c.bf16 %v4388, %v4387
        %v4410 = vpack.c.bf16 %v4390, %v4389
        %v4411 = vpack.c.bf16 %v4392, %v4391
        %v4412 = vpack.c.bf16 %v4394, %v4393
        %v4413 = vpack.c.bf16 %v4396, %v4395
        %v4414 = vpack.c.bf16 %v4398, %v4397
        %v4415 = vpack.c.bf16 %v4400, %v4399
        %v4416 = vpack.c.bf16 %v4402, %v4401
        %v4417 = vpack.c.bf16 %v4404, %v4403
        %v4418 = vpack.c.bf16 %v4405, %v4405
        %s4419 = scalar_lea.vmem %s3, 84
        %v4420 = vld [vmem:[%s4419] sm:$0xf]
        %v4421 = vld [vmem:[%s4419 + $0x4] sm:$0xf]
        %v4422 = vld [vmem:[%s4419 + $0x8] sm:$0xf]
        %v4426 = vunpack.c.l.b16 %v4420
        %v4427 = vunpack.c.l.b16 %v4421
        %v4428 = vunpack.c.l.b16 %v4422
        %v4429 = vpack.c.b16 %v4427, %v4426
        %v4430 = vpack.c.b16 %v4428, %v4428
        %v4433 = vsel %vm599, %v4406, 0
        %v4436 = vsel %vm599, %v4407, 0
        %v4439 = vsel %vm599, %v4408, 0
        %v4442 = vsel %vm599, %v4409, 0
        %v4445 = vsel %vm599, %v4410, 0
        %v4448 = vsel %vm599, %v4411, 0
        %v4451 = vsel %vm599, %v4412, 0
        %v4454 = vsel %vm599, %v4413, 0
        %v4457 = vsel %vm599, %v4414, 0
        %v4460 = vsel %vm599, %v4415, 0
        %v4463 = vsel %vm599, %v4416, 0
        %v4466 = vsel %vm599, %v4417, 0
        %v4469 = vsel %vm599, %v4418, 0
        %v4472 = vsel %vm2988, %v4430, 0
        %4474 = vmatprep.subr.bf16.mxu0 0
        %4475 = vmatpush1.bf16.msra.mxu0 %v4429
        %4476 = vmatprep.subr.bf16.mxu0 0
        %4477 = vmatpush1.bf16.msra.mxu0 %v4472
        %4478 = vmatprep.subr.bf16.mxu0 0
        %4479 = vmatpush1.bf16.msra.mxu0 0
        %4480 = vmatprep.subr.bf16.mxu0 0
        %4481 = vmatpush1.bf16.msra.mxu0 0
        %4482 = vmatprep.subr.bf16.mxu0 0
        %4483 = vmatpush1.bf16.msra.mxu0 0
        %4484 = vmatprep.subr.bf16.mxu0 0
        %4485 = vmatpush1.bf16.msra.mxu0 0
        %4486 = vmatprep.subr.bf16.mxu0 0
        %4487 = vmatpush1.bf16.msra.mxu0 0
        %4488 = vmatprep.subr.bf16.mxu0 0
        %4489 = vmatpush1.bf16.msra.mxu0 0
        %4490 = vmatprep.subr.bf16.mxu0 0
        %4491 = vmatpush1.bf16.msra.mxu0 0
        %4492 = vmatprep.subr.bf16.mxu0 0
        %4493 = vmatpush1.bf16.msra.mxu0 0
        %4494 = vmatprep.subr.bf16.mxu0 0
        %4495 = vmatpush1.bf16.msra.mxu0 0
        %4496 = vmatprep.subr.bf16.mxu0 0
        %4497 = vmatpush1.bf16.msra.mxu0 0
        %4498 = vmatprep.subr.bf16.mxu0 0
        %4499 = vmatpush1.bf16.msra.mxu0 0
        %4500 = vmatprep.subr.bf16.mxu0 0
        %4501 = vmatpush1.bf16.msra.mxu0 0
        %4502 = vmatprep.subr.bf16.mxu0 0
        %4503 = vmatpush1.bf16.msra.mxu0 0
        %4504 = vmatprep.subr.bf16.mxu0 0
        %4505 = vmatpush1.bf16.msra.mxu0 0
        %4506 = vmatprep.mubr.bf16.mxu0 0
        %4507 = vmatmul.mubr.bf16.gmra.mrb[0].mxu0 %v4433
        %v4508 = vpop.f32.mrb[0].mxu0
        %v4509 = vadd.f32 0.0, %v4508
        %v4510 = vpop.f32.mrb[0].mxu0
        %v4511 = vpop.f32.mrb[0].mxu0
        %v4512 = vpop.f32.mrb[0].mxu0
        %4513 = vmatprep.mubr.bf16.mxu0 0
        %4514 = vmatmul.mubr.bf16.gmra.mrb[0].mxu0 %v4436
        %v4515 = vpop.f32.mrb[0].mxu0
        %v4516 = vpop.f32.mrb[0].mxu0
        %v4517 = vpop.f32.mrb[0].mxu0
        %v4518 = vadd.f32 0.0, %v4517
        %v4519 = vpop.f32.mrb[0].mxu0
        %4520 = vmatprep.mubr.bf16.mxu0 0
        %4521 = vmatmul.mubr.bf16.gmra.mrb[0].mxu0 %v4439
        %v4522 = vpop.f32.mrb[0].mxu0
        %v4523 = vpop.f32.mrb[0].mxu0
        %v4524 = vpop.f32.mrb[0].mxu0
        %v4525 = vpop.f32.mrb[0].mxu0
        %4526 = vmatprep.mubr.bf16.mxu0 0
        %4527 = vmatmul.mubr.bf16.gmra.mrb[0].mxu0 %v4442
        %v4528 = vpop.f32.mrb[0].mxu0
        %v4529 = vadd.f32 0.0, %v4528
        %v4530 = vpop.f32.mrb[0].mxu0
        %v4531 = vpop.f32.mrb[0].mxu0
        %v4532 = vpop.f32.mrb[0].mxu0
        %4533 = vmatprep.mubr.bf16.mxu0 0
        %4534 = vmatmul.mubr.bf16.gmra.mrb[0].mxu0 %v4445
        %v4535 = vpop.f32.mrb[0].mxu0
        %v4536 = vpop.f32.mrb[0].mxu0
        %v4537 = vpop.f32.mrb[0].mxu0
        %v4538 = vadd.f32 0.0, %v4537
        %v4539 = vpop.f32.mrb[0].mxu0
        %4540 = vmatprep.mubr.bf16.mxu0 0
        %4541 = vmatmul.mubr.bf16.gmra.mrb[0].mxu0 %v4448
        %v4542 = vpop.f32.mrb[0].mxu0
        %v4543 = vpop.f32.mrb[0].mxu0
        %v4544 = vpop.f32.mrb[0].mxu0
        %v4545 = vpop.f32.mrb[0].mxu0
        %4546 = vmatprep.mubr.bf16.mxu0 0
        %4547 = vmatmul.mubr.bf16.gmra.mrb[0].mxu0 %v4451
        %v4548 = vpop.f32.mrb[0].mxu0
        %v4549 = vadd.f32 0.0, %v4548
        %v4550 = vpop.f32.mrb[0].mxu0
        %v4551 = vpop.f32.mrb[0].mxu0
        %v4552 = vpop.f32.mrb[0].mxu0
        %4553 = vmatprep.mubr.bf16.mxu0 0
        %4554 = vmatmul.mubr.bf16.gmra.mrb[0].mxu0 %v4454
        %v4555 = vpop.f32.mrb[0].mxu0
        %v4556 = vpop.f32.mrb[0].mxu0
        %v4557 = vpop.f32.mrb[0].mxu0
        %v4558 = vadd.f32 0.0, %v4557
        %v4559 = vpop.f32.mrb[0].mxu0
        %4560 = vmatprep.mubr.bf16.mxu0 0
        %4561 = vmatmul.mubr.bf16.gmra.mrb[0].mxu0 %v4457
        %v4562 = vpop.f32.mrb[0].mxu0
        %v4563 = vpop.f32.mrb[0].mxu0
        %v4564 = vpop.f32.mrb[0].mxu0
        %v4565 = vpop.f32.mrb[0].mxu0
        %4566 = vmatprep.mubr.bf16.mxu0 0
        %4567 = vmatmul.mubr.bf16.gmra.mrb[0].mxu0 %v4460
        %v4568 = vpop.f32.mrb[0].mxu0
        %v4569 = vadd.f32 0.0, %v4568
        %v4570 = vpop.f32.mrb[0].mxu0
        %v4571 = vpop.f32.mrb[0].mxu0
        %v4572 = vpop.f32.mrb[0].mxu0
        %4573 = vmatprep.mubr.bf16.mxu0 0
        %4574 = vmatmul.mubr.bf16.gmra.mrb[0].mxu0 %v4463
        %v4575 = vpop.f32.mrb[0].mxu0
        %v4576 = vpop.f32.mrb[0].mxu0
        %v4577 = vpop.f32.mrb[0].mxu0
        %v4578 = vadd.f32 0.0, %v4577
        %v4579 = vpop.f32.mrb[0].mxu0
        %4580 = vmatprep.mubr.bf16.mxu0 0
        %4581 = vmatmul.mubr.bf16.gmra.mrb[0].mxu0 %v4466
        %v4582 = vpop.f32.mrb[0].mxu0
        %v4583 = vpop.f32.mrb[0].mxu0
        %v4584 = vpop.f32.mrb[0].mxu0
        %v4585 = vpop.f32.mrb[0].mxu0
        %4586 = vmatprep.mubr.bf16.mxu0 0
        %4587 = vmatmul.mubr.bf16.gmra.mrb[0].mxu0 %v4469
        %v4588 = vpop.f32.mrb[0].mxu0
        %v4589 = vpop.f32.mrb[0].mxu0
        %v4590 = vpop.f32.mrb[0].mxu0
        %v4591 = vpop.f32.mrb[0].mxu0
        %4592 = vdwg.mxu0
        %v4593 = vadd.f32 %v4373, %v4509
        %v4594 = vadd.f32 %v4374, %v4518
        %v4595 = vadd.f32 %v4375, %v4529
        %v4596 = vadd.f32 %v4376, %v4538
        %v4597 = vadd.f32 %v4377, %v4549
        %v4598 = vadd.f32 %v4378, %v4558
        %v4599 = vadd.f32 %v4379, %v4569
        %v4600 = vadd.f32 %v4380, %v4578
        %v4601 = vld [vmem:[#allocation3 + $0xc] sm:$0xff]
        %v4602 = vld [vmem:[#allocation3 + $0x14] sm:$0xff]
        %v4603 = vld [vmem:[#allocation3 + $0x1c] sm:$0xff]
        %v4604 = vld [vmem:[#allocation3 + $0x24] sm:$0xff]
        %v4605 = vld [vmem:[#allocation3 + $0x2c] sm:$0xff]
        %v4606 = vld [vmem:[#allocation3 + $0x34] sm:$0xff]
        %v4607 = vld [vmem:[#allocation3 + $0x3c] sm:$0xff]
        %v4608 = vld [vmem:[#allocation3 + $0x44] sm:$0xff]
        %v4609 = vld [vmem:[#allocation3 + $0x4c] sm:$0xff]
        %v4610 = vld [vmem:[#allocation3 + $0x54] sm:$0xff]
        %v4611 = vld [vmem:[#allocation3 + $0x5c] sm:$0xff]
        %v4612 = vld [vmem:[#allocation3 + $0x64] sm:$0xff]
        %v4613 = vld [vmem:[#allocation3 + $0x6c] sm:$0xff]
        %v4614 = vld [vmem:[#allocation3 + $0x74] sm:$0xff]
        %v4615 = vld [vmem:[#allocation3 + $0x7c] sm:$0xff]
        %v4616 = vld [vmem:[#allocation3 + $0x84] sm:$0xff]
        %v4617 = vld [vmem:[#allocation3 + $0x8c] sm:$0xff]
        %v4618 = vld [vmem:[#allocation3 + $0x94] sm:$0xff]
        %v4619 = vld [vmem:[#allocation3 + $0x9c] sm:$0xff]
        %v4620 = vld [vmem:[#allocation3 + $0xa4] sm:$0xff]
        %v4621 = vld [vmem:[#allocation3 + $0xac] sm:$0xff]
        %v4622 = vld [vmem:[#allocation3 + $0xb4] sm:$0xff]
        %v4623 = vld [vmem:[#allocation3 + $0xbc] sm:$0xff]
        %v4624 = vld [vmem:[#allocation3 + $0xc4] sm:$0xff]
        %v4625 = vld [vmem:[#allocation3 + $0xcc] sm:$0xff]
        %v4626 = vpack.c.bf16 %v4602, %v4601
        %v4627 = vpack.c.bf16 %v4604, %v4603
        %v4628 = vpack.c.bf16 %v4606, %v4605
        %v4629 = vpack.c.bf16 %v4608, %v4607
        %v4630 = vpack.c.bf16 %v4610, %v4609
        %v4631 = vpack.c.bf16 %v4612, %v4611
        %v4632 = vpack.c.bf16 %v4614, %v4613
        %v4633 = vpack.c.bf16 %v4616, %v4615
        %v4634 = vpack.c.bf16 %v4618, %v4617
        %v4635 = vpack.c.bf16 %v4620, %v4619
        %v4636 = vpack.c.bf16 %v4622, %v4621
        %v4637 = vpack.c.bf16 %v4624, %v4623
        %v4638 = vpack.c.bf16 %v4625, %v4625
        %s4639 = scalar_lea.vmem %s3, 96
        %v4640 = vld [vmem:[%s4639] sm:$0xf]
        %v4641 = vld [vmem:[%s4639 + $0x4] sm:$0xf]
        %v4642 = vld [vmem:[%s4639 + $0x8] sm:$0xf]
        %v4646 = vunpack.c.l.b16 %v4640
        %v4647 = vunpack.c.l.b16 %v4641
        %v4648 = vunpack.c.l.b16 %v4642
        %v4649 = vpack.c.b16 %v4647, %v4646
        %v4650 = vpack.c.b16 %v4648, %v4648
        %v4653 = vsel %vm599, %v4626, 0
        %v4656 = vsel %vm599, %v4627, 0
        %v4659 = vsel %vm599, %v4628, 0
        %v4662 = vsel %vm599, %v4629, 0
        %v4665 = vsel %vm599, %v4630, 0
        %v4668 = vsel %vm599, %v4631, 0
        %v4671 = vsel %vm599, %v4632, 0
        %v4674 = vsel %vm599, %v4633, 0
        %v4677 = vsel %vm599, %v4634, 0
        %v4680 = vsel %vm599, %v4635, 0
        %v4683 = vsel %vm599, %v4636, 0
        %v4686 = vsel %vm599, %v4637, 0
        %v4689 = vsel %vm599, %v4638, 0
        %v4692 = vsel %vm2988, %v4650, 0
        %4694 = vmatprep.subr.bf16.mxu0 0
        %4695 = vmatpush1.bf16.msra.mxu0 %v4649
        %4696 = vmatprep.subr.bf16.mxu0 0
        %4697 = vmatpush1.bf16.msra.mxu0 %v4692
        %4698 = vmatprep.subr.bf16.mxu0 0
        %4699 = vmatpush1.bf16.msra.mxu0 0
        %4700 = vmatprep.subr.bf16.mxu0 0
        %4701 = vmatpush1.bf16.msra.mxu0 0
        %4702 = vmatprep.subr.bf16.mxu0 0
        %4703 = vmatpush1.bf16.msra.mxu0 0
        %4704 = vmatprep.subr.bf16.mxu0 0
        %4705 = vmatpush1.bf16.msra.mxu0 0
        %4706 = vmatprep.subr.bf16.mxu0 0
        %4707 = vmatpush1.bf16.msra.mxu0 0
        %4708 = vmatprep.subr.bf16.mxu0 0
        %4709 = vmatpush1.bf16.msra.mxu0 0
        %4710 = vmatprep.subr.bf16.mxu0 0
        %4711 = vmatpush1.bf16.msra.mxu0 0
        %4712 = vmatprep.subr.bf16.mxu0 0
        %4713 = vmatpush1.bf16.msra.mxu0 0
        %4714 = vmatprep.subr.bf16.mxu0 0
        %4715 = vmatpush1.bf16.msra.mxu0 0
        %4716 = vmatprep.subr.bf16.mxu0 0
        %4717 = vmatpush1.bf16.msra.mxu0 0
        %4718 = vmatprep.subr.bf16.mxu0 0
        %4719 = vmatpush1.bf16.msra.mxu0 0
        %4720 = vmatprep.subr.bf16.mxu0 0
        %4721 = vmatpush1.bf16.msra.mxu0 0
        %4722 = vmatprep.subr.bf16.mxu0 0
        %4723 = vmatpush1.bf16.msra.mxu0 0
        %4724 = vmatprep.subr.bf16.mxu0 0
        %4725 = vmatpush1.bf16.msra.mxu0 0
        %4726 = vmatprep.mubr.bf16.mxu0 0
        %4727 = vmatmul.mubr.bf16.gmra.mrb[0].mxu0 %v4653
        %v4728 = vpop.f32.mrb[0].mxu0
        %v4729 = vadd.f32 0.0, %v4728
        %v4730 = vpop.f32.mrb[0].mxu0
        %v4731 = vpop.f32.mrb[0].mxu0
        %v4732 = vpop.f32.mrb[0].mxu0
        %4733 = vmatprep.mubr.bf16.mxu0 0
        %4734 = vmatmul.mubr.bf16.gmra.mrb[0].mxu0 %v4656
        %v4735 = vpop.f32.mrb[0].mxu0
        %v4736 = vpop.f32.mrb[0].mxu0
        %v4737 = vpop.f32.mrb[0].mxu0
        %v4738 = vadd.f32 0.0, %v4737
        %v4739 = vpop.f32.mrb[0].mxu0
        %4740 = vmatprep.mubr.bf16.mxu0 0
        %4741 = vmatmul.mubr.bf16.gmra.mrb[0].mxu0 %v4659
        %v4742 = vpop.f32.mrb[0].mxu0
        %v4743 = vpop.f32.mrb[0].mxu0
        %v4744 = vpop.f32.mrb[0].mxu0
        %v4745 = vpop.f32.mrb[0].mxu0
        %4746 = vmatprep.mubr.bf16.mxu0 0
        %4747 = vmatmul.mubr.bf16.gmra.mrb[0].mxu0 %v4662
        %v4748 = vpop.f32.mrb[0].mxu0
        %v4749 = vadd.f32 0.0, %v4748
        %v4750 = vpop.f32.mrb[0].mxu0
        %v4751 = vpop.f32.mrb[0].mxu0
        %v4752 = vpop.f32.mrb[0].mxu0
        %4753 = vmatprep.mubr.bf16.mxu0 0
        %4754 = vmatmul.mubr.bf16.gmra.mrb[0].mxu0 %v4665
        %v4755 = vpop.f32.mrb[0].mxu0
        %v4756 = vpop.f32.mrb[0].mxu0
        %v4757 = vpop.f32.mrb[0].mxu0
        %v4758 = vadd.f32 0.0, %v4757
        %v4759 = vpop.f32.mrb[0].mxu0
        %4760 = vmatprep.mubr.bf16.mxu0 0
        %4761 = vmatmul.mubr.bf16.gmra.mrb[0].mxu0 %v4668
        %v4762 = vpop.f32.mrb[0].mxu0
        %v4763 = vpop.f32.mrb[0].mxu0
        %v4764 = vpop.f32.mrb[0].mxu0
        %v4765 = vpop.f32.mrb[0].mxu0
        %4766 = vmatprep.mubr.bf16.mxu0 0
        %4767 = vmatmul.mubr.bf16.gmra.mrb[0].mxu0 %v4671
        %v4768 = vpop.f32.mrb[0].mxu0
        %v4769 = vadd.f32 0.0, %v4768
        %v4770 = vpop.f32.mrb[0].mxu0
        %v4771 = vpop.f32.mrb[0].mxu0
        %v4772 = vpop.f32.mrb[0].mxu0
        %4773 = vmatprep.mubr.bf16.mxu0 0
        %4774 = vmatmul.mubr.bf16.gmra.mrb[0].mxu0 %v4674
        %v4775 = vpop.f32.mrb[0].mxu0
        %v4776 = vpop.f32.mrb[0].mxu0
        %v4777 = vpop.f32.mrb[0].mxu0
        %v4778 = vadd.f32 0.0, %v4777
        %v4779 = vpop.f32.mrb[0].mxu0
        %4780 = vmatprep.mubr.bf16.mxu0 0
        %4781 = vmatmul.mubr.bf16.gmra.mrb[0].mxu0 %v4677
        %v4782 = vpop.f32.mrb[0].mxu0
        %v4783 = vpop.f32.mrb[0].mxu0
        %v4784 = vpop.f32.mrb[0].mxu0
        %v4785 = vpop.f32.mrb[0].mxu0
        %4786 = vmatprep.mubr.bf16.mxu0 0
        %4787 = vmatmul.mubr.bf16.gmra.mrb[0].mxu0 %v4680
        %v4788 = vpop.f32.mrb[0].mxu0
        %v4789 = vadd.f32 0.0, %v4788
        %v4790 = vpop.f32.mrb[0].mxu0
        %v4791 = vpop.f32.mrb[0].mxu0
        %v4792 = vpop.f32.mrb[0].mxu0
        %4793 = vmatprep.mubr.bf16.mxu0 0
        %4794 = vmatmul.mubr.bf16.gmra.mrb[0].mxu0 %v4683
        %v4795 = vpop.f32.mrb[0].mxu0
        %v4796 = vpop.f32.mrb[0].mxu0
        %v4797 = vpop.f32.mrb[0].mxu0
        %v4798 = vadd.f32 0.0, %v4797
        %v4799 = vpop.f32.mrb[0].mxu0
        %4800 = vmatprep.mubr.bf16.mxu0 0
        %4801 = vmatmul.mubr.bf16.gmra.mrb[0].mxu0 %v4686
        %v4802 = vpop.f32.mrb[0].mxu0
        %v4803 = vpop.f32.mrb[0].mxu0
        %v4804 = vpop.f32.mrb[0].mxu0
        %v4805 = vpop.f32.mrb[0].mxu0
        %4806 = vmatprep.mubr.bf16.mxu0 0
        %4807 = vmatmul.mubr.bf16.gmra.mrb[0].mxu0 %v4689
        %v4808 = vpop.f32.mrb[0].mxu0
        %v4809 = vpop.f32.mrb[0].mxu0
        %v4810 = vpop.f32.mrb[0].mxu0
        %v4811 = vpop.f32.mrb[0].mxu0
        %4812 = vdwg.mxu0
        %v4813 = vadd.f32 %v4593, %v4729
        %v4814 = vadd.f32 %v4594, %v4738
        %v4815 = vadd.f32 %v4595, %v4749
        %v4816 = vadd.f32 %v4596, %v4758
        %v4817 = vadd.f32 %v4597, %v4769
        %v4818 = vadd.f32 %v4598, %v4778
        %v4819 = vadd.f32 %v4599, %v4789
        %v4820 = vadd.f32 %v4600, %v4798
        %v4821 = vld [vmem:[%s4] sm:$0x1]
        %v4823 = vlaneseq
        %v4824 = vshrl.u32 %v4823, 7
        %v4825 = vsub.s32 0, %v4824
        %v4826 = vrot.slane %v4821, %v4825
        %v4828 = vadd.f32 %v4813, %v4826
        %v4829 = vadd.f32 %v4814, %v4826
        %v4830 = vadd.f32 %v4815, %v4826
        %v4831 = vadd.f32 %v4816, %v4826
        %v4832 = vadd.f32 %v4817, %v4826
        %v4833 = vadd.f32 %v4818, %v4826
        %v4834 = vadd.f32 %v4819, %v4826
        %v4835 = vadd.f32 %v4820, %v4826
        %v4836 = vmax.f32 %v4828, 0.0
        %v4837 = vmax.f32 %v4829, 0.0
        %v4838 = vmax.f32 %v4830, 0.0
        %v4839 = vmax.f32 %v4831, 0.0
        %v4840 = vmax.f32 %v4832, 0.0
        %v4841 = vmax.f32 %v4833, 0.0
        %v4842 = vmax.f32 %v4834, 0.0
        %v4843 = vmax.f32 %v4835, 0.0
        %vm4844 = vcmask 1040384
        %v4845 = vsel %vm4844, %v4836, %v4837
        %vm4846 = vcmask 1041408
        %v4847 = vsel %vm4846, %v4845, %v4838
        %vm4848 = vcmask 1042432
        %v4849 = vsel %vm4848, %v4847, %v4839
        %v4850 = vsel %vm2988, %v4849, %v4840
        %vm4851 = vcmask 1044480
        %v4852 = vsel %vm4851, %v4850, %v4841
        %vm4853 = vcmask 1045504
        %v4854 = vsel %vm4853, %v4852, %v4842
        %vm4855 = vcmask 1046528
        %v4856 = vsel %vm4855, %v4854, %v4843
        %v4857 = vpack.c.bf16 %v4856, %v4856
        %v4858 = vld [vmem:[%s5] sm:$0xf]
        %v4859 = vld [vmem:[%s5 + $0x4] sm:$0xf]
        %v4860 = vld [vmem:[%s5 + $0x8] sm:$0xf]
        %v4861 = vld [vmem:[%s5 + $0xc] sm:$0xf]
        %v4862 = vld [vmem:[%s5 + $0x10] sm:$0xf]
        %v4863 = vld [vmem:[%s5 + $0x14] sm:$0xf]
        %v4864 = vld [vmem:[%s6] sm:$0x1]
        %v4866 = vlaneseq
        %v4867 = vshrl.u32 %v4866, 7
        %v4868 = vsub.s32 0, %v4867
        %v4869 = vrot.slane %v4864, %v4868
        %v4877 = vunpack.c.l.b16 %v4858
        %v4878 = vunpack.c.l.b16 %v4859
        %v4879 = vunpack.c.l.b16 %v4860
        %v4880 = vunpack.c.l.b16 %v4861
        %v4881 = vunpack.c.l.b16 %v4862
        %v4882 = vunpack.c.l.b16 %v4863
        %v4883 = vpack.c.b16 %v4878, %v4877
        %v4884 = vpack.c.b16 %v4880, %v4879
        %v4885 = vpack.c.b16 %v4882, %v4881
        %vm4889 = vcmask 392192
        %v4891 = vsel %vm4889, %v4857, 0
        %4893 = vmatprep.subr.bf16.mxu0 0
        %4894 = vmatpush1.bf16.msra.mxu0 %v4883
        %4895 = vmatprep.subr.bf16.mxu0 0
        %4896 = vmatpush1.bf16.msra.mxu0 %v4884
        %4897 = vmatprep.subr.bf16.mxu0 0
        %4898 = vmatpush1.bf16.msra.mxu0 %v4885
        %4899 = vmatprep.subr.bf16.mxu0 0
        %4900 = vmatpush1.bf16.msra.mxu0 0
        %4901 = vmatprep.subr.bf16.mxu0 0
        %4902 = vmatpush1.bf16.msra.mxu0 0
        %4903 = vmatprep.subr.bf16.mxu0 0
        %4904 = vmatpush1.bf16.msra.mxu0 0
        %4905 = vmatprep.subr.bf16.mxu0 0
        %4906 = vmatpush1.bf16.msra.mxu0 0
        %4907 = vmatprep.subr.bf16.mxu0 0
        %4908 = vmatpush1.bf16.msra.mxu0 0
        %4909 = vmatprep.subr.bf16.mxu0 0
        %4910 = vmatpush1.bf16.msra.mxu0 0
        %4911 = vmatprep.subr.bf16.mxu0 0
        %4912 = vmatpush1.bf16.msra.mxu0 0
        %4913 = vmatprep.subr.bf16.mxu0 0
        %4914 = vmatpush1.bf16.msra.mxu0 0
        %4915 = vmatprep.subr.bf16.mxu0 0
        %4916 = vmatpush1.bf16.msra.mxu0 0
        %4917 = vmatprep.subr.bf16.mxu0 0
        %4918 = vmatpush1.bf16.msra.mxu0 0
        %4919 = vmatprep.subr.bf16.mxu0 0
        %4920 = vmatpush1.bf16.msra.mxu0 0
        %4921 = vmatprep.subr.bf16.mxu0 0
        %4922 = vmatpush1.bf16.msra.mxu0 0
        %4923 = vmatprep.subr.bf16.mxu0 0
        %4924 = vmatpush1.bf16.msra.mxu0 0
        %4925 = vmatprep.mubr.bf16.mxu0 0
        %4926 = vmatmul.mubr.bf16.gmra.mrb[0].mxu0 %v4891
        %v4927 = vpop.f32.mrb[0].mxu0
        %v4928 = vadd.f32 %v4869, %v4927
        %v4929 = vpop.f32.mrb[0].mxu0
        %v4930 = vpop.f32.mrb[0].mxu0
        %v4931 = vpop.f32.mrb[0].mxu0
        %4932 = vdwg.mxu0
        %vm4933 = vcmask 80896
        %4934 = vst.msk [vmem:[%s274] sm:$0xff] %vm4933, %v4928
        %s4935 = sand.u32 %s181, 1
        %s4936 = scalar_lea.sflag [#allocation5], %s4935
        %s4937 = sand.u32 %s181, 1
        %s4938 = smul.addr %s4937, 8
        %s4939 = scalar_lea.vmem [#allocation4], %s4938
        // Predicated region
        $region49: #{a_call__.1} parent=47 // pred_check
          %p4940 = pneg %p191
        $region50: #{a_call__.1} parent=47 // pred_check_branch
          %4942 = sbr.rel (%p4940) target = $region52
        $region51: #{a_call__.1} parent=47 // pred_region
          %s4944 = ssub.s32 128, 128
          %4945 = vsyncadd %s4936, %s4944
          %s4946 = smul.addr %s21, 128
          %s4947 = scalar_lea.hbm %s7, %s4946
          %s4949 = sshll.u32 %s4939, 4
          %s4950 = int_to_ptr.vmem [resolvable:$true] %s4949
          %4952 = dma.vmem_to_hbm [thread:$0]  %s4950, 128, %s4947, %s4936
        $region52: #{a_call__.1} parent=47 // pred_fallthru
          _
      $region48: #{a_call__.1} parent=5 // pred_fallthru
        _
      %p4953 = scmp.le.s32.totalorder 2, %s16
      // Predicated region
      $region53: #{a_call__.1} parent=5 // pred_check
        %p4954 = pneg %p4953
      $region54: #{a_call__.1} parent=5 // pred_check_branch
        %4956 = sbr.rel (%p4954) target = $region56
      $region55: #{a_call__.1} parent=5 // pred_region
        %s4957 = ssub.s32 %s16, 2
        // Predicated region
        $region57: #{a_call__.1} parent=55 // pred_check
          %p4958 = pneg %p197
        $region58: #{a_call__.1} parent=55 // pred_check_branch
          %4960 = sbr.rel (%p4958) target = $region60
        $region59: #{a_call__.1} parent=55 // pred_region
          %s4961 = sand.u32 %s182, 1
          %s4962 = scalar_lea.sflag [#allocation5], %s4961
          %s4963 = sand.u32 %s182, 1
          %s4964 = smul.addr %s4963, 8
          %s4965 = scalar_lea.vmem [#allocation4], %s4964
          %4966 = dma.done %s4962, 128
        $region60: #{a_call__.1} parent=55 // pred_fallthru
          _
      $region56: #{a_call__.1} parent=5 // pred_fallthru
        _
    $region6: #{a_call__.1} parent=1 // loop_footer
      %s20 = sadd.s32 1, %s16
    $region7: #{a_call__.1} parent=1 // loop_footer_branch
      %15 = sbr.rel target = $region3
    $region8: #{a_call__.1} parent=1 // loop_exit
      _
    %4967 = vsyncpa [#allocation5], 1
    %s4968 = scalar_lea.sflag [#allocation5], 1
    %4969 = vsyncpa %s4968, 1

</llo_original>
